<compile_context>
chip_gen: v6e
topology: v6e:2x2x1
jax: 0.10.0
libtpu: 0.0.40
codegen_flags: <defaults>
</compile_context>

<pallas_src>
import jax
import jax.numpy as jnp
from jax.experimental import pallas as pl
from jax.experimental.pallas import tpu as pltpu


# --------------------------------------------------------------------------- #
# Kernel body
# --------------------------------------------------------------------------- #
def _llama_mlp_kernel(x_ref, w_gate_ref, w_up_ref, w_down_ref, o_ref, acc_ref):
    # x_ref:      (tm, H)       bf16
    # w_gate_ref: (H, tn)       bf16  (leading pre-tile dim squeezed away)
    # w_up_ref:   (H, tn)       bf16
    # w_down_ref: (tn, H)       bf16
    # o_ref:      (tm, H)
    # acc_ref:    (tm, H) f32 scratch, resident across the k axis
    k = pl.program_id(1)

    x = x_ref[...]

    # Gate / up projections for this intermediate tile (MXU, f32 accumulate).
    gate = jnp.dot(x, w_gate_ref[...], preferred_element_type=jnp.float32)
    up = jnp.dot(x, w_up_ref[...], preferred_element_type=jnp.float32)

    # SiLU-and-Mul in f32 (sigmoid goes to the EUP slot).
    act = gate * jax.nn.sigmoid(gate) * up                      # (tm, tn) f32

    # Partial down projection for this intermediate tile.
    partial = jnp.dot(act.astype(w_down_ref.dtype), w_down_ref[...],
                      preferred_element_type=jnp.float32)       # (tm, H) f32

    # First k step writes the accumulator directly (no zero-fill pass),
    # later steps accumulate.
    @pl.when(k == 0)
    def _():
        acc_ref[...] = partial

    @pl.when(k > 0)
    def _():
        acc_ref[...] += partial

    @pl.when(k == pl.num_programs(1) - 1)
    def _():
        o_ref[...] = acc_ref[...].astype(o_ref.dtype)


# --------------------------------------------------------------------------- #
# Tile / VMEM-budget selection (generation-aware)
# --------------------------------------------------------------------------- #
def _largest_divisor_tile(dim, max_tile):
    """Largest tile <= max_tile that divides dim, preferring multiples of 128
    (lane/MXU friendly), then 32/16/8; falls back to the full dimension."""
    cap = min(dim, max_tile)
    for m in (128, 32, 16, 8):
        t = (cap // m) * m
        while t >= m:
            if dim % t == 0:
                return t
            t -= m
    return dim


def _select_tiles(T, H, I):
    """Pick (tm, tn, vmem_limit_bytes, small_vmem) from the chip's VMEM size.

    Assumes bf16 activations/weights and an f32 accumulator.
    """
    try:
        vmem_bytes = int(pltpu.get_tpu_info().vmem_capacity_bytes)
    except Exception:
        vmem_bytes = 64 * 1024 * 1024  # conservative fallback (v7x-sized)

    small_vmem = vmem_bytes <= 80 * 1024 * 1024  # v7x: 64 MiB / TensorCore

    # Intermediate tile: big enough for >=512B contiguous weight rows / good MXU
    # N, small enough to leave VMEM for a large token tile.
    tn = _largest_divisor_tile(I, 256 if small_vmem else 512)

    # Scoped-VMEM limit: ~75% of physical, capped at 96 MiB; leaves headroom
    # for Mosaic internal scratch on every generation.
    vmem_limit = int(min(0.75 * vmem_bytes, 96 * 1024 * 1024))
    budget = int(0.85 * vmem_limit)

    # On the VMEM-starved generation x/out are single-buffered (their block
    # index only changes at i boundaries, once every I/tn steps).
    io_bufs = 1 if small_vmem else 2

    def footprint(tm):
        xio = io_bufs * tm * H * 2 * 2            # x + out tiles, bf16
        w = 2 * (2 * H * tn + tn * H) * 2         # gate+up+down, double-buffered
        acc = tm * H * 4                          # f32 accumulator scratch
        return xio + w + acc

    # Token tile: as large as the budget allows (AI ~ tm FLOP/byte), but keep
    # T // tm >= 2 so the "parallel" axis can span both v7x TensorCores.
    tm_max = 768 if small_vmem else 1024
    tm_cap = T if T < 32 else max(16, T // 2)
    tm = _largest_divisor_tile(T, min(tm_cap, tm_max))
    while footprint(tm) > budget and tm > 16:
        new_tm = _largest_divisor_tile(T, tm // 2)
        if new_tm >= tm:
            break
        tm = new_tm

    return tm, tn, vmem_limit, small_vmem


# --------------------------------------------------------------------------- #
# Wrapper
# --------------------------------------------------------------------------- #
def llama_mlp(x, w_gate, w_up, w_down, *, tm=None, tn=None):
    """Fused Llama MLP:  (silu(x @ Wg) * (x @ Wu)) @ Wd.

    x:      (T, H)
    w_gate: (H, I)   (transposed PyTorch Linear weight; gate half of gate_up)
    w_up:   (H, I)
    w_down: (I, H)
    """
    T, H = x.shape
    I = w_gate.shape[1]
    assert w_gate.shape == (H, I)
    assert w_up.shape == (H, I)
    assert w_down.shape == (I, H)

    auto_tm, auto_tn, vmem_limit, small_vmem = _select_tiles(T, H, I)
    tm = auto_tm if tm is None else tm
    tn = auto_tn if tn is None else tn
    assert T % tm == 0 and I % tn == 0
    kt = I // tn
    grid = (T // tm, kt)

    # Pre-tile gate/up weights to (I//tn, H, tn): each (H, tn) block becomes a
    # single contiguous DMA instead of H strided reads.  (In production the
    # weights would be stored pre-tiled once, outside the hot path.)
    wg_t = w_gate.reshape(H, kt, tn).transpose(1, 0, 2)
    wu_t = w_up.reshape(H, kt, tn).transpose(1, 0, 2)

    cost = pl.CostEstimate(
        flops=6 * T * H * I,                                   # 3 matmuls
        transcendentals=T * I,                                 # sigmoid
        bytes_accessed=2 * ((T // tm) * 3 * H * I + 2 * T * H),
    )

    def _build(io_mode):
        return pl.pallas_call(
            _llama_mlp_kernel,
            out_shape=jax.ShapeDtypeStruct((T, H), x.dtype),
            grid_spec=pltpu.PrefetchScalarGridSpec(
                num_scalar_prefetch=0,
                grid=grid,
                in_specs=[
                    # x tile: reused across k (constant block index along k).
                    pl.BlockSpec((tm, H), lambda i, k: (i, 0), **io_mode),
                    # gate / up weight tiles from the pre-tiled (kt, H, tn) arrays.
                    pl.BlockSpec((None, H, tn), lambda i, k: (k, 0, 0)),
                    pl.BlockSpec((None, H, tn), lambda i, k: (k, 0, 0)),
                    # down weight tile.
                    pl.BlockSpec((tn, H), lambda i, k: (k, 0)),
                ],
                out_specs=pl.BlockSpec((tm, H), lambda i, k: (i, 0), **io_mode),
                scratch_shapes=[pltpu.VMEM((tm, H), jnp.float32)],
            ),
            compiler_params=pltpu.CompilerParams(
                dimension_semantics=("parallel", "arbitrary"),
                vmem_limit_bytes=vmem_limit,
            ),
            cost_estimate=cost,
        )

    # On 64-MiB-VMEM chips single-buffer x/out to free VMEM for a larger tm.
    io_mode = {"pipeline_mode": pl.Buffered(1)} if small_vmem else {}
    try:
        return _build(io_mode)(x, wg_t, wu_t, w_down)
    except Exception:
        if io_mode:  # fall back to default double-buffering if Buffered(1) rejected
            return _build({})(x, wg_t, wu_t, w_down)
        raise


def llama_mlp_ref(x, w_gate, w_up, w_down):
    xf = x.astype(jnp.float32)
    gate = xf @ w_gate.astype(jnp.float32)
    up = xf @ w_up.astype(jnp.float32)
    act = gate * jax.nn.sigmoid(gate) * up
    return act @ w_down.astype(jnp.float32)


if __name__ == "__main__":
    # Small Llama-like MLP: 512 tokens, hidden=256, intermediate=1024.
    # Exercises both grid axes: token tiles (parallel) and I tiles (accumulate).
    T, H, I = 512, 256, 1024
    dtype = jnp.bfloat16

    key = jax.random.PRNGKey(0)
    kx, kg, ku, kd = jax.random.split(key, 4)
    x = jax.random.normal(kx, (T, H), dtype=jnp.float32).astype(dtype)
    w_gate = (jax.random.normal(kg, (H, I), dtype=jnp.float32) * 0.02).astype(dtype)
    w_up = (jax.random.normal(ku, (H, I), dtype=jnp.float32) * 0.02).astype(dtype)
    w_down = (jax.random.normal(kd, (I, H), dtype=jnp.float32) * 0.02).astype(dtype)

    out = llama_mlp(x, w_gate, w_up, w_down)
    out = jax.block_until_ready(out)

    ref = llama_mlp_ref(x, w_gate, w_up, w_down)
    assert out.shape == (T, H)
    assert jnp.allclose(out.astype(jnp.float32), ref, atol=3e-3, rtol=3e-2), \
        "mismatch vs reference"

    print("KERNEL_OK")
</pallas_src>

<mosaic_0001>
module attributes {stable_mosaic.version = 11 : i64} {
  func.func @_llama_mlp_kernel(%arg0: i32, %arg1: i32, %arg2: memref<256x256xbf16, #tpu.memory_space<vmem>>, %arg3: memref<1x256x256xbf16, #tpu.memory_space<vmem>>, %arg4: memref<1x256x256xbf16, #tpu.memory_space<vmem>>, %arg5: memref<256x256xbf16, #tpu.memory_space<vmem>>, %arg6: memref<256x256xbf16, #tpu.memory_space<vmem>>, %arg7: memref<256x256xf32, #tpu.memory_space<vmem>>) attributes {dimension_semantics = [#tpu.dimension_semantics<parallel>, #tpu.dimension_semantics<arbitrary>], iteration_bounds = array<i64: 2, 4>, scalar_prefetch = 0 : i64, scratch_operands = 1 : i64, tpu.core_type = #tpu.core_type<tc>, window_params = [{pipeline_mode = #tpu.pipeline_mode<synchronous>, transform_indices = @transform_0, window_bounds = array<i64: 256, 256>}, {transform_indices = @transform_1, window_bounds = array<i64: 1, 256, 256>}, {transform_indices = @transform_2, window_bounds = array<i64: 1, 256, 256>}, {transform_indices = @transform_3, window_bounds = array<i64: 256, 256>}, {pipeline_mode = #tpu.pipeline_mode<synchronous>, transform_indices = @transform_4, window_bounds = array<i64: 256, 256>}]} {
    %c0 = arith.constant 0 : index
    %c0_0 = arith.constant 0 : index
    %0 = vector.load %arg2[%c0, %c0_0] : memref<256x256xbf16, #tpu.memory_space<vmem>>, vector<256x256xbf16>
    %c0_1 = arith.constant 0 : index
    %c0_2 = arith.constant 0 : index
    %c0_3 = arith.constant 0 : index
    %1 = vector.load %arg3[%c0_1, %c0_2, %c0_3] : memref<1x256x256xbf16, #tpu.memory_space<vmem>>, vector<1x256x256xbf16>
    %2 = vector.shape_cast %1 : vector<1x256x256xbf16> to vector<256x256xbf16>
    %cst = arith.constant dense<0.000000e+00> : vector<256x256xf32>
    %3 = tpu.matmul %0, %2, %cst {dimension_numbers = #tpu.dot_dimension_numbers<[1], [0], [0], [1], [0, 0, 1, 1], [], []>} : vector<256x256xbf16>, vector<256x256xbf16>, vector<256x256xf32> -> vector<256x256xf32>
    %c0_4 = arith.constant 0 : index
    %c0_5 = arith.constant 0 : index
    %c0_6 = arith.constant 0 : index
    %4 = vector.load %arg4[%c0_4, %c0_5, %c0_6] : memref<1x256x256xbf16, #tpu.memory_space<vmem>>, vector<1x256x256xbf16>
    %5 = vector.shape_cast %4 : vector<1x256x256xbf16> to vector<256x256xbf16>
    %cst_7 = arith.constant dense<0.000000e+00> : vector<256x256xf32>
    %6 = tpu.matmul %0, %5, %cst_7 {dimension_numbers = #tpu.dot_dimension_numbers<[1], [0], [0], [1], [0, 0, 1, 1], [], []>} : vector<256x256xbf16>, vector<256x256xbf16>, vector<256x256xf32> -> vector<256x256xf32>
    %7 = arith.negf %3 : vector<256x256xf32>
    %8 = math.exp %7 : vector<256x256xf32>
    %cst_8 = arith.constant 1.000000e+00 : f32
    %9 = vector.broadcast %cst_8 : f32 to vector<256x256xf32>
    %10 = arith.addf %9, %8 : vector<256x256xf32>
    %11 = arith.divf %9, %10 : vector<256x256xf32>
    %12 = arith.mulf %3, %11 : vector<256x256xf32>
    %13 = arith.mulf %12, %6 : vector<256x256xf32>
    %14 = arith.truncf %13 : vector<256x256xf32> to vector<256x256xbf16>
    %c0_9 = arith.constant 0 : index
    %c0_10 = arith.constant 0 : index
    %15 = vector.load %arg5[%c0_9, %c0_10] : memref<256x256xbf16, #tpu.memory_space<vmem>>, vector<256x256xbf16>
    %cst_11 = arith.constant dense<0.000000e+00> : vector<256x256xf32>
    %16 = tpu.matmul %14, %15, %cst_11 {dimension_numbers = #tpu.dot_dimension_numbers<[1], [0], [0], [1], [0, 0, 1, 1], [], []>} : vector<256x256xbf16>, vector<256x256xbf16>, vector<256x256xf32> -> vector<256x256xf32>
    %c0_i32 = arith.constant 0 : i32
    %17 = arith.cmpi eq, %arg1, %c0_i32 : i32
    %18 = arith.extui %17 : i1 to i32
    %c0_i32_12 = arith.constant 0 : i32
    %19 = arith.cmpi ne, %18, %c0_i32_12 : i32
    scf.if %19 {
      %c0_16 = arith.constant 0 : index
      %c0_17 = arith.constant 0 : index
      %26 = vector.load %arg7[%c0_16, %c0_17] : memref<256x256xf32, #tpu.memory_space<vmem>>, vector<256x256xf32>
      tpu.vector_store %arg7[%c0_16, %c0_17], %16 {strides = array<i32>} : memref<256x256xf32, #tpu.memory_space<vmem>>, vector<256x256xf32>,
    } else {
    }
    %c0_i32_13 = arith.constant 0 : i32
    %20 = arith.cmpi sgt, %arg1, %c0_i32_13 : i32
    %21 = arith.extui %20 : i1 to i32
    %c0_i32_14 = arith.constant 0 : i32
    %22 = arith.cmpi ne, %21, %c0_i32_14 : i32
    scf.if %22 {
      %c0_16 = arith.constant 0 : index
      %c0_17 = arith.constant 0 : index
      %26 = vector.load %arg7[%c0_16, %c0_17] : memref<256x256xf32, #tpu.memory_space<vmem>>, vector<256x256xf32>
      %27 = arith.addf %26, %16 : vector<256x256xf32>
      %c0_18 = arith.constant 0 : index
      %c0_19 = arith.constant 0 : index
      %28 = vector.load %arg7[%c0_18, %c0_19] : memref<256x256xf32, #tpu.memory_space<vmem>>, vector<256x256xf32>
      tpu.vector_store %arg7[%c0_18, %c0_19], %27 {strides = array<i32>} : memref<256x256xf32, #tpu.memory_space<vmem>>, vector<256x256xf32>,
    } else {
    }
    %c3_i32 = arith.constant 3 : i32
    %23 = arith.cmpi eq, %arg1, %c3_i32 : i32
    %24 = arith.extui %23 : i1 to i32
    %c0_i32_15 = arith.constant 0 : i32
    %25 = arith.cmpi ne, %24, %c0_i32_15 : i32
    scf.if %25 {
      %c0_16 = arith.constant 0 : index
      %c0_17 = arith.constant 0 : index
      %26 = vector.load %arg7[%c0_16, %c0_17] : memref<256x256xf32, #tpu.memory_space<vmem>>, vector<256x256xf32>
      %27 = arith.truncf %26 : vector<256x256xf32> to vector<256x256xbf16>
      %c0_18 = arith.constant 0 : index
      %c0_19 = arith.constant 0 : index
      %28 = vector.load %arg6[%c0_18, %c0_19] : memref<256x256xbf16, #tpu.memory_space<vmem>>, vector<256x256xbf16>
      tpu.vector_store %arg6[%c0_18, %c0_19], %27 {strides = array<i32>} : memref<256x256xbf16, #tpu.memory_space<vmem>>, vector<256x256xbf16>,
    } else {
    }
    return
  }
  func.func @transform_0(%arg0: i32, %arg1: i32) -> (i32, i32) {
    %c0_i32 = arith.constant 0 : i32
    %c0_i32_0 = arith.constant 0 : i32
    return %arg0, %c0_i32 : i32, i32
  }
  func.func @transform_1(%arg0: i32, %arg1: i32) -> (i32, i32, i32) {
    %c0_i32 = arith.constant 0 : i32
    %c0_i32_0 = arith.constant 0 : i32
    %c0_i32_1 = arith.constant 0 : i32
    return %arg1, %c0_i32, %c0_i32_0 : i32, i32, i32
  }
  func.func @transform_2(%arg0: i32, %arg1: i32) -> (i32, i32, i32) {
    %c0_i32 = arith.constant 0 : i32
    %c0_i32_0 = arith.constant 0 : i32
    %c0_i32_1 = arith.constant 0 : i32
    return %arg1, %c0_i32, %c0_i32_0 : i32, i32, i32
  }
  func.func @transform_3(%arg0: i32, %arg1: i32) -> (i32, i32) {
    %c0_i32 = arith.constant 0 : i32
    %c0_i32_0 = arith.constant 0 : i32
    return %arg1, %c0_i32 : i32, i32
  }
  func.func @transform_4(%arg0: i32, %arg1: i32) -> (i32, i32) {
    %c0_i32 = arith.constant 0 : i32
    %c0_i32_0 = arith.constant 0 : i32
    return %arg0, %c0_i32 : i32, i32
  }
}

module attributes {stable_mosaic.version = 11 : i64} {
  func.func @_llama_mlp_kernel(%arg0: i32, %arg1: i32, %arg2: memref<256x256xbf16, #tpu.memory_space<vmem>>, %arg3: memref<1x256x256xbf16, #tpu.memory_space<vmem>>, %arg4: memref<1x256x256xbf16, #tpu.memory_space<vmem>>, %arg5: memref<256x256xbf16, #tpu.memory_space<vmem>>, %arg6: memref<256x256xbf16, #tpu.memory_space<vmem>>, %arg7: memref<256x256xf32, #tpu.memory_space<vmem>>) attributes {dimension_semantics = [#tpu.dimension_semantics<parallel>, #tpu.dimension_semantics<arbitrary>], iteration_bounds = array<i64: 2, 4>, scalar_prefetch = 0 : i64, scratch_operands = 1 : i64, tpu.core_type = #tpu.core_type<tc>, window_params = [{transform_indices = @transform_0, window_bounds = array<i64: 256, 256>}, {transform_indices = @transform_1, window_bounds = array<i64: 1, 256, 256>}, {transform_indices = @transform_2, window_bounds = array<i64: 1, 256, 256>}, {transform_indices = @transform_3, window_bounds = array<i64: 256, 256>}, {transform_indices = @transform_4, window_bounds = array<i64: 256, 256>}]} {
    %c0 = arith.constant 0 : index
    %c0_0 = arith.constant 0 : index
    %0 = vector.load %arg2[%c0, %c0_0] : memref<256x256xbf16, #tpu.memory_space<vmem>>, vector<256x256xbf16>
    %c0_1 = arith.constant 0 : index
    %c0_2 = arith.constant 0 : index
    %c0_3 = arith.constant 0 : index
    %1 = vector.load %arg3[%c0_1, %c0_2, %c0_3] : memref<1x256x256xbf16, #tpu.memory_space<vmem>>, vector<1x256x256xbf16>
    %2 = vector.shape_cast %1 : vector<1x256x256xbf16> to vector<256x256xbf16>
    %cst = arith.constant dense<0.000000e+00> : vector<256x256xf32>
    %3 = tpu.matmul %0, %2, %cst {dimension_numbers = #tpu.dot_dimension_numbers<[1], [0], [0], [1], [0, 0, 1, 1], [], []>} : vector<256x256xbf16>, vector<256x256xbf16>, vector<256x256xf32> -> vector<256x256xf32>
    %c0_4 = arith.constant 0 : index
    %c0_5 = arith.constant 0 : index
    %c0_6 = arith.constant 0 : index
    %4 = vector.load %arg4[%c0_4, %c0_5, %c0_6] : memref<1x256x256xbf16, #tpu.memory_space<vmem>>, vector<1x256x256xbf16>
    %5 = vector.shape_cast %4 : vector<1x256x256xbf16> to vector<256x256xbf16>
    %cst_7 = arith.constant dense<0.000000e+00> : vector<256x256xf32>
    %6 = tpu.matmul %0, %5, %cst_7 {dimension_numbers = #tpu.dot_dimension_numbers<[1], [0], [0], [1], [0, 0, 1, 1], [], []>} : vector<256x256xbf16>, vector<256x256xbf16>, vector<256x256xf32> -> vector<256x256xf32>
    %7 = arith.negf %3 : vector<256x256xf32>
    %8 = math.exp %7 : vector<256x256xf32>
    %cst_8 = arith.constant 1.000000e+00 : f32
    %9 = vector.broadcast %cst_8 : f32 to vector<256x256xf32>
    %10 = arith.addf %9, %8 : vector<256x256xf32>
    %11 = arith.divf %9, %10 : vector<256x256xf32>
    %12 = arith.mulf %3, %11 : vector<256x256xf32>
    %13 = arith.mulf %12, %6 : vector<256x256xf32>
    %14 = arith.truncf %13 : vector<256x256xf32> to vector<256x256xbf16>
    %c0_9 = arith.constant 0 : index
    %c0_10 = arith.constant 0 : index
    %15 = vector.load %arg5[%c0_9, %c0_10] : memref<256x256xbf16, #tpu.memory_space<vmem>>, vector<256x256xbf16>
    %cst_11 = arith.constant dense<0.000000e+00> : vector<256x256xf32>
    %16 = tpu.matmul %14, %15, %cst_11 {dimension_numbers = #tpu.dot_dimension_numbers<[1], [0], [0], [1], [0, 0, 1, 1], [], []>} : vector<256x256xbf16>, vector<256x256xbf16>, vector<256x256xf32> -> vector<256x256xf32>
    %c0_i32 = arith.constant 0 : i32
    %17 = arith.cmpi eq, %arg1, %c0_i32 : i32
    %18 = arith.extui %17 : i1 to i32
    %c0_i32_12 = arith.constant 0 : i32
    %19 = arith.cmpi ne, %18, %c0_i32_12 : i32
    scf.if %19 {
      %c0_16 = arith.constant 0 : index
      %c0_17 = arith.constant 0 : index
      %26 = vector.load %arg7[%c0_16, %c0_17] : memref<256x256xf32, #tpu.memory_space<vmem>>, vector<256x256xf32>
      tpu.vector_store %arg7[%c0_16, %c0_17], %16 {strides = array<i32>} : memref<256x256xf32, #tpu.memory_space<vmem>>, vector<256x256xf32>,
    } else {
    }
    %c0_i32_13 = arith.constant 0 : i32
    %20 = arith.cmpi sgt, %arg1, %c0_i32_13 : i32
    %21 = arith.extui %20 : i1 to i32
    %c0_i32_14 = arith.constant 0 : i32
    %22 = arith.cmpi ne, %21, %c0_i32_14 : i32
    scf.if %22 {
      %c0_16 = arith.constant 0 : index
      %c0_17 = arith.constant 0 : index
      %26 = vector.load %arg7[%c0_16, %c0_17] : memref<256x256xf32, #tpu.memory_space<vmem>>, vector<256x256xf32>
      %27 = arith.addf %26, %16 : vector<256x256xf32>
      %c0_18 = arith.constant 0 : index
      %c0_19 = arith.constant 0 : index
      %28 = vector.load %arg7[%c0_18, %c0_19] : memref<256x256xf32, #tpu.memory_space<vmem>>, vector<256x256xf32>
      tpu.vector_store %arg7[%c0_18, %c0_19], %27 {strides = array<i32>} : memref<256x256xf32, #tpu.memory_space<vmem>>, vector<256x256xf32>,
    } else {
    }
    %c3_i32 = arith.constant 3 : i32
    %23 = arith.cmpi eq, %arg1, %c3_i32 : i32
    %24 = arith.extui %23 : i1 to i32
    %c0_i32_15 = arith.constant 0 : i32
    %25 = arith.cmpi ne, %24, %c0_i32_15 : i32
    scf.if %25 {
      %c0_16 = arith.constant 0 : index
      %c0_17 = arith.constant 0 : index
      %26 = vector.load %arg7[%c0_16, %c0_17] : memref<256x256xf32, #tpu.memory_space<vmem>>, vector<256x256xf32>
      %27 = arith.truncf %26 : vector<256x256xf32> to vector<256x256xbf16>
      %c0_18 = arith.constant 0 : index
      %c0_19 = arith.constant 0 : index
      %28 = vector.load %arg6[%c0_18, %c0_19] : memref<256x256xbf16, #tpu.memory_space<vmem>>, vector<256x256xbf16>
      tpu.vector_store %arg6[%c0_18, %c0_19], %27 {strides = array<i32>} : memref<256x256xbf16, #tpu.memory_space<vmem>>, vector<256x256xbf16>,
    } else {
    }
    return
  }
  func.func @transform_0(%arg0: i32, %arg1: i32) -> (i32, i32) {
    %c0_i32 = arith.constant 0 : i32
    %c0_i32_0 = arith.constant 0 : i32
    return %arg0, %c0_i32 : i32, i32
  }
  func.func @transform_1(%arg0: i32, %arg1: i32) -> (i32, i32, i32) {
    %c0_i32 = arith.constant 0 : i32
    %c0_i32_0 = arith.constant 0 : i32
    %c0_i32_1 = arith.constant 0 : i32
    return %arg1, %c0_i32, %c0_i32_0 : i32, i32, i32
  }
  func.func @transform_2(%arg0: i32, %arg1: i32) -> (i32, i32, i32) {
    %c0_i32 = arith.constant 0 : i32
    %c0_i32_0 = arith.constant 0 : i32
    %c0_i32_1 = arith.constant 0 : i32
    return %arg1, %c0_i32, %c0_i32_0 : i32, i32, i32
  }
  func.func @transform_3(%arg0: i32, %arg1: i32) -> (i32, i32) {
    %c0_i32 = arith.constant 0 : i32
    %c0_i32_0 = arith.constant 0 : i32
    return %arg1, %c0_i32 : i32, i32
  }
  func.func @transform_4(%arg0: i32, %arg1: i32) -> (i32, i32) {
    %c0_i32 = arith.constant 0 : i32
    %c0_i32_0 = arith.constant 0 : i32
    return %arg0, %c0_i32 : i32, i32
  }
}

</mosaic_0001>

<llo_original>
// kernel: tpu_custom_call.1
$region0: #{tpu_custom_call.1}
  #allocation0 [shape = 'u32[]', space=smem, size = 0x4, offset = 0x4, fixed_abs, tag = 'smem constant byte address 0x4 - core index']
  #allocation1 [shape = 'u32[144,128]{1,0:T(1,128)}', space=vmem, size = 0x12000, scoped, tag = 'internal scratch']
  #allocation2 [shape = 'f32[256,256]{1,0:T(8,128)}', space=vmem, size = 0x40000, scoped, tag = 'scratch operand']
  %s0 = inlined_call_operand.hbm [shape: bf16[512,256], index: 0, kind: input, shape index: {}]
  %s1 = inlined_call_operand.hbm [shape: bf16[4,256,256], index: 1, kind: input, shape index: {}]
  %s2 = inlined_call_operand.hbm [shape: bf16[4,256,256], index: 2, kind: input, shape index: {}]
  %s3 = inlined_call_operand.hbm [shape: bf16[1024,256], index: 3, kind: input, shape index: {}]
  %s4 = inlined_call_operand.hbm [shape: bf16[512,256], index: 4, kind: output, shape index: {}]
  %s5 = sld [smem:[#allocation0]]
  $region77: #{tpu_custom_call.1} parent=0
    _
  %s7 = ssub.s32 1, %s5
  %s8 = scalar_select 0, %s7, %s5
  $region1: #{tpu_custom_call.1} parent=0
    #allocation3 [shape = 'u8[131072]{0}', space=vmem, size = 0x20000, scoped, tag = 'input window, operand 0, single buffered']
    #allocation4 [shape = 's32[2]{0}', space=sflag, size = 0x8, scoped, tag = 'scoped memory for tpu_custom_call.1']
    #allocation5 [shape = 's32[2]{0}', space=sflag, size = 0x8, scoped, tag = 'scoped memory for tpu_custom_call.1']
    #allocation6 [shape = 'u8[262144]{0}', space=vmem, size = 0x40000, scoped, tag = 'input window, operand 1']
    #allocation7 [shape = 's32[2]{0}', space=sflag, size = 0x8, scoped, tag = 'scoped memory for tpu_custom_call.1']
    #allocation8 [shape = 'u8[262144]{0}', space=vmem, size = 0x40000, scoped, tag = 'input window, operand 2']
    #allocation9 [shape = 'u8[262144]{0}', space=vmem, size = 0x40000, scoped, tag = 'input window, operand 3']
    #allocation10 [shape = 's32[2]{0}', space=sflag, size = 0x8, scoped, tag = 'scoped memory for tpu_custom_call.1']
    #allocation11 [shape = 'u8[131072]{0}', space=vmem, size = 0x20000, scoped, tag = 'output window, operand 0, single buffered']
    %9 = vsyncpa [#allocation4], 0
    %10 = vsyncpa [#allocation7], 0
    %s11 = scalar_lea.sflag [#allocation7], 1
    %12 = vsyncpa %s11, 0
    %13 = vsyncpa [#allocation10], 0
    %s14 = scalar_lea.sflag [#allocation10], 1
    %15 = vsyncpa %s14, 0
    %16 = vsyncpa [#allocation5], 0
    loop: start=0, step=1, limit=10
    $region2: #{tpu_custom_call.1} parent=1 // loop_pre_header
      _
    $region3: #{tpu_custom_call.1} parent=1 // loop_header
      %s18 = sphi 0, %s22
      %p19 = scmp.ge.s32.totalorder %s18, 10
      %s25 = sphi 0, %s37
      %s26 = sphi 0, %s33
      %s27 = sphi 0, %s25
      %s28 = sphi 0, %s26
      %s29 = sphi 0, %s27
      %s30 = sphi 0, %s28
      %s40 = sphi 0, %s42
      %s43 = sphi 0, %s40
      %s44 = sphi 0, %s43
      %s60 = sphi 0, %s44
      %s66 = sphi 0, %s68
      %s69 = sphi 0, %s66
      %s70 = sphi 0, %s69
      %s86 = sphi 0, %s70
      %s92 = sphi 0, %s94
      %s95 = sphi 0, %s92
      %s96 = sphi 0, %s95
      %s112 = sphi 0, %s96
      %s118 = sphi 0, %s120
      %s121 = sphi 0, %s118
      %s122 = sphi 0, %s121
      %s138 = sphi 0, %s122
      %s144 = sphi 0, %s146
      %s147 = sphi 0, %s144
      %s148 = sphi 0, %s147
      %s164 = sphi 0, %s148
    $region4: #{tpu_custom_call.1} parent=1 // loop_header_branch
      %21 = sbr.rel (%p19) target = $region8
    $region5: #{tpu_custom_call.1} parent=1 // loop_body
      %s23 = ssub.s32 %s18, 1
      %s24 = ssub.s32 %s18, 2
      %s31 = sadd.s32 1, %s26
      %p32 = scmp.ge.s32.totalorder %s31, 4
      %s33 = scalar_select %p32, 0, %s31
      %s34 = sadd.s32 1, %s25
      %s35 = scalar_select %p32, %s34, %s25
      %p36 = scmp.ge.s32.totalorder %s35, 2
      %s37 = scalar_select %p36, 0, %s35
      %s38 = ssub.s32 %s25, %s37
      %p39 = scmp.eq.s32.totalorder %s38, 0
      %s41 = sadd.s32 %s40, 1
      %s42 = scalar_select %p39, %s40, %s41
      %p45 = pneg %p39
      %p46 = scmp.eq.s32.totalorder %s18, 7
      %p47 = por %p45, %p46
      %p48 = scmp.ne.s32.totalorder %s40, %s43
      %p49 = scmp.eq.s32.totalorder %s18, 0
      %p50 = por %p48, %p49
      %p51 = scmp.ne.s32.totalorder %s40, %s43
      %p52 = scmp.eq.s32.totalorder %s23, 7
      %p53 = por %p51, %p52
      %p54 = scmp.ne.s32.totalorder %s43, %s44
      %p55 = scmp.eq.s32.totalorder %s23, 0
      %p56 = por %p54, %p55
      %p57 = scmp.ne.s32.totalorder %s43, %s44
      %p58 = scmp.eq.s32.totalorder %s24, 7
      %p59 = por %p57, %p58
      %p61 = scmp.ne.s32.totalorder %s44, %s60
      %p62 = scmp.eq.s32.totalorder %s24, 0
      %p63 = por %p61, %p62
      %s64 = ssub.s32 %s26, %s33
      %p65 = scmp.eq.s32.totalorder %s64, 0
      %s67 = sadd.s32 %s66, 1
      %s68 = scalar_select %p65, %s66, %s67
      %p71 = pneg %p65
      %p72 = scmp.eq.s32.totalorder %s18, 7
      %p73 = por %p71, %p72
      %p74 = scmp.ne.s32.totalorder %s66, %s69
      %p75 = scmp.eq.s32.totalorder %s18, 0
      %p76 = por %p74, %p75
      %p77 = scmp.ne.s32.totalorder %s66, %s69
      %p78 = scmp.eq.s32.totalorder %s23, 7
      %p79 = por %p77, %p78
      %p80 = scmp.ne.s32.totalorder %s69, %s70
      %p81 = scmp.eq.s32.totalorder %s23, 0
      %p82 = por %p80, %p81
      %p83 = scmp.ne.s32.totalorder %s69, %s70
      %p84 = scmp.eq.s32.totalorder %s24, 7
      %p85 = por %p83, %p84
      %p87 = scmp.ne.s32.totalorder %s70, %s86
      %p88 = scmp.eq.s32.totalorder %s24, 0
      %p89 = por %p87, %p88
      %s90 = ssub.s32 %s26, %s33
      %p91 = scmp.eq.s32.totalorder %s90, 0
      %s93 = sadd.s32 %s92, 1
      %s94 = scalar_select %p91, %s92, %s93
      %p97 = pneg %p91
      %p98 = scmp.eq.s32.totalorder %s18, 7
      %p99 = por %p97, %p98
      %p100 = scmp.ne.s32.totalorder %s92, %s95
      %p101 = scmp.eq.s32.totalorder %s18, 0
      %p102 = por %p100, %p101
      %p103 = scmp.ne.s32.totalorder %s92, %s95
      %p104 = scmp.eq.s32.totalorder %s23, 7
      %p105 = por %p103, %p104
      %p106 = scmp.ne.s32.totalorder %s95, %s96
      %p107 = scmp.eq.s32.totalorder %s23, 0
      %p108 = por %p106, %p107
      %p109 = scmp.ne.s32.totalorder %s95, %s96
      %p110 = scmp.eq.s32.totalorder %s24, 7
      %p111 = por %p109, %p110
      %p113 = scmp.ne.s32.totalorder %s96, %s112
      %p114 = scmp.eq.s32.totalorder %s24, 0
      %p115 = por %p113, %p114
      %s116 = ssub.s32 %s26, %s33
      %p117 = scmp.eq.s32.totalorder %s116, 0
      %s119 = sadd.s32 %s118, 1
      %s120 = scalar_select %p117, %s118, %s119
      %p123 = pneg %p117
      %p124 = scmp.eq.s32.totalorder %s18, 7
      %p125 = por %p123, %p124
      %p126 = scmp.ne.s32.totalorder %s118, %s121
      %p127 = scmp.eq.s32.totalorder %s18, 0
      %p128 = por %p126, %p127
      %p129 = scmp.ne.s32.totalorder %s118, %s121
      %p130 = scmp.eq.s32.totalorder %s23, 7
      %p131 = por %p129, %p130
      %p132 = scmp.ne.s32.totalorder %s121, %s122
      %p133 = scmp.eq.s32.totalorder %s23, 0
      %p134 = por %p132, %p133
      %p135 = scmp.ne.s32.totalorder %s121, %s122
      %p136 = scmp.eq.s32.totalorder %s24, 7
      %p137 = por %p135, %p136
      %p139 = scmp.ne.s32.totalorder %s122, %s138
      %p140 = scmp.eq.s32.totalorder %s24, 0
      %p141 = por %p139, %p140
      %s142 = ssub.s32 %s25, %s37
      %p143 = scmp.eq.s32.totalorder %s142, 0
      %s145 = sadd.s32 %s144, 1
      %s146 = scalar_select %p143, %s144, %s145
      %p149 = pneg %p143
      %p150 = scmp.eq.s32.totalorder %s18, 7
      %p151 = por %p149, %p150
      %p152 = scmp.ne.s32.totalorder %s144, %s147
      %p153 = scmp.eq.s32.totalorder %s18, 0
      %p154 = por %p152, %p153
      %p155 = scmp.ne.s32.totalorder %s144, %s147
      %p156 = scmp.eq.s32.totalorder %s23, 7
      %p157 = por %p155, %p156
      %p158 = scmp.ne.s32.totalorder %s147, %s148
      %p159 = scmp.eq.s32.totalorder %s23, 0
      %p160 = por %p158, %p159
      %p161 = scmp.ne.s32.totalorder %s147, %s148
      %p162 = scmp.eq.s32.totalorder %s24, 7
      %p163 = por %p161, %p162
      %p165 = scmp.ne.s32.totalorder %s148, %s164
      %p166 = scmp.eq.s32.totalorder %s24, 0
      %p167 = por %p165, %p166
      %p168 = scmp.le.s32.totalorder 1, %s18
      %p169 = scmp.lt.s32.totalorder %s18, 9
      %p170 = pnand %p168, %p169
      %p171 = pneg %p170
      // Predicated region
      $region9: #{tpu_custom_call.1} parent=5 // pred_check
        _
      $region10: #{tpu_custom_call.1} parent=5 // pred_check_branch
        %173 = sbr.rel (%p170) target = $region12
      $region11: #{tpu_custom_call.1} parent=5 // pred_region
        %s174 = ssub.s32 %s18, 1
        // Predicated region
        $region13: #{tpu_custom_call.1} parent=11 // pred_check
          %p175 = pneg %p56
        $region14: #{tpu_custom_call.1} parent=11 // pred_check_branch
          %177 = sbr.rel (%p175) target = $region16
        $region15: #{tpu_custom_call.1} parent=11 // pred_region
          %s178 = smul.u32 32, %s27
          %s180 = ssub.s32 4096, 4096
          %181 = vsyncadd [#allocation4], %s180
          %s182 = smul.addr %s178, 2
          %s183 = smul.addr %s182, 64
          %s184 = scalar_lea.hbm %s0, %s183
          %s185 = sshll.u32 [#allocation3], 4
          %s186 = int_to_ptr.vmem [resolvable:$true] %s185
          %191 = dma.hbm_to_vmem [thread:$0]  %s184, 4096, %s186, [#allocation4], 128, 128, 8
        $region16: #{tpu_custom_call.1} parent=11 // pred_fallthru
          _
      $region12: #{tpu_custom_call.1} parent=5 // pred_fallthru
        _
      %p192 = scmp.lt.s32.totalorder %s18, 8
      // Predicated region
      $region17: #{tpu_custom_call.1} parent=5 // pred_check
        %p193 = pneg %p192
      $region18: #{tpu_custom_call.1} parent=5 // pred_check_branch
        %195 = sbr.rel (%p193) target = $region20
      $region19: #{tpu_custom_call.1} parent=5 // pred_region
        // Predicated region
        $region21: #{tpu_custom_call.1} parent=19 // pred_check
          %p196 = pneg %p76
        $region22: #{tpu_custom_call.1} parent=19 // pred_check_branch
          %198 = sbr.rel (%p196) target = $region24
        $region23: #{tpu_custom_call.1} parent=19 // pred_region
          %s199 = sand.u32 %s18, 1
          %s200 = scalar_lea.sflag [#allocation7], %s199
          %s201 = sand.u32 %s66, 1
          %s202 = smul.addr %s201, 256
          %s203 = scalar_lea.vmem [#allocation6], %s202
          %s205 = ssub.s32 4096, 4096
          %206 = vsyncadd %s200, %s205
          %s207 = smul.addr %s26, 64
          %s208 = smul.addr %s207, 64
          %s209 = scalar_lea.hbm %s1, %s208
          %s210 = sshll.u32 %s203, 4
          %s211 = int_to_ptr.vmem [resolvable:$true] %s210
          %216 = dma.hbm_to_vmem [thread:$0]  %s209, 4096, %s211, %s200, 128, 128, 8
        $region24: #{tpu_custom_call.1} parent=19 // pred_fallthru
          _
        // Predicated region
        $region25: #{tpu_custom_call.1} parent=19 // pred_check
          %p217 = pneg %p102
        $region26: #{tpu_custom_call.1} parent=19 // pred_check_branch
          %219 = sbr.rel (%p217) target = $region28
        $region27: #{tpu_custom_call.1} parent=19 // pred_region
          %s220 = sand.u32 %s18, 1
          %s221 = scalar_lea.sflag [#allocation7], %s220
          %s222 = sand.u32 %s92, 1
          %s223 = smul.addr %s222, 256
          %s224 = scalar_lea.vmem [#allocation8], %s223
          %s226 = ssub.s32 4096, 4096
          %227 = vsyncadd %s221, %s226
          %s228 = smul.addr %s26, 64
          %s229 = smul.addr %s228, 64
          %s230 = scalar_lea.hbm %s2, %s229
          %s231 = sshll.u32 %s224, 4
          %s232 = int_to_ptr.vmem [resolvable:$true] %s231
          %237 = dma.hbm_to_vmem [thread:$0]  %s230, 4096, %s232, %s221, 128, 128, 8
        $region28: #{tpu_custom_call.1} parent=19 // pred_fallthru
          _
        // Predicated region
        $region29: #{tpu_custom_call.1} parent=19 // pred_check
          %p238 = pneg %p128
        $region30: #{tpu_custom_call.1} parent=19 // pred_check_branch
          %240 = sbr.rel (%p238) target = $region32
        $region31: #{tpu_custom_call.1} parent=19 // pred_region
          %s241 = sand.u32 %s118, 1
          %s242 = scalar_lea.sflag [#allocation10], %s241
          %s243 = sand.u32 %s118, 1
          %s244 = smul.addr %s243, 256
          %s245 = scalar_lea.vmem [#allocation9], %s244
          %s246 = smul.u32 32, %s26
          %s248 = ssub.s32 4096, 4096
          %249 = vsyncadd %s242, %s248
          %s250 = smul.addr %s246, 2
          %s251 = smul.addr %s250, 64
          %s252 = scalar_lea.hbm %s3, %s251
          %s253 = sshll.u32 %s245, 4
          %s254 = int_to_ptr.vmem [resolvable:$true] %s253
          %259 = dma.hbm_to_vmem [thread:$0]  %s252, 4096, %s254, %s242, 128, 128, 8
        $region32: #{tpu_custom_call.1} parent=19 // pred_fallthru
          _
      $region20: #{tpu_custom_call.1} parent=5 // pred_fallthru
        _
      %p260 = scmp.le.s32.totalorder 1, %s18
      %p261 = scmp.lt.s32.totalorder %s18, 9
      %p262 = pnand %p260, %p261
      %p263 = pneg %p262
      // Predicated region
      $region33: #{tpu_custom_call.1} parent=5 // pred_check
        _
      $region34: #{tpu_custom_call.1} parent=5 // pred_check_branch
        %265 = sbr.rel (%p262) target = $region36
      $region35: #{tpu_custom_call.1} parent=5 // pred_region
        %s266 = ssub.s32 %s18, 1
        // Predicated region
        $region37: #{tpu_custom_call.1} parent=35 // pred_check
          %p267 = pneg %p56
        $region38: #{tpu_custom_call.1} parent=35 // pred_check_branch
          %269 = sbr.rel (%p267) target = $region40
        $region39: #{tpu_custom_call.1} parent=35 // pred_region
          %270 = dma.done [#allocation4], 4096
        $region40: #{tpu_custom_call.1} parent=35 // pred_fallthru
          _
        %s271 = sand.u32 %s23, 1
        %s272 = scalar_lea.sflag [#allocation7], %s271
        %s273 = sand.u32 %s69, 1
        %s274 = smul.addr %s273, 256
        %s275 = scalar_lea.vmem [#allocation6], %s274
        // Predicated region
        $region41: #{tpu_custom_call.1} parent=35 // pred_check
          %p276 = pneg %p82
        $region42: #{tpu_custom_call.1} parent=35 // pred_check_branch
          %278 = sbr.rel (%p276) target = $region44
        $region43: #{tpu_custom_call.1} parent=35 // pred_region
          %279 = dma.done %s272, 4096
        $region44: #{tpu_custom_call.1} parent=35 // pred_fallthru
          _
        %s280 = sand.u32 %s23, 1
        %s281 = scalar_lea.sflag [#allocation7], %s280
        %s282 = sand.u32 %s95, 1
        %s283 = smul.addr %s282, 256
        %s284 = scalar_lea.vmem [#allocation8], %s283
        // Predicated region
        $region45: #{tpu_custom_call.1} parent=35 // pred_check
          %p285 = pneg %p108
        $region46: #{tpu_custom_call.1} parent=35 // pred_check_branch
          %287 = sbr.rel (%p285) target = $region48
        $region47: #{tpu_custom_call.1} parent=35 // pred_region
          %288 = dma.done %s281, 4096
        $region48: #{tpu_custom_call.1} parent=35 // pred_fallthru
          _
        %s289 = sand.u32 %s121, 1
        %s290 = scalar_lea.sflag [#allocation10], %s289
        %s291 = sand.u32 %s121, 1
        %s292 = smul.addr %s291, 256
        %s293 = scalar_lea.vmem [#allocation9], %s292
        // Predicated region
        $region49: #{tpu_custom_call.1} parent=35 // pred_check
          %p294 = pneg %p134
        $region50: #{tpu_custom_call.1} parent=35 // pred_check_branch
          %296 = sbr.rel (%p294) target = $region52
        $region51: #{tpu_custom_call.1} parent=35 // pred_region
          %297 = dma.done %s290, 4096
        $region52: #{tpu_custom_call.1} parent=35 // pred_fallthru
          _
        %p298 = pneg %p56
        %p299 = pneg %p53
        %s300 = sand.u32 %s23, 1
        %s301 = scalar_lea.sflag [#allocation7], %s300
        %s302 = sand.u32 %s69, 1
        %s303 = smul.addr %s302, 256
        %s304 = scalar_lea.vmem [#allocation6], %s303
        %p305 = pneg %p82
        %p306 = pneg %p79
        %s307 = sand.u32 %s23, 1
        %s308 = scalar_lea.sflag [#allocation7], %s307
        %s309 = sand.u32 %s95, 1
        %s310 = smul.addr %s309, 256
        %s311 = scalar_lea.vmem [#allocation8], %s310
        %p312 = pneg %p108
        %p313 = pneg %p105
        %s314 = sand.u32 %s121, 1
        %s315 = scalar_lea.sflag [#allocation10], %s314
        %s316 = sand.u32 %s121, 1
        %s317 = smul.addr %s316, 256
        %s318 = scalar_lea.vmem [#allocation9], %s317
        %p319 = pneg %p134
        %p320 = pneg %p131
        %p321 = pneg %p160
        %p322 = pneg %p157
        %s323 = smul.u32 32, %s27
        %s324 = smul.u32 32, %s28
        %s325 = smul.u32 32, %s27
        %v326 = vld [vmem:[#allocation3] sm:$0xff]
        %v327 = vld [vmem:[#allocation3 + $0x8] sm:$0xff]
        %v328 = vld [vmem:[#allocation3 + $0x10] sm:$0xff]
        %v329 = vld [vmem:[#allocation3 + $0x18] sm:$0xff]
        %v330 = vld [vmem:[#allocation3 + $0x20] sm:$0xff]
        %v331 = vld [vmem:[#allocation3 + $0x28] sm:$0xff]
        %v332 = vld [vmem:[#allocation3 + $0x30] sm:$0xff]
        %v333 = vld [vmem:[#allocation3 + $0x38] sm:$0xff]
        %v334 = vld [vmem:[#allocation3 + $0x40] sm:$0xff]
        %v335 = vld [vmem:[#allocation3 + $0x48] sm:$0xff]
        %v336 = vld [vmem:[#allocation3 + $0x50] sm:$0xff]
        %v337 = vld [vmem:[#allocation3 + $0x58] sm:$0xff]
        %v338 = vld [vmem:[#allocation3 + $0x60] sm:$0xff]
        %v339 = vld [vmem:[#allocation3 + $0x68] sm:$0xff]
        %v340 = vld [vmem:[#allocation3 + $0x70] sm:$0xff]
        %v341 = vld [vmem:[#allocation3 + $0x78] sm:$0xff]
        %v342 = vld [vmem:[#allocation3 + $0x80] sm:$0xff]
        %v343 = vld [vmem:[#allocation3 + $0x88] sm:$0xff]
        %v344 = vld [vmem:[#allocation3 + $0x90] sm:$0xff]
        %v345 = vld [vmem:[#allocation3 + $0x98] sm:$0xff]
        %v346 = vld [vmem:[#allocation3 + $0xa0] sm:$0xff]
        %v347 = vld [vmem:[#allocation3 + $0xa8] sm:$0xff]
        %v348 = vld [vmem:[#allocation3 + $0xb0] sm:$0xff]
        %v349 = vld [vmem:[#allocation3 + $0xb8] sm:$0xff]
        %v350 = vld [vmem:[#allocation3 + $0xc0] sm:$0xff]
        %v351 = vld [vmem:[#allocation3 + $0xc8] sm:$0xff]
        %v352 = vld [vmem:[#allocation3 + $0xd0] sm:$0xff]
        %v353 = vld [vmem:[#allocation3 + $0xd8] sm:$0xff]
        %v354 = vld [vmem:[#allocation3 + $0xe0] sm:$0xff]
        %v355 = vld [vmem:[#allocation3 + $0xe8] sm:$0xff]
        %v356 = vld [vmem:[#allocation3 + $0xf0] sm:$0xff]
        %v357 = vld [vmem:[#allocation3 + $0xf8] sm:$0xff]
        %v358 = vld [vmem:[%s275] sm:$0xff]
        %v359 = vld [vmem:[%s275 + $0x8] sm:$0xff]
        %v360 = vld [vmem:[%s275 + $0x10] sm:$0xff]
        %v361 = vld [vmem:[%s275 + $0x18] sm:$0xff]
        %v362 = vld [vmem:[%s275 + $0x20] sm:$0xff]
        %v363 = vld [vmem:[%s275 + $0x28] sm:$0xff]
        %v364 = vld [vmem:[%s275 + $0x30] sm:$0xff]
        %v365 = vld [vmem:[%s275 + $0x38] sm:$0xff]
        %v366 = vld [vmem:[%s275 + $0x40] sm:$0xff]
        %v367 = vld [vmem:[%s275 + $0x48] sm:$0xff]
        %v368 = vld [vmem:[%s275 + $0x50] sm:$0xff]
        %v369 = vld [vmem:[%s275 + $0x58] sm:$0xff]
        %v370 = vld [vmem:[%s275 + $0x60] sm:$0xff]
        %v371 = vld [vmem:[%s275 + $0x68] sm:$0xff]
        %v372 = vld [vmem:[%s275 + $0x70] sm:$0xff]
        %v373 = vld [vmem:[%s275 + $0x78] sm:$0xff]
        %v374 = vld [vmem:[%s275 + $0x80] sm:$0xff]
        %v375 = vld [vmem:[%s275 + $0x88] sm:$0xff]
        %v376 = vld [vmem:[%s275 + $0x90] sm:$0xff]
        %v377 = vld [vmem:[%s275 + $0x98] sm:$0xff]
        %v378 = vld [vmem:[%s275 + $0xa0] sm:$0xff]
        %v379 = vld [vmem:[%s275 + $0xa8] sm:$0xff]
        %v380 = vld [vmem:[%s275 + $0xb0] sm:$0xff]
        %v381 = vld [vmem:[%s275 + $0xb8] sm:$0xff]
        %v382 = vld [vmem:[%s275 + $0xc0] sm:$0xff]
        %v383 = vld [vmem:[%s275 + $0xc8] sm:$0xff]
        %v384 = vld [vmem:[%s275 + $0xd0] sm:$0xff]
        %v385 = vld [vmem:[%s275 + $0xd8] sm:$0xff]
        %v386 = vld [vmem:[%s275 + $0xe0] sm:$0xff]
        %v387 = vld [vmem:[%s275 + $0xe8] sm:$0xff]
        %v388 = vld [vmem:[%s275 + $0xf0] sm:$0xff]
        %v389 = vld [vmem:[%s275 + $0xf8] sm:$0xff]
        %v422 = vunpack.c.l.b16 %v326
        %v423 = vunpack.c.h.b16 %v326
        %v424 = vunpack.c.l.b16 %v327
        %v425 = vunpack.c.h.b16 %v327
        %v426 = vunpack.c.l.b16 %v328
        %v427 = vunpack.c.h.b16 %v328
        %v428 = vunpack.c.l.b16 %v329
        %v429 = vunpack.c.h.b16 %v329
        %v430 = vunpack.c.l.b16 %v330
        %v431 = vunpack.c.h.b16 %v330
        %v432 = vunpack.c.l.b16 %v331
        %v433 = vunpack.c.h.b16 %v331
        %v434 = vunpack.c.l.b16 %v332
        %v435 = vunpack.c.h.b16 %v332
        %v436 = vunpack.c.l.b16 %v333
        %v437 = vunpack.c.h.b16 %v333
        %v438 = vunpack.c.l.b16 %v334
        %v439 = vunpack.c.h.b16 %v334
        %v440 = vunpack.c.l.b16 %v335
        %v441 = vunpack.c.h.b16 %v335
        %v442 = vunpack.c.l.b16 %v336
        %v443 = vunpack.c.h.b16 %v336
        %v444 = vunpack.c.l.b16 %v337
        %v445 = vunpack.c.h.b16 %v337
        %v446 = vunpack.c.l.b16 %v338
        %v447 = vunpack.c.h.b16 %v338
        %v448 = vunpack.c.l.b16 %v339
        %v449 = vunpack.c.h.b16 %v339
        %v450 = vunpack.c.l.b16 %v340
        %v451 = vunpack.c.h.b16 %v340
        %v452 = vunpack.c.l.b16 %v341
        %v453 = vunpack.c.h.b16 %v341
        %v454 = vunpack.c.l.b16 %v342
        %v455 = vunpack.c.h.b16 %v342
        %v456 = vunpack.c.l.b16 %v343
        %v457 = vunpack.c.h.b16 %v343
        %v458 = vunpack.c.l.b16 %v344
        %v459 = vunpack.c.h.b16 %v344
        %v460 = vunpack.c.l.b16 %v345
        %v461 = vunpack.c.h.b16 %v345
        %v462 = vunpack.c.l.b16 %v346
        %v463 = vunpack.c.h.b16 %v346
        %v464 = vunpack.c.l.b16 %v347
        %v465 = vunpack.c.h.b16 %v347
        %v466 = vunpack.c.l.b16 %v348
        %v467 = vunpack.c.h.b16 %v348
        %v468 = vunpack.c.l.b16 %v349
        %v469 = vunpack.c.h.b16 %v349
        %v470 = vunpack.c.l.b16 %v350
        %v471 = vunpack.c.h.b16 %v350
        %v472 = vunpack.c.l.b16 %v351
        %v473 = vunpack.c.h.b16 %v351
        %v474 = vunpack.c.l.b16 %v352
        %v475 = vunpack.c.h.b16 %v352
        %v476 = vunpack.c.l.b16 %v353
        %v477 = vunpack.c.h.b16 %v353
        %v478 = vunpack.c.l.b16 %v354
        %v479 = vunpack.c.h.b16 %v354
        %v480 = vunpack.c.l.b16 %v355
        %v481 = vunpack.c.h.b16 %v355
        %v482 = vunpack.c.l.b16 %v356
        %v483 = vunpack.c.h.b16 %v356
        %v484 = vunpack.c.l.b16 %v357
        %v485 = vunpack.c.h.b16 %v357
        %v486 = vpack.c.b16 %v424, %v422
        %v487 = vpack.c.b16 %v425, %v423
        %v488 = vpack.c.b16 %v428, %v426
        %v489 = vpack.c.b16 %v429, %v427
        %v490 = vpack.c.b16 %v432, %v430
        %v491 = vpack.c.b16 %v433, %v431
        %v492 = vpack.c.b16 %v436, %v434
        %v493 = vpack.c.b16 %v437, %v435
        %v494 = vpack.c.b16 %v440, %v438
        %v495 = vpack.c.b16 %v441, %v439
        %v496 = vpack.c.b16 %v444, %v442
        %v497 = vpack.c.b16 %v445, %v443
        %v498 = vpack.c.b16 %v448, %v446
        %v499 = vpack.c.b16 %v449, %v447
        %v500 = vpack.c.b16 %v452, %v450
        %v501 = vpack.c.b16 %v453, %v451
        %v502 = vpack.c.b16 %v456, %v454
        %v503 = vpack.c.b16 %v457, %v455
        %v504 = vpack.c.b16 %v460, %v458
        %v505 = vpack.c.b16 %v461, %v459
        %v506 = vpack.c.b16 %v464, %v462
        %v507 = vpack.c.b16 %v465, %v463
        %v508 = vpack.c.b16 %v468, %v466
        %v509 = vpack.c.b16 %v469, %v467
        %v510 = vpack.c.b16 %v472, %v470
        %v511 = vpack.c.b16 %v473, %v471
        %v512 = vpack.c.b16 %v476, %v474
        %v513 = vpack.c.b16 %v477, %v475
        %v514 = vpack.c.b16 %v480, %v478
        %v515 = vpack.c.b16 %v481, %v479
        %v516 = vpack.c.b16 %v484, %v482
        %v517 = vpack.c.b16 %v485, %v483
        %v582 = vunpack.c.l.b16 %v358
        %v583 = vunpack.c.h.b16 %v358
        %v584 = vunpack.c.l.b16 %v359
        %v585 = vunpack.c.h.b16 %v359
        %v586 = vunpack.c.l.b16 %v360
        %v587 = vunpack.c.h.b16 %v360
        %v588 = vunpack.c.l.b16 %v361
        %v589 = vunpack.c.h.b16 %v361
        %v590 = vunpack.c.l.b16 %v362
        %v591 = vunpack.c.h.b16 %v362
        %v592 = vunpack.c.l.b16 %v363
        %v593 = vunpack.c.h.b16 %v363
        %v594 = vunpack.c.l.b16 %v364
        %v595 = vunpack.c.h.b16 %v364
        %v596 = vunpack.c.l.b16 %v365
        %v597 = vunpack.c.h.b16 %v365
        %v598 = vunpack.c.l.b16 %v366
        %v599 = vunpack.c.h.b16 %v366
        %v600 = vunpack.c.l.b16 %v367
        %v601 = vunpack.c.h.b16 %v367
        %v602 = vunpack.c.l.b16 %v368
        %v603 = vunpack.c.h.b16 %v368
        %v604 = vunpack.c.l.b16 %v369
        %v605 = vunpack.c.h.b16 %v369
        %v606 = vunpack.c.l.b16 %v370
        %v607 = vunpack.c.h.b16 %v370
        %v608 = vunpack.c.l.b16 %v371
        %v609 = vunpack.c.h.b16 %v371
        %v610 = vunpack.c.l.b16 %v372
        %v611 = vunpack.c.h.b16 %v372
        %v612 = vunpack.c.l.b16 %v373
        %v613 = vunpack.c.h.b16 %v373
        %v614 = vunpack.c.l.b16 %v374
        %v615 = vunpack.c.h.b16 %v374
        %v616 = vunpack.c.l.b16 %v375
        %v617 = vunpack.c.h.b16 %v375
        %v618 = vunpack.c.l.b16 %v376
        %v619 = vunpack.c.h.b16 %v376
        %v620 = vunpack.c.l.b16 %v377
        %v621 = vunpack.c.h.b16 %v377
        %v622 = vunpack.c.l.b16 %v378
        %v623 = vunpack.c.h.b16 %v378
        %v624 = vunpack.c.l.b16 %v379
        %v625 = vunpack.c.h.b16 %v379
        %v626 = vunpack.c.l.b16 %v380
        %v627 = vunpack.c.h.b16 %v380
        %v628 = vunpack.c.l.b16 %v381
        %v629 = vunpack.c.h.b16 %v381
        %v630 = vunpack.c.l.b16 %v382
        %v631 = vunpack.c.h.b16 %v382
        %v632 = vunpack.c.l.b16 %v383
        %v633 = vunpack.c.h.b16 %v383
        %v634 = vunpack.c.l.b16 %v384
        %v635 = vunpack.c.h.b16 %v384
        %v636 = vunpack.c.l.b16 %v385
        %v637 = vunpack.c.h.b16 %v385
        %v638 = vunpack.c.l.b16 %v386
        %v639 = vunpack.c.h.b16 %v386
        %v640 = vunpack.c.l.b16 %v387
        %v641 = vunpack.c.h.b16 %v387
        %v642 = vunpack.c.l.b16 %v388
        %v643 = vunpack.c.h.b16 %v388
        %v644 = vunpack.c.l.b16 %v389
        %v645 = vunpack.c.h.b16 %v389
        %v646 = vpack.c.b16 %v584, %v582
        %v647 = vpack.c.b16 %v585, %v583
        %v648 = vpack.c.b16 %v588, %v586
        %v649 = vpack.c.b16 %v589, %v587
        %v650 = vpack.c.b16 %v592, %v590
        %v651 = vpack.c.b16 %v593, %v591
        %v652 = vpack.c.b16 %v596, %v594
        %v653 = vpack.c.b16 %v597, %v595
        %v654 = vpack.c.b16 %v600, %v598
        %v655 = vpack.c.b16 %v601, %v599
        %v656 = vpack.c.b16 %v604, %v602
        %v657 = vpack.c.b16 %v605, %v603
        %v658 = vpack.c.b16 %v608, %v606
        %v659 = vpack.c.b16 %v609, %v607
        %v660 = vpack.c.b16 %v612, %v610
        %v661 = vpack.c.b16 %v613, %v611
        %v662 = vpack.c.b16 %v616, %v614
        %v663 = vpack.c.b16 %v617, %v615
        %v664 = vpack.c.b16 %v620, %v618
        %v665 = vpack.c.b16 %v621, %v619
        %v666 = vpack.c.b16 %v624, %v622
        %v667 = vpack.c.b16 %v625, %v623
        %v668 = vpack.c.b16 %v628, %v626
        %v669 = vpack.c.b16 %v629, %v627
        %v670 = vpack.c.b16 %v632, %v630
        %v671 = vpack.c.b16 %v633, %v631
        %v672 = vpack.c.b16 %v636, %v634
        %v673 = vpack.c.b16 %v637, %v635
        %v674 = vpack.c.b16 %v640, %v638
        %v675 = vpack.c.b16 %v641, %v639
        %v676 = vpack.c.b16 %v644, %v642
        %v677 = vpack.c.b16 %v645, %v643
        %710 = vmatprep.subr.bf16.mxu0 %v661
        %711 = vmatpush1.bf16.msra.mxu0 %v660
        %712 = vmatprep.subr.bf16.mxu0 %v659
        %713 = vmatpush1.bf16.msra.mxu0 %v658
        %714 = vmatprep.subr.bf16.mxu0 %v657
        %715 = vmatpush1.bf16.msra.mxu0 %v656
        %716 = vmatprep.subr.bf16.mxu0 %v655
        %717 = vmatpush1.bf16.msra.mxu0 %v654
        %718 = vmatprep.subr.bf16.mxu0 %v653
        %719 = vmatpush1.bf16.msra.mxu0 %v652
        %720 = vmatprep.subr.bf16.mxu0 %v651
        %721 = vmatpush1.bf16.msra.mxu0 %v650
        %722 = vmatprep.subr.bf16.mxu0 %v649
        %723 = vmatpush1.bf16.msra.mxu0 %v648
        %724 = vmatprep.subr.bf16.mxu0 %v647
        %725 = vmatpush1.bf16.msra.mxu0 %v646
        %726 = vmatprep.subr.bf16.mxu0 %v677
        %727 = vmatpush2.bf16.msra.mxu0 %v676
        %728 = vmatprep.subr.bf16.mxu0 %v675
        %729 = vmatpush2.bf16.msra.mxu0 %v674
        %730 = vmatprep.subr.bf16.mxu0 %v673
        %731 = vmatpush2.bf16.msra.mxu0 %v672
        %732 = vmatprep.subr.bf16.mxu0 %v671
        %733 = vmatpush2.bf16.msra.mxu0 %v670
        %734 = vmatprep.subr.bf16.mxu0 %v669
        %735 = vmatpush2.bf16.msra.mxu0 %v668
        %736 = vmatprep.subr.bf16.mxu0 %v667
        %737 = vmatpush2.bf16.msra.mxu0 %v666
        %738 = vmatprep.subr.bf16.mxu0 %v665
        %739 = vmatpush2.bf16.msra.mxu0 %v664
        %740 = vmatprep.subr.bf16.mxu0 %v663
        %741 = vmatpush2.bf16.msra.mxu0 %v662
        %742 = vmatprep.mubr.bf16.mxu0 %v487
        %743 = vmatmul.mubr.bf16.gmra.mxu0 %v486
        %v744 = vpop.f32.mrf.mxu0
        %v745 = vadd.f32 0.0, %v744
        %v746 = vpop.f32.mrf.mxu0
        %v747 = vadd.f32 0.0, %v746
        %v748 = vpop.f32.mrf.mxu0
        %v749 = vadd.f32 0.0, %v748
        %v750 = vpop.f32.mrf.mxu0
        %v751 = vadd.f32 0.0, %v750
        %752 = vmatprep.mubr.bf16.mxu0 %v489
        %753 = vmatmul.mubr.bf16.gmra.mxu0 %v488
        %v754 = vpop.f32.mrf.mxu0
        %v755 = vadd.f32 0.0, %v754
        %v756 = vpop.f32.mrf.mxu0
        %v757 = vadd.f32 0.0, %v756
        %v758 = vpop.f32.mrf.mxu0
        %v759 = vadd.f32 0.0, %v758
        %v760 = vpop.f32.mrf.mxu0
        %v761 = vadd.f32 0.0, %v760
        %762 = vmatprep.mubr.bf16.mxu0 %v491
        %763 = vmatmul.mubr.bf16.gmra.mxu0 %v490
        %v764 = vpop.f32.mrf.mxu0
        %v765 = vadd.f32 0.0, %v764
        %v766 = vpop.f32.mrf.mxu0
        %v767 = vadd.f32 0.0, %v766
        %v768 = vpop.f32.mrf.mxu0
        %v769 = vadd.f32 0.0, %v768
        %v770 = vpop.f32.mrf.mxu0
        %v771 = vadd.f32 0.0, %v770
        %772 = vmatprep.mubr.bf16.mxu0 %v493
        %773 = vmatmul.mubr.bf16.gmra.mxu0 %v492
        %v774 = vpop.f32.mrf.mxu0
        %v775 = vadd.f32 0.0, %v774
        %v776 = vpop.f32.mrf.mxu0
        %v777 = vadd.f32 0.0, %v776
        %v778 = vpop.f32.mrf.mxu0
        %v779 = vadd.f32 0.0, %v778
        %v780 = vpop.f32.mrf.mxu0
        %v781 = vadd.f32 0.0, %v780
        %782 = vmatprep.mubr.bf16.mxu0 %v495
        %783 = vmatmul.mubr.bf16.gmra.mxu0 %v494
        %v784 = vpop.f32.mrf.mxu0
        %v785 = vadd.f32 0.0, %v784
        %v786 = vpop.f32.mrf.mxu0
        %v787 = vadd.f32 0.0, %v786
        %v788 = vpop.f32.mrf.mxu0
        %v789 = vadd.f32 0.0, %v788
        %v790 = vpop.f32.mrf.mxu0
        %v791 = vadd.f32 0.0, %v790
        %792 = vmatprep.mubr.bf16.mxu0 %v497
        %793 = vmatmul.mubr.bf16.gmra.mxu0 %v496
        %v794 = vpop.f32.mrf.mxu0
        %v795 = vadd.f32 0.0, %v794
        %v796 = vpop.f32.mrf.mxu0
        %v797 = vadd.f32 0.0, %v796
        %v798 = vpop.f32.mrf.mxu0
        %v799 = vadd.f32 0.0, %v798
        %v800 = vpop.f32.mrf.mxu0
        %v801 = vadd.f32 0.0, %v800
        %802 = vmatprep.mubr.bf16.mxu0 %v499
        %803 = vmatmul.mubr.bf16.gmra.mxu0 %v498
        %v804 = vpop.f32.mrf.mxu0
        %v805 = vadd.f32 0.0, %v804
        %v806 = vpop.f32.mrf.mxu0
        %v807 = vadd.f32 0.0, %v806
        %v808 = vpop.f32.mrf.mxu0
        %v809 = vadd.f32 0.0, %v808
        %v810 = vpop.f32.mrf.mxu0
        %v811 = vadd.f32 0.0, %v810
        %812 = vmatprep.mubr.bf16.mxu0 %v501
        %813 = vmatmul.mubr.bf16.gmra.mxu0 %v500
        %v814 = vpop.f32.mrf.mxu0
        %v815 = vadd.f32 0.0, %v814
        %v816 = vpop.f32.mrf.mxu0
        %v817 = vadd.f32 0.0, %v816
        %v818 = vpop.f32.mrf.mxu0
        %v819 = vadd.f32 0.0, %v818
        %v820 = vpop.f32.mrf.mxu0
        %v821 = vadd.f32 0.0, %v820
        %822 = vmatprep.mubr.bf16.mxu0 %v503
        %823 = vmatmul.mubr.bf16.gmra.mxu0 %v502
        %v824 = vpop.f32.mrf.mxu0
        %v825 = vadd.f32 0.0, %v824
        %v826 = vpop.f32.mrf.mxu0
        %v827 = vadd.f32 0.0, %v826
        %v828 = vpop.f32.mrf.mxu0
        %v829 = vadd.f32 0.0, %v828
        %v830 = vpop.f32.mrf.mxu0
        %v831 = vadd.f32 0.0, %v830
        %832 = vmatprep.mubr.bf16.mxu0 %v505
        %833 = vmatmul.mubr.bf16.gmra.mxu0 %v504
        %v834 = vpop.f32.mrf.mxu0
        %v835 = vadd.f32 0.0, %v834
        %v836 = vpop.f32.mrf.mxu0
        %v837 = vadd.f32 0.0, %v836
        %v838 = vpop.f32.mrf.mxu0
        %v839 = vadd.f32 0.0, %v838
        %v840 = vpop.f32.mrf.mxu0
        %v841 = vadd.f32 0.0, %v840
        %842 = vmatprep.mubr.bf16.mxu0 %v507
        %843 = vmatmul.mubr.bf16.gmra.mxu0 %v506
        %v844 = vpop.f32.mrf.mxu0
        %v845 = vadd.f32 0.0, %v844
        %v846 = vpop.f32.mrf.mxu0
        %v847 = vadd.f32 0.0, %v846
        %v848 = vpop.f32.mrf.mxu0
        %v849 = vadd.f32 0.0, %v848
        %v850 = vpop.f32.mrf.mxu0
        %v851 = vadd.f32 0.0, %v850
        %852 = vmatprep.mubr.bf16.mxu0 %v509
        %853 = vmatmul.mubr.bf16.gmra.mxu0 %v508
        %v854 = vpop.f32.mrf.mxu0
        %v855 = vadd.f32 0.0, %v854
        %v856 = vpop.f32.mrf.mxu0
        %v857 = vadd.f32 0.0, %v856
        %v858 = vpop.f32.mrf.mxu0
        %v859 = vadd.f32 0.0, %v858
        %v860 = vpop.f32.mrf.mxu0
        %v861 = vadd.f32 0.0, %v860
        %862 = vmatprep.mubr.bf16.mxu0 %v511
        %863 = vmatmul.mubr.bf16.gmra.mxu0 %v510
        %v864 = vpop.f32.mrf.mxu0
        %v865 = vadd.f32 0.0, %v864
        %v866 = vpop.f32.mrf.mxu0
        %v867 = vadd.f32 0.0, %v866
        %v868 = vpop.f32.mrf.mxu0
        %v869 = vadd.f32 0.0, %v868
        %v870 = vpop.f32.mrf.mxu0
        %v871 = vadd.f32 0.0, %v870
        %872 = vmatprep.mubr.bf16.mxu0 %v513
        %873 = vmatmul.mubr.bf16.gmra.mxu0 %v512
        %v874 = vpop.f32.mrf.mxu0
        %v875 = vadd.f32 0.0, %v874
        %v876 = vpop.f32.mrf.mxu0
        %v877 = vadd.f32 0.0, %v876
        %v878 = vpop.f32.mrf.mxu0
        %v879 = vadd.f32 0.0, %v878
        %v880 = vpop.f32.mrf.mxu0
        %v881 = vadd.f32 0.0, %v880
        %882 = vmatprep.mubr.bf16.mxu0 %v515
        %883 = vmatmul.mubr.bf16.gmra.mxu0 %v514
        %v884 = vpop.f32.mrf.mxu0
        %v885 = vadd.f32 0.0, %v884
        %v886 = vpop.f32.mrf.mxu0
        %v887 = vadd.f32 0.0, %v886
        %v888 = vpop.f32.mrf.mxu0
        %v889 = vadd.f32 0.0, %v888
        %v890 = vpop.f32.mrf.mxu0
        %v891 = vadd.f32 0.0, %v890
        %892 = vmatprep.mubr.bf16.mxu0 %v517
        %893 = vmatmul.mubr.bf16.gmra.mxu0 %v516
        %v894 = vpop.f32.mrf.mxu0
        %v895 = vadd.f32 0.0, %v894
        %v896 = vpop.f32.mrf.mxu0
        %v897 = vadd.f32 0.0, %v896
        %v898 = vpop.f32.mrf.mxu0
        %v899 = vadd.f32 0.0, %v898
        %v900 = vpop.f32.mrf.mxu0
        %v901 = vadd.f32 0.0, %v900
        %902 = vdwg.mxu0
        %v903 = vld [vmem:[%s284] sm:$0xff]
        %v904 = vld [vmem:[%s284 + $0x8] sm:$0xff]
        %v905 = vld [vmem:[%s284 + $0x10] sm:$0xff]
        %v906 = vld [vmem:[%s284 + $0x18] sm:$0xff]
        %v907 = vld [vmem:[%s284 + $0x20] sm:$0xff]
        %v908 = vld [vmem:[%s284 + $0x28] sm:$0xff]
        %v909 = vld [vmem:[%s284 + $0x30] sm:$0xff]
        %v910 = vld [vmem:[%s284 + $0x38] sm:$0xff]
        %v911 = vld [vmem:[%s284 + $0x40] sm:$0xff]
        %v912 = vld [vmem:[%s284 + $0x48] sm:$0xff]
        %v913 = vld [vmem:[%s284 + $0x50] sm:$0xff]
        %v914 = vld [vmem:[%s284 + $0x58] sm:$0xff]
        %v915 = vld [vmem:[%s284 + $0x60] sm:$0xff]
        %v916 = vld [vmem:[%s284 + $0x68] sm:$0xff]
        %v917 = vld [vmem:[%s284 + $0x70] sm:$0xff]
        %v918 = vld [vmem:[%s284 + $0x78] sm:$0xff]
        %v919 = vld [vmem:[%s284 + $0x80] sm:$0xff]
        %v920 = vld [vmem:[%s284 + $0x88] sm:$0xff]
        %v921 = vld [vmem:[%s284 + $0x90] sm:$0xff]
        %v922 = vld [vmem:[%s284 + $0x98] sm:$0xff]
        %v923 = vld [vmem:[%s284 + $0xa0] sm:$0xff]
        %v924 = vld [vmem:[%s284 + $0xa8] sm:$0xff]
        %v925 = vld [vmem:[%s284 + $0xb0] sm:$0xff]
        %v926 = vld [vmem:[%s284 + $0xb8] sm:$0xff]
        %v927 = vld [vmem:[%s284 + $0xc0] sm:$0xff]
        %v928 = vld [vmem:[%s284 + $0xc8] sm:$0xff]
        %v929 = vld [vmem:[%s284 + $0xd0] sm:$0xff]
        %v930 = vld [vmem:[%s284 + $0xd8] sm:$0xff]
        %v931 = vld [vmem:[%s284 + $0xe0] sm:$0xff]
        %v932 = vld [vmem:[%s284 + $0xe8] sm:$0xff]
        %v933 = vld [vmem:[%s284 + $0xf0] sm:$0xff]
        %v934 = vld [vmem:[%s284 + $0xf8] sm:$0xff]
        %v967 = vunpack.c.l.b16 %v903
        %v968 = vunpack.c.h.b16 %v903
        %v969 = vunpack.c.l.b16 %v904
        %v970 = vunpack.c.h.b16 %v904
        %v971 = vunpack.c.l.b16 %v905
        %v972 = vunpack.c.h.b16 %v905
        %v973 = vunpack.c.l.b16 %v906
        %v974 = vunpack.c.h.b16 %v906
        %v975 = vunpack.c.l.b16 %v907
        %v976 = vunpack.c.h.b16 %v907
        %v977 = vunpack.c.l.b16 %v908
        %v978 = vunpack.c.h.b16 %v908
        %v979 = vunpack.c.l.b16 %v909
        %v980 = vunpack.c.h.b16 %v909
        %v981 = vunpack.c.l.b16 %v910
        %v982 = vunpack.c.h.b16 %v910
        %v983 = vunpack.c.l.b16 %v911
        %v984 = vunpack.c.h.b16 %v911
        %v985 = vunpack.c.l.b16 %v912
        %v986 = vunpack.c.h.b16 %v912
        %v987 = vunpack.c.l.b16 %v913
        %v988 = vunpack.c.h.b16 %v913
        %v989 = vunpack.c.l.b16 %v914
        %v990 = vunpack.c.h.b16 %v914
        %v991 = vunpack.c.l.b16 %v915
        %v992 = vunpack.c.h.b16 %v915
        %v993 = vunpack.c.l.b16 %v916
        %v994 = vunpack.c.h.b16 %v916
        %v995 = vunpack.c.l.b16 %v917
        %v996 = vunpack.c.h.b16 %v917
        %v997 = vunpack.c.l.b16 %v918
        %v998 = vunpack.c.h.b16 %v918
        %v999 = vunpack.c.l.b16 %v919
        %v1000 = vunpack.c.h.b16 %v919
        %v1001 = vunpack.c.l.b16 %v920
        %v1002 = vunpack.c.h.b16 %v920
        %v1003 = vunpack.c.l.b16 %v921
        %v1004 = vunpack.c.h.b16 %v921
        %v1005 = vunpack.c.l.b16 %v922
        %v1006 = vunpack.c.h.b16 %v922
        %v1007 = vunpack.c.l.b16 %v923
        %v1008 = vunpack.c.h.b16 %v923
        %v1009 = vunpack.c.l.b16 %v924
        %v1010 = vunpack.c.h.b16 %v924
        %v1011 = vunpack.c.l.b16 %v925
        %v1012 = vunpack.c.h.b16 %v925
        %v1013 = vunpack.c.l.b16 %v926
        %v1014 = vunpack.c.h.b16 %v926
        %v1015 = vunpack.c.l.b16 %v927
        %v1016 = vunpack.c.h.b16 %v927
        %v1017 = vunpack.c.l.b16 %v928
        %v1018 = vunpack.c.h.b16 %v928
        %v1019 = vunpack.c.l.b16 %v929
        %v1020 = vunpack.c.h.b16 %v929
        %v1021 = vunpack.c.l.b16 %v930
        %v1022 = vunpack.c.h.b16 %v930
        %v1023 = vunpack.c.l.b16 %v931
        %v1024 = vunpack.c.h.b16 %v931
        %v1025 = vunpack.c.l.b16 %v932
        %v1026 = vunpack.c.h.b16 %v932
        %v1027 = vunpack.c.l.b16 %v933
        %v1028 = vunpack.c.h.b16 %v933
        %v1029 = vunpack.c.l.b16 %v934
        %v1030 = vunpack.c.h.b16 %v934
        %v1031 = vpack.c.b16 %v969, %v967
        %v1032 = vpack.c.b16 %v970, %v968
        %v1033 = vpack.c.b16 %v973, %v971
        %v1034 = vpack.c.b16 %v974, %v972
        %v1035 = vpack.c.b16 %v977, %v975
        %v1036 = vpack.c.b16 %v978, %v976
        %v1037 = vpack.c.b16 %v981, %v979
        %v1038 = vpack.c.b16 %v982, %v980
        %v1039 = vpack.c.b16 %v985, %v983
        %v1040 = vpack.c.b16 %v986, %v984
        %v1041 = vpack.c.b16 %v989, %v987
        %v1042 = vpack.c.b16 %v990, %v988
        %v1043 = vpack.c.b16 %v993, %v991
        %v1044 = vpack.c.b16 %v994, %v992
        %v1045 = vpack.c.b16 %v997, %v995
        %v1046 = vpack.c.b16 %v998, %v996
        %v1047 = vpack.c.b16 %v1001, %v999
        %v1048 = vpack.c.b16 %v1002, %v1000
        %v1049 = vpack.c.b16 %v1005, %v1003
        %v1050 = vpack.c.b16 %v1006, %v1004
        %v1051 = vpack.c.b16 %v1009, %v1007
        %v1052 = vpack.c.b16 %v1010, %v1008
        %v1053 = vpack.c.b16 %v1013, %v1011
        %v1054 = vpack.c.b16 %v1014, %v1012
        %v1055 = vpack.c.b16 %v1017, %v1015
        %v1056 = vpack.c.b16 %v1018, %v1016
        %v1057 = vpack.c.b16 %v1021, %v1019
        %v1058 = vpack.c.b16 %v1022, %v1020
        %v1059 = vpack.c.b16 %v1025, %v1023
        %v1060 = vpack.c.b16 %v1026, %v1024
        %v1061 = vpack.c.b16 %v1029, %v1027
        %v1062 = vpack.c.b16 %v1030, %v1028
        %1095 = vmatprep.subr.bf16.mxu0 %v1046
        %1096 = vmatpush1.bf16.msra.mxu0 %v1045
        %1097 = vmatprep.subr.bf16.mxu0 %v1044
        %1098 = vmatpush1.bf16.msra.mxu0 %v1043
        %1099 = vmatprep.subr.bf16.mxu0 %v1042
        %1100 = vmatpush1.bf16.msra.mxu0 %v1041
        %1101 = vmatprep.subr.bf16.mxu0 %v1040
        %1102 = vmatpush1.bf16.msra.mxu0 %v1039
        %1103 = vmatprep.subr.bf16.mxu0 %v1038
        %1104 = vmatpush1.bf16.msra.mxu0 %v1037
        %1105 = vmatprep.subr.bf16.mxu0 %v1036
        %1106 = vmatpush1.bf16.msra.mxu0 %v1035
        %1107 = vmatprep.subr.bf16.mxu0 %v1034
        %1108 = vmatpush1.bf16.msra.mxu0 %v1033
        %1109 = vmatprep.subr.bf16.mxu0 %v1032
        %1110 = vmatpush1.bf16.msra.mxu0 %v1031
        %1111 = vmatprep.subr.bf16.mxu0 %v1062
        %1112 = vmatpush2.bf16.msra.mxu0 %v1061
        %1113 = vmatprep.subr.bf16.mxu0 %v1060
        %1114 = vmatpush2.bf16.msra.mxu0 %v1059
        %1115 = vmatprep.subr.bf16.mxu0 %v1058
        %1116 = vmatpush2.bf16.msra.mxu0 %v1057
        %1117 = vmatprep.subr.bf16.mxu0 %v1056
        %1118 = vmatpush2.bf16.msra.mxu0 %v1055
        %1119 = vmatprep.subr.bf16.mxu0 %v1054
        %1120 = vmatpush2.bf16.msra.mxu0 %v1053
        %1121 = vmatprep.subr.bf16.mxu0 %v1052
        %1122 = vmatpush2.bf16.msra.mxu0 %v1051
        %1123 = vmatprep.subr.bf16.mxu0 %v1050
        %1124 = vmatpush2.bf16.msra.mxu0 %v1049
        %1125 = vmatprep.subr.bf16.mxu0 %v1048
        %1126 = vmatpush2.bf16.msra.mxu0 %v1047
        %1127 = vmatprep.mubr.bf16.mxu0 %v487
        %1128 = vmatmul.mubr.bf16.gmra.mxu0 %v486
        %v1129 = vpop.f32.mrf.mxu0
        %v1130 = vadd.f32 0.0, %v1129
        %v1131 = vpop.f32.mrf.mxu0
        %v1132 = vadd.f32 0.0, %v1131
        %v1133 = vpop.f32.mrf.mxu0
        %v1134 = vadd.f32 0.0, %v1133
        %v1135 = vpop.f32.mrf.mxu0
        %v1136 = vadd.f32 0.0, %v1135
        %1137 = vmatprep.mubr.bf16.mxu0 %v489
        %1138 = vmatmul.mubr.bf16.gmra.mxu0 %v488
        %v1139 = vpop.f32.mrf.mxu0
        %v1140 = vadd.f32 0.0, %v1139
        %v1141 = vpop.f32.mrf.mxu0
        %v1142 = vadd.f32 0.0, %v1141
        %v1143 = vpop.f32.mrf.mxu0
        %v1144 = vadd.f32 0.0, %v1143
        %v1145 = vpop.f32.mrf.mxu0
        %v1146 = vadd.f32 0.0, %v1145
        %1147 = vmatprep.mubr.bf16.mxu0 %v491
        %1148 = vmatmul.mubr.bf16.gmra.mxu0 %v490
        %v1149 = vpop.f32.mrf.mxu0
        %v1150 = vadd.f32 0.0, %v1149
        %v1151 = vpop.f32.mrf.mxu0
        %v1152 = vadd.f32 0.0, %v1151
        %v1153 = vpop.f32.mrf.mxu0
        %v1154 = vadd.f32 0.0, %v1153
        %v1155 = vpop.f32.mrf.mxu0
        %v1156 = vadd.f32 0.0, %v1155
        %1157 = vmatprep.mubr.bf16.mxu0 %v493
        %1158 = vmatmul.mubr.bf16.gmra.mxu0 %v492
        %v1159 = vpop.f32.mrf.mxu0
        %v1160 = vadd.f32 0.0, %v1159
        %v1161 = vpop.f32.mrf.mxu0
        %v1162 = vadd.f32 0.0, %v1161
        %v1163 = vpop.f32.mrf.mxu0
        %v1164 = vadd.f32 0.0, %v1163
        %v1165 = vpop.f32.mrf.mxu0
        %v1166 = vadd.f32 0.0, %v1165
        %1167 = vmatprep.mubr.bf16.mxu0 %v495
        %1168 = vmatmul.mubr.bf16.gmra.mxu0 %v494
        %v1169 = vpop.f32.mrf.mxu0
        %v1170 = vadd.f32 0.0, %v1169
        %v1171 = vpop.f32.mrf.mxu0
        %v1172 = vadd.f32 0.0, %v1171
        %v1173 = vpop.f32.mrf.mxu0
        %v1174 = vadd.f32 0.0, %v1173
        %v1175 = vpop.f32.mrf.mxu0
        %v1176 = vadd.f32 0.0, %v1175
        %1177 = vmatprep.mubr.bf16.mxu0 %v497
        %1178 = vmatmul.mubr.bf16.gmra.mxu0 %v496
        %v1179 = vpop.f32.mrf.mxu0
        %v1180 = vadd.f32 0.0, %v1179
        %v1181 = vpop.f32.mrf.mxu0
        %v1182 = vadd.f32 0.0, %v1181
        %v1183 = vpop.f32.mrf.mxu0
        %v1184 = vadd.f32 0.0, %v1183
        %v1185 = vpop.f32.mrf.mxu0
        %v1186 = vadd.f32 0.0, %v1185
        %1187 = vmatprep.mubr.bf16.mxu0 %v499
        %1188 = vmatmul.mubr.bf16.gmra.mxu0 %v498
        %v1189 = vpop.f32.mrf.mxu0
        %v1190 = vadd.f32 0.0, %v1189
        %v1191 = vpop.f32.mrf.mxu0
        %v1192 = vadd.f32 0.0, %v1191
        %v1193 = vpop.f32.mrf.mxu0
        %v1194 = vadd.f32 0.0, %v1193
        %v1195 = vpop.f32.mrf.mxu0
        %v1196 = vadd.f32 0.0, %v1195
        %1197 = vmatprep.mubr.bf16.mxu0 %v501
        %1198 = vmatmul.mubr.bf16.gmra.mxu0 %v500
        %v1199 = vpop.f32.mrf.mxu0
        %v1200 = vadd.f32 0.0, %v1199
        %v1201 = vpop.f32.mrf.mxu0
        %v1202 = vadd.f32 0.0, %v1201
        %v1203 = vpop.f32.mrf.mxu0
        %v1204 = vadd.f32 0.0, %v1203
        %v1205 = vpop.f32.mrf.mxu0
        %v1206 = vadd.f32 0.0, %v1205
        %1207 = vmatprep.mubr.bf16.mxu0 %v503
        %1208 = vmatmul.mubr.bf16.gmra.mxu0 %v502
        %v1209 = vpop.f32.mrf.mxu0
        %v1210 = vadd.f32 0.0, %v1209
        %v1211 = vpop.f32.mrf.mxu0
        %v1212 = vadd.f32 0.0, %v1211
        %v1213 = vpop.f32.mrf.mxu0
        %v1214 = vadd.f32 0.0, %v1213
        %v1215 = vpop.f32.mrf.mxu0
        %v1216 = vadd.f32 0.0, %v1215
        %1217 = vmatprep.mubr.bf16.mxu0 %v505
        %1218 = vmatmul.mubr.bf16.gmra.mxu0 %v504
        %v1219 = vpop.f32.mrf.mxu0
        %v1220 = vadd.f32 0.0, %v1219
        %v1221 = vpop.f32.mrf.mxu0
        %v1222 = vadd.f32 0.0, %v1221
        %v1223 = vpop.f32.mrf.mxu0
        %v1224 = vadd.f32 0.0, %v1223
        %v1225 = vpop.f32.mrf.mxu0
        %v1226 = vadd.f32 0.0, %v1225
        %1227 = vmatprep.mubr.bf16.mxu0 %v507
        %1228 = vmatmul.mubr.bf16.gmra.mxu0 %v506
        %v1229 = vpop.f32.mrf.mxu0
        %v1230 = vadd.f32 0.0, %v1229
        %v1231 = vpop.f32.mrf.mxu0
        %v1232 = vadd.f32 0.0, %v1231
        %v1233 = vpop.f32.mrf.mxu0
        %v1234 = vadd.f32 0.0, %v1233
        %v1235 = vpop.f32.mrf.mxu0
        %v1236 = vadd.f32 0.0, %v1235
        %1237 = vmatprep.mubr.bf16.mxu0 %v509
        %1238 = vmatmul.mubr.bf16.gmra.mxu0 %v508
        %v1239 = vpop.f32.mrf.mxu0
        %v1240 = vadd.f32 0.0, %v1239
        %v1241 = vpop.f32.mrf.mxu0
        %v1242 = vadd.f32 0.0, %v1241
        %v1243 = vpop.f32.mrf.mxu0
        %v1244 = vadd.f32 0.0, %v1243
        %v1245 = vpop.f32.mrf.mxu0
        %v1246 = vadd.f32 0.0, %v1245
        %1247 = vmatprep.mubr.bf16.mxu0 %v511
        %1248 = vmatmul.mubr.bf16.gmra.mxu0 %v510
        %v1249 = vpop.f32.mrf.mxu0
        %v1250 = vadd.f32 0.0, %v1249
        %v1251 = vpop.f32.mrf.mxu0
        %v1252 = vadd.f32 0.0, %v1251
        %v1253 = vpop.f32.mrf.mxu0
        %v1254 = vadd.f32 0.0, %v1253
        %v1255 = vpop.f32.mrf.mxu0
        %v1256 = vadd.f32 0.0, %v1255
        %1257 = vmatprep.mubr.bf16.mxu0 %v513
        %1258 = vmatmul.mubr.bf16.gmra.mxu0 %v512
        %v1259 = vpop.f32.mrf.mxu0
        %v1260 = vadd.f32 0.0, %v1259
        %v1261 = vpop.f32.mrf.mxu0
        %v1262 = vadd.f32 0.0, %v1261
        %v1263 = vpop.f32.mrf.mxu0
        %v1264 = vadd.f32 0.0, %v1263
        %v1265 = vpop.f32.mrf.mxu0
        %v1266 = vadd.f32 0.0, %v1265
        %1267 = vmatprep.mubr.bf16.mxu0 %v515
        %1268 = vmatmul.mubr.bf16.gmra.mxu0 %v514
        %v1269 = vpop.f32.mrf.mxu0
        %v1270 = vadd.f32 0.0, %v1269
        %v1271 = vpop.f32.mrf.mxu0
        %v1272 = vadd.f32 0.0, %v1271
        %v1273 = vpop.f32.mrf.mxu0
        %v1274 = vadd.f32 0.0, %v1273
        %v1275 = vpop.f32.mrf.mxu0
        %v1276 = vadd.f32 0.0, %v1275
        %1277 = vmatprep.mubr.bf16.mxu0 %v517
        %1278 = vmatmul.mubr.bf16.gmra.mxu0 %v516
        %v1279 = vpop.f32.mrf.mxu0
        %v1280 = vadd.f32 0.0, %v1279
        %v1281 = vpop.f32.mrf.mxu0
        %v1282 = vadd.f32 0.0, %v1281
        %v1283 = vpop.f32.mrf.mxu0
        %v1284 = vadd.f32 0.0, %v1283
        %v1285 = vpop.f32.mrf.mxu0
        %v1286 = vadd.f32 0.0, %v1285
        %1287 = vdwg.mxu0
        %v1288 = vxor.u32 %v745, 2147483648
        %v1289 = vxor.u32 %v747, 2147483648
        %v1290 = vxor.u32 %v749, 2147483648
        %v1291 = vxor.u32 %v751, 2147483648
        %v1292 = vxor.u32 %v755, 2147483648
        %v1293 = vxor.u32 %v757, 2147483648
        %v1294 = vxor.u32 %v759, 2147483648
        %v1295 = vxor.u32 %v761, 2147483648
        %v1296 = vxor.u32 %v765, 2147483648
        %v1297 = vxor.u32 %v767, 2147483648
        %v1298 = vxor.u32 %v769, 2147483648
        %v1299 = vxor.u32 %v771, 2147483648
        %v1300 = vxor.u32 %v775, 2147483648
        %v1301 = vxor.u32 %v777, 2147483648
        %v1302 = vxor.u32 %v779, 2147483648
        %v1303 = vxor.u32 %v781, 2147483648
        %v1304 = vxor.u32 %v785, 2147483648
        %v1305 = vxor.u32 %v787, 2147483648
        %v1306 = vxor.u32 %v789, 2147483648
        %v1307 = vxor.u32 %v791, 2147483648
        %v1308 = vxor.u32 %v795, 2147483648
        %v1309 = vxor.u32 %v797, 2147483648
        %v1310 = vxor.u32 %v799, 2147483648
        %v1311 = vxor.u32 %v801, 2147483648
        %v1312 = vxor.u32 %v805, 2147483648
        %v1313 = vxor.u32 %v807, 2147483648
        %v1314 = vxor.u32 %v809, 2147483648
        %v1315 = vxor.u32 %v811, 2147483648
        %v1316 = vxor.u32 %v815, 2147483648
        %v1317 = vxor.u32 %v817, 2147483648
        %v1318 = vxor.u32 %v819, 2147483648
        %v1319 = vxor.u32 %v821, 2147483648
        %v1320 = vxor.u32 %v825, 2147483648
        %v1321 = vxor.u32 %v827, 2147483648
        %v1322 = vxor.u32 %v829, 2147483648
        %v1323 = vxor.u32 %v831, 2147483648
        %v1324 = vxor.u32 %v835, 2147483648
        %v1325 = vxor.u32 %v837, 2147483648
        %v1326 = vxor.u32 %v839, 2147483648
        %v1327 = vxor.u32 %v841, 2147483648
        %v1328 = vxor.u32 %v845, 2147483648
        %v1329 = vxor.u32 %v847, 2147483648
        %v1330 = vxor.u32 %v849, 2147483648
        %v1331 = vxor.u32 %v851, 2147483648
        %v1332 = vxor.u32 %v855, 2147483648
        %v1333 = vxor.u32 %v857, 2147483648
        %v1334 = vxor.u32 %v859, 2147483648
        %v1335 = vxor.u32 %v861, 2147483648
        %v1336 = vxor.u32 %v865, 2147483648
        %v1337 = vxor.u32 %v867, 2147483648
        %v1338 = vxor.u32 %v869, 2147483648
        %v1339 = vxor.u32 %v871, 2147483648
        %v1340 = vxor.u32 %v875, 2147483648
        %v1341 = vxor.u32 %v877, 2147483648
        %v1342 = vxor.u32 %v879, 2147483648
        %v1343 = vxor.u32 %v881, 2147483648
        %v1344 = vxor.u32 %v885, 2147483648
        %v1345 = vxor.u32 %v887, 2147483648
        %v1346 = vxor.u32 %v889, 2147483648
        %v1347 = vxor.u32 %v891, 2147483648
        %v1348 = vxor.u32 %v895, 2147483648
        %v1349 = vxor.u32 %v897, 2147483648
        %v1350 = vxor.u32 %v899, 2147483648
        %v1351 = vxor.u32 %v901, 2147483648
        %v1352 = vmul.f32 %v1288, 1.442695
        %v1353 = vpow.pop %v1352
        %v1354 = vmul.f32 %v1289, 1.442695
        %v1355 = vpow.pop %v1354
        %v1356 = vmul.f32 %v1290, 1.442695
        %v1357 = vpow.pop %v1356
        %v1358 = vmul.f32 %v1291, 1.442695
        %v1359 = vpow.pop %v1358
        %v1360 = vmul.f32 %v1292, 1.442695
        %v1361 = vpow.pop %v1360
        %v1362 = vmul.f32 %v1293, 1.442695
        %v1363 = vpow.pop %v1362
        %v1364 = vmul.f32 %v1294, 1.442695
        %v1365 = vpow.pop %v1364
        %v1366 = vmul.f32 %v1295, 1.442695
        %v1367 = vpow.pop %v1366
        %v1368 = vmul.f32 %v1296, 1.442695
        %v1369 = vpow.pop %v1368
        %v1370 = vmul.f32 %v1297, 1.442695
        %v1371 = vpow.pop %v1370
        %v1372 = vmul.f32 %v1298, 1.442695
        %v1373 = vpow.pop %v1372
        %v1374 = vmul.f32 %v1299, 1.442695
        %v1375 = vpow.pop %v1374
        %v1376 = vmul.f32 %v1300, 1.442695
        %v1377 = vpow.pop %v1376
        %v1378 = vmul.f32 %v1301, 1.442695
        %v1379 = vpow.pop %v1378
        %v1380 = vmul.f32 %v1302, 1.442695
        %v1381 = vpow.pop %v1380
        %v1382 = vmul.f32 %v1303, 1.442695
        %v1383 = vpow.pop %v1382
        %v1384 = vmul.f32 %v1304, 1.442695
        %v1385 = vpow.pop %v1384
        %v1386 = vmul.f32 %v1305, 1.442695
        %v1387 = vpow.pop %v1386
        %v1388 = vmul.f32 %v1306, 1.442695
        %v1389 = vpow.pop %v1388
        %v1390 = vmul.f32 %v1307, 1.442695
        %v1391 = vpow.pop %v1390
        %v1392 = vmul.f32 %v1308, 1.442695
        %v1393 = vpow.pop %v1392
        %v1394 = vmul.f32 %v1309, 1.442695
        %v1395 = vpow.pop %v1394
        %v1396 = vmul.f32 %v1310, 1.442695
        %v1397 = vpow.pop %v1396
        %v1398 = vmul.f32 %v1311, 1.442695
        %v1399 = vpow.pop %v1398
        %v1400 = vmul.f32 %v1312, 1.442695
        %v1401 = vpow.pop %v1400
        %v1402 = vmul.f32 %v1313, 1.442695
        %v1403 = vpow.pop %v1402
        %v1404 = vmul.f32 %v1314, 1.442695
        %v1405 = vpow.pop %v1404
        %v1406 = vmul.f32 %v1315, 1.442695
        %v1407 = vpow.pop %v1406
        %v1408 = vmul.f32 %v1316, 1.442695
        %v1409 = vpow.pop %v1408
        %v1410 = vmul.f32 %v1317, 1.442695
        %v1411 = vpow.pop %v1410
        %v1412 = vmul.f32 %v1318, 1.442695
        %v1413 = vpow.pop %v1412
        %v1414 = vmul.f32 %v1319, 1.442695
        %v1415 = vpow.pop %v1414
        %v1416 = vmul.f32 %v1320, 1.442695
        %v1417 = vpow.pop %v1416
        %v1418 = vmul.f32 %v1321, 1.442695
        %v1419 = vpow.pop %v1418
        %v1420 = vmul.f32 %v1322, 1.442695
        %v1421 = vpow.pop %v1420
        %v1422 = vmul.f32 %v1323, 1.442695
        %v1423 = vpow.pop %v1422
        %v1424 = vmul.f32 %v1324, 1.442695
        %v1425 = vpow.pop %v1424
        %v1426 = vmul.f32 %v1325, 1.442695
        %v1427 = vpow.pop %v1426
        %v1428 = vmul.f32 %v1326, 1.442695
        %v1429 = vpow.pop %v1428
        %v1430 = vmul.f32 %v1327, 1.442695
        %v1431 = vpow.pop %v1430
        %v1432 = vmul.f32 %v1328, 1.442695
        %v1433 = vpow.pop %v1432
        %v1434 = vmul.f32 %v1329, 1.442695
        %v1435 = vpow.pop %v1434
        %v1436 = vmul.f32 %v1330, 1.442695
        %v1437 = vpow.pop %v1436
        %v1438 = vmul.f32 %v1331, 1.442695
        %v1439 = vpow.pop %v1438
        %v1440 = vmul.f32 %v1332, 1.442695
        %v1441 = vpow.pop %v1440
        %v1442 = vmul.f32 %v1333, 1.442695
        %v1443 = vpow.pop %v1442
        %v1444 = vmul.f32 %v1334, 1.442695
        %v1445 = vpow.pop %v1444
        %v1446 = vmul.f32 %v1335, 1.442695
        %v1447 = vpow.pop %v1446
        %v1448 = vmul.f32 %v1336, 1.442695
        %v1449 = vpow.pop %v1448
        %v1450 = vmul.f32 %v1337, 1.442695
        %v1451 = vpow.pop %v1450
        %v1452 = vmul.f32 %v1338, 1.442695
        %v1453 = vpow.pop %v1452
        %v1454 = vmul.f32 %v1339, 1.442695
        %v1455 = vpow.pop %v1454
        %v1456 = vmul.f32 %v1340, 1.442695
        %v1457 = vpow.pop %v1456
        %v1458 = vmul.f32 %v1341, 1.442695
        %v1459 = vpow.pop %v1458
        %v1460 = vmul.f32 %v1342, 1.442695
        %v1461 = vpow.pop %v1460
        %v1462 = vmul.f32 %v1343, 1.442695
        %v1463 = vpow.pop %v1462
        %v1464 = vmul.f32 %v1344, 1.442695
        %v1465 = vpow.pop %v1464
        %v1466 = vmul.f32 %v1345, 1.442695
        %v1467 = vpow.pop %v1466
        %v1468 = vmul.f32 %v1346, 1.442695
        %v1469 = vpow.pop %v1468
        %v1470 = vmul.f32 %v1347, 1.442695
        %v1471 = vpow.pop %v1470
        %v1472 = vmul.f32 %v1348, 1.442695
        %v1473 = vpow.pop %v1472
        %v1474 = vmul.f32 %v1349, 1.442695
        %v1475 = vpow.pop %v1474
        %v1476 = vmul.f32 %v1350, 1.442695
        %v1477 = vpow.pop %v1476
        %v1478 = vmul.f32 %v1351, 1.442695
        %v1479 = vpow.pop %v1478
        %v1480 = vadd.f32 %v1353, 1.0
        %v1481 = vadd.f32 %v1355, 1.0
        %v1482 = vadd.f32 %v1357, 1.0
        %v1483 = vadd.f32 %v1359, 1.0
        %v1484 = vadd.f32 %v1361, 1.0
        %v1485 = vadd.f32 %v1363, 1.0
        %v1486 = vadd.f32 %v1365, 1.0
        %v1487 = vadd.f32 %v1367, 1.0
        %v1488 = vadd.f32 %v1369, 1.0
        %v1489 = vadd.f32 %v1371, 1.0
        %v1490 = vadd.f32 %v1373, 1.0
        %v1491 = vadd.f32 %v1375, 1.0
        %v1492 = vadd.f32 %v1377, 1.0
        %v1493 = vadd.f32 %v1379, 1.0
        %v1494 = vadd.f32 %v1381, 1.0
        %v1495 = vadd.f32 %v1383, 1.0
        %v1496 = vadd.f32 %v1385, 1.0
        %v1497 = vadd.f32 %v1387, 1.0
        %v1498 = vadd.f32 %v1389, 1.0
        %v1499 = vadd.f32 %v1391, 1.0
        %v1500 = vadd.f32 %v1393, 1.0
        %v1501 = vadd.f32 %v1395, 1.0
        %v1502 = vadd.f32 %v1397, 1.0
        %v1503 = vadd.f32 %v1399, 1.0
        %v1504 = vadd.f32 %v1401, 1.0
        %v1505 = vadd.f32 %v1403, 1.0
        %v1506 = vadd.f32 %v1405, 1.0
        %v1507 = vadd.f32 %v1407, 1.0
        %v1508 = vadd.f32 %v1409, 1.0
        %v1509 = vadd.f32 %v1411, 1.0
        %v1510 = vadd.f32 %v1413, 1.0
        %v1511 = vadd.f32 %v1415, 1.0
        %v1512 = vadd.f32 %v1417, 1.0
        %v1513 = vadd.f32 %v1419, 1.0
        %v1514 = vadd.f32 %v1421, 1.0
        %v1515 = vadd.f32 %v1423, 1.0
        %v1516 = vadd.f32 %v1425, 1.0
        %v1517 = vadd.f32 %v1427, 1.0
        %v1518 = vadd.f32 %v1429, 1.0
        %v1519 = vadd.f32 %v1431, 1.0
        %v1520 = vadd.f32 %v1433, 1.0
        %v1521 = vadd.f32 %v1435, 1.0
        %v1522 = vadd.f32 %v1437, 1.0
        %v1523 = vadd.f32 %v1439, 1.0
        %v1524 = vadd.f32 %v1441, 1.0
        %v1525 = vadd.f32 %v1443, 1.0
        %v1526 = vadd.f32 %v1445, 1.0
        %v1527 = vadd.f32 %v1447, 1.0
        %v1528 = vadd.f32 %v1449, 1.0
        %v1529 = vadd.f32 %v1451, 1.0
        %v1530 = vadd.f32 %v1453, 1.0
        %v1531 = vadd.f32 %v1455, 1.0
        %v1532 = vadd.f32 %v1457, 1.0
        %v1533 = vadd.f32 %v1459, 1.0
        %v1534 = vadd.f32 %v1461, 1.0
        %v1535 = vadd.f32 %v1463, 1.0
        %v1536 = vadd.f32 %v1465, 1.0
        %v1537 = vadd.f32 %v1467, 1.0
        %v1538 = vadd.f32 %v1469, 1.0
        %v1539 = vadd.f32 %v1471, 1.0
        %v1540 = vadd.f32 %v1473, 1.0
        %v1541 = vadd.f32 %v1475, 1.0
        %v1542 = vadd.f32 %v1477, 1.0
        %v1543 = vadd.f32 %v1479, 1.0
        %v1544 = vrcp.pop %v1480
        %v1545 = vmul.f32 1.0, %v1544
        %v1546 = vrcp.pop %v1481
        %v1547 = vmul.f32 1.0, %v1546
        %v1548 = vrcp.pop %v1482
        %v1549 = vmul.f32 1.0, %v1548
        %v1550 = vrcp.pop %v1483
        %v1551 = vmul.f32 1.0, %v1550
        %v1552 = vrcp.pop %v1484
        %v1553 = vmul.f32 1.0, %v1552
        %v1554 = vrcp.pop %v1485
        %v1555 = vmul.f32 1.0, %v1554
        %v1556 = vrcp.pop %v1486
        %v1557 = vmul.f32 1.0, %v1556
        %v1558 = vrcp.pop %v1487
        %v1559 = vmul.f32 1.0, %v1558
        %v1560 = vrcp.pop %v1488
        %v1561 = vmul.f32 1.0, %v1560
        %v1562 = vrcp.pop %v1489
        %v1563 = vmul.f32 1.0, %v1562
        %v1564 = vrcp.pop %v1490
        %v1565 = vmul.f32 1.0, %v1564
        %v1566 = vrcp.pop %v1491
        %v1567 = vmul.f32 1.0, %v1566
        %v1568 = vrcp.pop %v1492
        %v1569 = vmul.f32 1.0, %v1568
        %v1570 = vrcp.pop %v1493
        %v1571 = vmul.f32 1.0, %v1570
        %v1572 = vrcp.pop %v1494
        %v1573 = vmul.f32 1.0, %v1572
        %v1574 = vrcp.pop %v1495
        %v1575 = vmul.f32 1.0, %v1574
        %v1576 = vrcp.pop %v1496
        %v1577 = vmul.f32 1.0, %v1576
        %v1578 = vrcp.pop %v1497
        %v1579 = vmul.f32 1.0, %v1578
        %v1580 = vrcp.pop %v1498
        %v1581 = vmul.f32 1.0, %v1580
        %v1582 = vrcp.pop %v1499
        %v1583 = vmul.f32 1.0, %v1582
        %v1584 = vrcp.pop %v1500
        %v1585 = vmul.f32 1.0, %v1584
        %v1586 = vrcp.pop %v1501
        %v1587 = vmul.f32 1.0, %v1586
        %v1588 = vrcp.pop %v1502
        %v1589 = vmul.f32 1.0, %v1588
        %v1590 = vrcp.pop %v1503
        %v1591 = vmul.f32 1.0, %v1590
        %v1592 = vrcp.pop %v1504
        %v1593 = vmul.f32 1.0, %v1592
        %v1594 = vrcp.pop %v1505
        %v1595 = vmul.f32 1.0, %v1594
        %v1596 = vrcp.pop %v1506
        %v1597 = vmul.f32 1.0, %v1596
        %v1598 = vrcp.pop %v1507
        %v1599 = vmul.f32 1.0, %v1598
        %v1600 = vrcp.pop %v1508
        %v1601 = vmul.f32 1.0, %v1600
        %v1602 = vrcp.pop %v1509
        %v1603 = vmul.f32 1.0, %v1602
        %v1604 = vrcp.pop %v1510
        %v1605 = vmul.f32 1.0, %v1604
        %v1606 = vrcp.pop %v1511
        %v1607 = vmul.f32 1.0, %v1606
        %v1608 = vrcp.pop %v1512
        %v1609 = vmul.f32 1.0, %v1608
        %v1610 = vrcp.pop %v1513
        %v1611 = vmul.f32 1.0, %v1610
        %v1612 = vrcp.pop %v1514
        %v1613 = vmul.f32 1.0, %v1612
        %v1614 = vrcp.pop %v1515
        %v1615 = vmul.f32 1.0, %v1614
        %v1616 = vrcp.pop %v1516
        %v1617 = vmul.f32 1.0, %v1616
        %v1618 = vrcp.pop %v1517
        %v1619 = vmul.f32 1.0, %v1618
        %v1620 = vrcp.pop %v1518
        %v1621 = vmul.f32 1.0, %v1620
        %v1622 = vrcp.pop %v1519
        %v1623 = vmul.f32 1.0, %v1622
        %v1624 = vrcp.pop %v1520
        %v1625 = vmul.f32 1.0, %v1624
        %v1626 = vrcp.pop %v1521
        %v1627 = vmul.f32 1.0, %v1626
        %v1628 = vrcp.pop %v1522
        %v1629 = vmul.f32 1.0, %v1628
        %v1630 = vrcp.pop %v1523
        %v1631 = vmul.f32 1.0, %v1630
        %v1632 = vrcp.pop %v1524
        %v1633 = vmul.f32 1.0, %v1632
        %v1634 = vrcp.pop %v1525
        %v1635 = vmul.f32 1.0, %v1634
        %v1636 = vrcp.pop %v1526
        %v1637 = vmul.f32 1.0, %v1636
        %v1638 = vrcp.pop %v1527
        %v1639 = vmul.f32 1.0, %v1638
        %v1640 = vrcp.pop %v1528
        %v1641 = vmul.f32 1.0, %v1640
        %v1642 = vrcp.pop %v1529
        %v1643 = vmul.f32 1.0, %v1642
        %v1644 = vrcp.pop %v1530
        %v1645 = vmul.f32 1.0, %v1644
        %v1646 = vrcp.pop %v1531
        %v1647 = vmul.f32 1.0, %v1646
        %v1648 = vrcp.pop %v1532
        %v1649 = vmul.f32 1.0, %v1648
        %v1650 = vrcp.pop %v1533
        %v1651 = vmul.f32 1.0, %v1650
        %v1652 = vrcp.pop %v1534
        %v1653 = vmul.f32 1.0, %v1652
        %v1654 = vrcp.pop %v1535
        %v1655 = vmul.f32 1.0, %v1654
        %v1656 = vrcp.pop %v1536
        %v1657 = vmul.f32 1.0, %v1656
        %v1658 = vrcp.pop %v1537
        %v1659 = vmul.f32 1.0, %v1658
        %v1660 = vrcp.pop %v1538
        %v1661 = vmul.f32 1.0, %v1660
        %v1662 = vrcp.pop %v1539
        %v1663 = vmul.f32 1.0, %v1662
        %v1664 = vrcp.pop %v1540
        %v1665 = vmul.f32 1.0, %v1664
        %v1666 = vrcp.pop %v1541
        %v1667 = vmul.f32 1.0, %v1666
        %v1668 = vrcp.pop %v1542
        %v1669 = vmul.f32 1.0, %v1668
        %v1670 = vrcp.pop %v1543
        %v1671 = vmul.f32 1.0, %v1670
        %v1672 = vmul.f32 %v745, %v1545
        %v1673 = vmul.f32 %v747, %v1547
        %v1674 = vmul.f32 %v749, %v1549
        %v1675 = vmul.f32 %v751, %v1551
        %v1676 = vmul.f32 %v755, %v1553
        %v1677 = vmul.f32 %v757, %v1555
        %v1678 = vmul.f32 %v759, %v1557
        %v1679 = vmul.f32 %v761, %v1559
        %v1680 = vmul.f32 %v765, %v1561
        %v1681 = vmul.f32 %v767, %v1563
        %v1682 = vmul.f32 %v769, %v1565
        %v1683 = vmul.f32 %v771, %v1567
        %v1684 = vmul.f32 %v775, %v1569
        %v1685 = vmul.f32 %v777, %v1571
        %v1686 = vmul.f32 %v779, %v1573
        %v1687 = vmul.f32 %v781, %v1575
        %v1688 = vmul.f32 %v785, %v1577
        %v1689 = vmul.f32 %v787, %v1579
        %v1690 = vmul.f32 %v789, %v1581
        %v1691 = vmul.f32 %v791, %v1583
        %v1692 = vmul.f32 %v795, %v1585
        %v1693 = vmul.f32 %v797, %v1587
        %v1694 = vmul.f32 %v799, %v1589
        %v1695 = vmul.f32 %v801, %v1591
        %v1696 = vmul.f32 %v805, %v1593
        %v1697 = vmul.f32 %v807, %v1595
        %v1698 = vmul.f32 %v809, %v1597
        %v1699 = vmul.f32 %v811, %v1599
        %v1700 = vmul.f32 %v815, %v1601
        %v1701 = vmul.f32 %v817, %v1603
        %v1702 = vmul.f32 %v819, %v1605
        %v1703 = vmul.f32 %v821, %v1607
        %v1704 = vmul.f32 %v825, %v1609
        %v1705 = vmul.f32 %v827, %v1611
        %v1706 = vmul.f32 %v829, %v1613
        %v1707 = vmul.f32 %v831, %v1615
        %v1708 = vmul.f32 %v835, %v1617
        %v1709 = vmul.f32 %v837, %v1619
        %v1710 = vmul.f32 %v839, %v1621
        %v1711 = vmul.f32 %v841, %v1623
        %v1712 = vmul.f32 %v845, %v1625
        %v1713 = vmul.f32 %v847, %v1627
        %v1714 = vmul.f32 %v849, %v1629
        %v1715 = vmul.f32 %v851, %v1631
        %v1716 = vmul.f32 %v855, %v1633
        %v1717 = vmul.f32 %v857, %v1635
        %v1718 = vmul.f32 %v859, %v1637
        %v1719 = vmul.f32 %v861, %v1639
        %v1720 = vmul.f32 %v865, %v1641
        %v1721 = vmul.f32 %v867, %v1643
        %v1722 = vmul.f32 %v869, %v1645
        %v1723 = vmul.f32 %v871, %v1647
        %v1724 = vmul.f32 %v875, %v1649
        %v1725 = vmul.f32 %v877, %v1651
        %v1726 = vmul.f32 %v879, %v1653
        %v1727 = vmul.f32 %v881, %v1655
        %v1728 = vmul.f32 %v885, %v1657
        %v1729 = vmul.f32 %v887, %v1659
        %v1730 = vmul.f32 %v889, %v1661
        %v1731 = vmul.f32 %v891, %v1663
        %v1732 = vmul.f32 %v895, %v1665
        %v1733 = vmul.f32 %v897, %v1667
        %v1734 = vmul.f32 %v899, %v1669
        %v1735 = vmul.f32 %v901, %v1671
        %v1736 = vmul.f32 %v1672, %v1130
        %v1737 = vmul.f32 %v1673, %v1132
        %v1738 = vmul.f32 %v1674, %v1134
        %v1739 = vmul.f32 %v1675, %v1136
        %v1740 = vmul.f32 %v1676, %v1140
        %v1741 = vmul.f32 %v1677, %v1142
        %v1742 = vmul.f32 %v1678, %v1144
        %v1743 = vmul.f32 %v1679, %v1146
        %v1744 = vmul.f32 %v1680, %v1150
        %v1745 = vmul.f32 %v1681, %v1152
        %v1746 = vmul.f32 %v1682, %v1154
        %v1747 = vmul.f32 %v1683, %v1156
        %v1748 = vmul.f32 %v1684, %v1160
        %v1749 = vmul.f32 %v1685, %v1162
        %v1750 = vmul.f32 %v1686, %v1164
        %v1751 = vmul.f32 %v1687, %v1166
        %v1752 = vmul.f32 %v1688, %v1170
        %v1753 = vmul.f32 %v1689, %v1172
        %v1754 = vmul.f32 %v1690, %v1174
        %v1755 = vmul.f32 %v1691, %v1176
        %v1756 = vmul.f32 %v1692, %v1180
        %v1757 = vmul.f32 %v1693, %v1182
        %v1758 = vmul.f32 %v1694, %v1184
        %v1759 = vmul.f32 %v1695, %v1186
        %v1760 = vmul.f32 %v1696, %v1190
        %v1761 = vmul.f32 %v1697, %v1192
        %v1762 = vmul.f32 %v1698, %v1194
        %v1763 = vmul.f32 %v1699, %v1196
        %v1764 = vmul.f32 %v1700, %v1200
        %v1765 = vmul.f32 %v1701, %v1202
        %v1766 = vmul.f32 %v1702, %v1204
        %v1767 = vmul.f32 %v1703, %v1206
        %v1768 = vmul.f32 %v1704, %v1210
        %v1769 = vmul.f32 %v1705, %v1212
        %v1770 = vmul.f32 %v1706, %v1214
        %v1771 = vmul.f32 %v1707, %v1216
        %v1772 = vmul.f32 %v1708, %v1220
        %v1773 = vmul.f32 %v1709, %v1222
        %v1774 = vmul.f32 %v1710, %v1224
        %v1775 = vmul.f32 %v1711, %v1226
        %v1776 = vmul.f32 %v1712, %v1230
        %v1777 = vmul.f32 %v1713, %v1232
        %v1778 = vmul.f32 %v1714, %v1234
        %v1779 = vmul.f32 %v1715, %v1236
        %v1780 = vmul.f32 %v1716, %v1240
        %v1781 = vmul.f32 %v1717, %v1242
        %v1782 = vmul.f32 %v1718, %v1244
        %v1783 = vmul.f32 %v1719, %v1246
        %v1784 = vmul.f32 %v1720, %v1250
        %v1785 = vmul.f32 %v1721, %v1252
        %v1786 = vmul.f32 %v1722, %v1254
        %v1787 = vmul.f32 %v1723, %v1256
        %v1788 = vmul.f32 %v1724, %v1260
        %v1789 = vmul.f32 %v1725, %v1262
        %v1790 = vmul.f32 %v1726, %v1264
        %v1791 = vmul.f32 %v1727, %v1266
        %v1792 = vmul.f32 %v1728, %v1270
        %v1793 = vmul.f32 %v1729, %v1272
        %v1794 = vmul.f32 %v1730, %v1274
        %v1795 = vmul.f32 %v1731, %v1276
        %v1796 = vmul.f32 %v1732, %v1280
        %v1797 = vmul.f32 %v1733, %v1282
        %v1798 = vmul.f32 %v1734, %v1284
        %v1799 = vmul.f32 %v1735, %v1286
        %v1800 = vpack.c.bf16 %v1738, %v1736
        %v1801 = vpack.c.bf16 %v1739, %v1737
        %v1802 = vpack.c.bf16 %v1742, %v1740
        %v1803 = vpack.c.bf16 %v1743, %v1741
        %v1804 = vpack.c.bf16 %v1746, %v1744
        %v1805 = vpack.c.bf16 %v1747, %v1745
        %v1806 = vpack.c.bf16 %v1750, %v1748
        %v1807 = vpack.c.bf16 %v1751, %v1749
        %v1808 = vpack.c.bf16 %v1754, %v1752
        %v1809 = vpack.c.bf16 %v1755, %v1753
        %v1810 = vpack.c.bf16 %v1758, %v1756
        %v1811 = vpack.c.bf16 %v1759, %v1757
        %v1812 = vpack.c.bf16 %v1762, %v1760
        %v1813 = vpack.c.bf16 %v1763, %v1761
        %v1814 = vpack.c.bf16 %v1766, %v1764
        %v1815 = vpack.c.bf16 %v1767, %v1765
        %v1816 = vpack.c.bf16 %v1770, %v1768
        %v1817 = vpack.c.bf16 %v1771, %v1769
        %v1818 = vpack.c.bf16 %v1774, %v1772
        %v1819 = vpack.c.bf16 %v1775, %v1773
        %v1820 = vpack.c.bf16 %v1778, %v1776
        %v1821 = vpack.c.bf16 %v1779, %v1777
        %v1822 = vpack.c.bf16 %v1782, %v1780
        %v1823 = vpack.c.bf16 %v1783, %v1781
        %v1824 = vpack.c.bf16 %v1786, %v1784
        %v1825 = vpack.c.bf16 %v1787, %v1785
        %v1826 = vpack.c.bf16 %v1790, %v1788
        %v1827 = vpack.c.bf16 %v1791, %v1789
        %v1828 = vpack.c.bf16 %v1794, %v1792
        %v1829 = vpack.c.bf16 %v1795, %v1793
        %v1830 = vpack.c.bf16 %v1798, %v1796
        %v1831 = vpack.c.bf16 %v1799, %v1797
        %v1832 = vld [vmem:[%s293] sm:$0xff]
        %v1833 = vld [vmem:[%s293 + $0x8] sm:$0xff]
        %v1834 = vld [vmem:[%s293 + $0x10] sm:$0xff]
        %v1835 = vld [vmem:[%s293 + $0x18] sm:$0xff]
        %v1836 = vld [vmem:[%s293 + $0x20] sm:$0xff]
        %v1837 = vld [vmem:[%s293 + $0x28] sm:$0xff]
        %v1838 = vld [vmem:[%s293 + $0x30] sm:$0xff]
        %v1839 = vld [vmem:[%s293 + $0x38] sm:$0xff]
        %v1840 = vld [vmem:[%s293 + $0x40] sm:$0xff]
        %v1841 = vld [vmem:[%s293 + $0x48] sm:$0xff]
        %v1842 = vld [vmem:[%s293 + $0x50] sm:$0xff]
        %v1843 = vld [vmem:[%s293 + $0x58] sm:$0xff]
        %v1844 = vld [vmem:[%s293 + $0x60] sm:$0xff]
        %v1845 = vld [vmem:[%s293 + $0x68] sm:$0xff]
        %v1846 = vld [vmem:[%s293 + $0x70] sm:$0xff]
        %v1847 = vld [vmem:[%s293 + $0x78] sm:$0xff]
        %v1848 = vld [vmem:[%s293 + $0x80] sm:$0xff]
        %v1849 = vld [vmem:[%s293 + $0x88] sm:$0xff]
        %v1850 = vld [vmem:[%s293 + $0x90] sm:$0xff]
        %v1851 = vld [vmem:[%s293 + $0x98] sm:$0xff]
        %v1852 = vld [vmem:[%s293 + $0xa0] sm:$0xff]
        %v1853 = vld [vmem:[%s293 + $0xa8] sm:$0xff]
        %v1854 = vld [vmem:[%s293 + $0xb0] sm:$0xff]
        %v1855 = vld [vmem:[%s293 + $0xb8] sm:$0xff]
        %v1856 = vld [vmem:[%s293 + $0xc0] sm:$0xff]
        %v1857 = vld [vmem:[%s293 + $0xc8] sm:$0xff]
        %v1858 = vld [vmem:[%s293 + $0xd0] sm:$0xff]
        %v1859 = vld [vmem:[%s293 + $0xd8] sm:$0xff]
        %v1860 = vld [vmem:[%s293 + $0xe0] sm:$0xff]
        %v1861 = vld [vmem:[%s293 + $0xe8] sm:$0xff]
        %v1862 = vld [vmem:[%s293 + $0xf0] sm:$0xff]
        %v1863 = vld [vmem:[%s293 + $0xf8] sm:$0xff]
        %v1896 = vunpack.c.l.b16 %v1832
        %v1897 = vunpack.c.h.b16 %v1832
        %v1898 = vunpack.c.l.b16 %v1833
        %v1899 = vunpack.c.h.b16 %v1833
        %v1900 = vunpack.c.l.b16 %v1834
        %v1901 = vunpack.c.h.b16 %v1834
        %v1902 = vunpack.c.l.b16 %v1835
        %v1903 = vunpack.c.h.b16 %v1835
        %v1904 = vunpack.c.l.b16 %v1836
        %v1905 = vunpack.c.h.b16 %v1836
        %v1906 = vunpack.c.l.b16 %v1837
        %v1907 = vunpack.c.h.b16 %v1837
        %v1908 = vunpack.c.l.b16 %v1838
        %v1909 = vunpack.c.h.b16 %v1838
        %v1910 = vunpack.c.l.b16 %v1839
        %v1911 = vunpack.c.h.b16 %v1839
        %v1912 = vunpack.c.l.b16 %v1840
        %v1913 = vunpack.c.h.b16 %v1840
        %v1914 = vunpack.c.l.b16 %v1841
        %v1915 = vunpack.c.h.b16 %v1841
        %v1916 = vunpack.c.l.b16 %v1842
        %v1917 = vunpack.c.h.b16 %v1842
        %v1918 = vunpack.c.l.b16 %v1843
        %v1919 = vunpack.c.h.b16 %v1843
        %v1920 = vunpack.c.l.b16 %v1844
        %v1921 = vunpack.c.h.b16 %v1844
        %v1922 = vunpack.c.l.b16 %v1845
        %v1923 = vunpack.c.h.b16 %v1845
        %v1924 = vunpack.c.l.b16 %v1846
        %v1925 = vunpack.c.h.b16 %v1846
        %v1926 = vunpack.c.l.b16 %v1847
        %v1927 = vunpack.c.h.b16 %v1847
        %v1928 = vunpack.c.l.b16 %v1848
        %v1929 = vunpack.c.h.b16 %v1848
        %v1930 = vunpack.c.l.b16 %v1849
        %v1931 = vunpack.c.h.b16 %v1849
        %v1932 = vunpack.c.l.b16 %v1850
        %v1933 = vunpack.c.h.b16 %v1850
        %v1934 = vunpack.c.l.b16 %v1851
        %v1935 = vunpack.c.h.b16 %v1851
        %v1936 = vunpack.c.l.b16 %v1852
        %v1937 = vunpack.c.h.b16 %v1852
        %v1938 = vunpack.c.l.b16 %v1853
        %v1939 = vunpack.c.h.b16 %v1853
        %v1940 = vunpack.c.l.b16 %v1854
        %v1941 = vunpack.c.h.b16 %v1854
        %v1942 = vunpack.c.l.b16 %v1855
        %v1943 = vunpack.c.h.b16 %v1855
        %v1944 = vunpack.c.l.b16 %v1856
        %v1945 = vunpack.c.h.b16 %v1856
        %v1946 = vunpack.c.l.b16 %v1857
        %v1947 = vunpack.c.h.b16 %v1857
        %v1948 = vunpack.c.l.b16 %v1858
        %v1949 = vunpack.c.h.b16 %v1858
        %v1950 = vunpack.c.l.b16 %v1859
        %v1951 = vunpack.c.h.b16 %v1859
        %v1952 = vunpack.c.l.b16 %v1860
        %v1953 = vunpack.c.h.b16 %v1860
        %v1954 = vunpack.c.l.b16 %v1861
        %v1955 = vunpack.c.h.b16 %v1861
        %v1956 = vunpack.c.l.b16 %v1862
        %v1957 = vunpack.c.h.b16 %v1862
        %v1958 = vunpack.c.l.b16 %v1863
        %v1959 = vunpack.c.h.b16 %v1863
        %v1960 = vpack.c.b16 %v1898, %v1896
        %v1961 = vpack.c.b16 %v1899, %v1897
        %v1962 = vpack.c.b16 %v1902, %v1900
        %v1963 = vpack.c.b16 %v1903, %v1901
        %v1964 = vpack.c.b16 %v1906, %v1904
        %v1965 = vpack.c.b16 %v1907, %v1905
        %v1966 = vpack.c.b16 %v1910, %v1908
        %v1967 = vpack.c.b16 %v1911, %v1909
        %v1968 = vpack.c.b16 %v1914, %v1912
        %v1969 = vpack.c.b16 %v1915, %v1913
        %v1970 = vpack.c.b16 %v1918, %v1916
        %v1971 = vpack.c.b16 %v1919, %v1917
        %v1972 = vpack.c.b16 %v1922, %v1920
        %v1973 = vpack.c.b16 %v1923, %v1921
        %v1974 = vpack.c.b16 %v1926, %v1924
        %v1975 = vpack.c.b16 %v1927, %v1925
        %v1976 = vpack.c.b16 %v1930, %v1928
        %v1977 = vpack.c.b16 %v1931, %v1929
        %v1978 = vpack.c.b16 %v1934, %v1932
        %v1979 = vpack.c.b16 %v1935, %v1933
        %v1980 = vpack.c.b16 %v1938, %v1936
        %v1981 = vpack.c.b16 %v1939, %v1937
        %v1982 = vpack.c.b16 %v1942, %v1940
        %v1983 = vpack.c.b16 %v1943, %v1941
        %v1984 = vpack.c.b16 %v1946, %v1944
        %v1985 = vpack.c.b16 %v1947, %v1945
        %v1986 = vpack.c.b16 %v1950, %v1948
        %v1987 = vpack.c.b16 %v1951, %v1949
        %v1988 = vpack.c.b16 %v1954, %v1952
        %v1989 = vpack.c.b16 %v1955, %v1953
        %v1990 = vpack.c.b16 %v1958, %v1956
        %v1991 = vpack.c.b16 %v1959, %v1957
        %2024 = vmatprep.subr.bf16.mxu0 %v1975
        %2025 = vmatpush1.bf16.msra.mxu0 %v1974
        %2026 = vmatprep.subr.bf16.mxu0 %v1973
        %2027 = vmatpush1.bf16.msra.mxu0 %v1972
        %2028 = vmatprep.subr.bf16.mxu0 %v1971
        %2029 = vmatpush1.bf16.msra.mxu0 %v1970
        %2030 = vmatprep.subr.bf16.mxu0 %v1969
        %2031 = vmatpush1.bf16.msra.mxu0 %v1968
        %2032 = vmatprep.subr.bf16.mxu0 %v1967
        %2033 = vmatpush1.bf16.msra.mxu0 %v1966
        %2034 = vmatprep.subr.bf16.mxu0 %v1965
        %2035 = vmatpush1.bf16.msra.mxu0 %v1964
        %2036 = vmatprep.subr.bf16.mxu0 %v1963
        %2037 = vmatpush1.bf16.msra.mxu0 %v1962
        %2038 = vmatprep.subr.bf16.mxu0 %v1961
        %2039 = vmatpush1.bf16.msra.mxu0 %v1960
        %2040 = vmatprep.subr.bf16.mxu0 %v1991
        %2041 = vmatpush2.bf16.msra.mxu0 %v1990
        %2042 = vmatprep.subr.bf16.mxu0 %v1989
        %2043 = vmatpush2.bf16.msra.mxu0 %v1988
        %2044 = vmatprep.subr.bf16.mxu0 %v1987
        %2045 = vmatpush2.bf16.msra.mxu0 %v1986
        %2046 = vmatprep.subr.bf16.mxu0 %v1985
        %2047 = vmatpush2.bf16.msra.mxu0 %v1984
        %2048 = vmatprep.subr.bf16.mxu0 %v1983
        %2049 = vmatpush2.bf16.msra.mxu0 %v1982
        %2050 = vmatprep.subr.bf16.mxu0 %v1981
        %2051 = vmatpush2.bf16.msra.mxu0 %v1980
        %2052 = vmatprep.subr.bf16.mxu0 %v1979
        %2053 = vmatpush2.bf16.msra.mxu0 %v1978
        %2054 = vmatprep.subr.bf16.mxu0 %v1977
        %2055 = vmatpush2.bf16.msra.mxu0 %v1976
        %2056 = vmatprep.mubr.bf16.mxu0 %v1801
        %2057 = vmatmul.mubr.bf16.gmra.mxu0 %v1800
        %v2058 = vpop.f32.mrf.mxu0
        %v2059 = vadd.f32 0.0, %v2058
        %v2060 = vpop.f32.mrf.mxu0
        %v2061 = vadd.f32 0.0, %v2060
        %v2062 = vpop.f32.mrf.mxu0
        %v2063 = vadd.f32 0.0, %v2062
        %v2064 = vpop.f32.mrf.mxu0
        %v2065 = vadd.f32 0.0, %v2064
        %2066 = vmatprep.mubr.bf16.mxu0 %v1803
        %2067 = vmatmul.mubr.bf16.gmra.mxu0 %v1802
        %v2068 = vpop.f32.mrf.mxu0
        %v2069 = vadd.f32 0.0, %v2068
        %v2070 = vpop.f32.mrf.mxu0
        %v2071 = vadd.f32 0.0, %v2070
        %v2072 = vpop.f32.mrf.mxu0
        %v2073 = vadd.f32 0.0, %v2072
        %v2074 = vpop.f32.mrf.mxu0
        %v2075 = vadd.f32 0.0, %v2074
        %2076 = vmatprep.mubr.bf16.mxu0 %v1805
        %2077 = vmatmul.mubr.bf16.gmra.mxu0 %v1804
        %v2078 = vpop.f32.mrf.mxu0
        %v2079 = vadd.f32 0.0, %v2078
        %v2080 = vpop.f32.mrf.mxu0
        %v2081 = vadd.f32 0.0, %v2080
        %v2082 = vpop.f32.mrf.mxu0
        %v2083 = vadd.f32 0.0, %v2082
        %v2084 = vpop.f32.mrf.mxu0
        %v2085 = vadd.f32 0.0, %v2084
        %2086 = vmatprep.mubr.bf16.mxu0 %v1807
        %2087 = vmatmul.mubr.bf16.gmra.mxu0 %v1806
        %v2088 = vpop.f32.mrf.mxu0
        %v2089 = vadd.f32 0.0, %v2088
        %v2090 = vpop.f32.mrf.mxu0
        %v2091 = vadd.f32 0.0, %v2090
        %v2092 = vpop.f32.mrf.mxu0
        %v2093 = vadd.f32 0.0, %v2092
        %v2094 = vpop.f32.mrf.mxu0
        %v2095 = vadd.f32 0.0, %v2094
        %2096 = vmatprep.mubr.bf16.mxu0 %v1809
        %2097 = vmatmul.mubr.bf16.gmra.mxu0 %v1808
        %v2098 = vpop.f32.mrf.mxu0
        %v2099 = vadd.f32 0.0, %v2098
        %v2100 = vpop.f32.mrf.mxu0
        %v2101 = vadd.f32 0.0, %v2100
        %v2102 = vpop.f32.mrf.mxu0
        %v2103 = vadd.f32 0.0, %v2102
        %v2104 = vpop.f32.mrf.mxu0
        %v2105 = vadd.f32 0.0, %v2104
        %2106 = vmatprep.mubr.bf16.mxu0 %v1811
        %2107 = vmatmul.mubr.bf16.gmra.mxu0 %v1810
        %v2108 = vpop.f32.mrf.mxu0
        %v2109 = vadd.f32 0.0, %v2108
        %v2110 = vpop.f32.mrf.mxu0
        %v2111 = vadd.f32 0.0, %v2110
        %v2112 = vpop.f32.mrf.mxu0
        %v2113 = vadd.f32 0.0, %v2112
        %v2114 = vpop.f32.mrf.mxu0
        %v2115 = vadd.f32 0.0, %v2114
        %2116 = vmatprep.mubr.bf16.mxu0 %v1813
        %2117 = vmatmul.mubr.bf16.gmra.mxu0 %v1812
        %v2118 = vpop.f32.mrf.mxu0
        %v2119 = vadd.f32 0.0, %v2118
        %v2120 = vpop.f32.mrf.mxu0
        %v2121 = vadd.f32 0.0, %v2120
        %v2122 = vpop.f32.mrf.mxu0
        %v2123 = vadd.f32 0.0, %v2122
        %v2124 = vpop.f32.mrf.mxu0
        %v2125 = vadd.f32 0.0, %v2124
        %2126 = vmatprep.mubr.bf16.mxu0 %v1815
        %2127 = vmatmul.mubr.bf16.gmra.mxu0 %v1814
        %v2128 = vpop.f32.mrf.mxu0
        %v2129 = vadd.f32 0.0, %v2128
        %v2130 = vpop.f32.mrf.mxu0
        %v2131 = vadd.f32 0.0, %v2130
        %v2132 = vpop.f32.mrf.mxu0
        %v2133 = vadd.f32 0.0, %v2132
        %v2134 = vpop.f32.mrf.mxu0
        %v2135 = vadd.f32 0.0, %v2134
        %2136 = vmatprep.mubr.bf16.mxu0 %v1817
        %2137 = vmatmul.mubr.bf16.gmra.mxu0 %v1816
        %v2138 = vpop.f32.mrf.mxu0
        %v2139 = vadd.f32 0.0, %v2138
        %v2140 = vpop.f32.mrf.mxu0
        %v2141 = vadd.f32 0.0, %v2140
        %v2142 = vpop.f32.mrf.mxu0
        %v2143 = vadd.f32 0.0, %v2142
        %v2144 = vpop.f32.mrf.mxu0
        %v2145 = vadd.f32 0.0, %v2144
        %2146 = vmatprep.mubr.bf16.mxu0 %v1819
        %2147 = vmatmul.mubr.bf16.gmra.mxu0 %v1818
        %v2148 = vpop.f32.mrf.mxu0
        %v2149 = vadd.f32 0.0, %v2148
        %v2150 = vpop.f32.mrf.mxu0
        %v2151 = vadd.f32 0.0, %v2150
        %v2152 = vpop.f32.mrf.mxu0
        %v2153 = vadd.f32 0.0, %v2152
        %v2154 = vpop.f32.mrf.mxu0
        %v2155 = vadd.f32 0.0, %v2154
        %2156 = vmatprep.mubr.bf16.mxu0 %v1821
        %2157 = vmatmul.mubr.bf16.gmra.mxu0 %v1820
        %v2158 = vpop.f32.mrf.mxu0
        %v2159 = vadd.f32 0.0, %v2158
        %v2160 = vpop.f32.mrf.mxu0
        %v2161 = vadd.f32 0.0, %v2160
        %v2162 = vpop.f32.mrf.mxu0
        %v2163 = vadd.f32 0.0, %v2162
        %v2164 = vpop.f32.mrf.mxu0
        %v2165 = vadd.f32 0.0, %v2164
        %2166 = vmatprep.mubr.bf16.mxu0 %v1823
        %2167 = vmatmul.mubr.bf16.gmra.mxu0 %v1822
        %v2168 = vpop.f32.mrf.mxu0
        %v2169 = vadd.f32 0.0, %v2168
        %v2170 = vpop.f32.mrf.mxu0
        %v2171 = vadd.f32 0.0, %v2170
        %v2172 = vpop.f32.mrf.mxu0
        %v2173 = vadd.f32 0.0, %v2172
        %v2174 = vpop.f32.mrf.mxu0
        %v2175 = vadd.f32 0.0, %v2174
        %2176 = vmatprep.mubr.bf16.mxu0 %v1825
        %2177 = vmatmul.mubr.bf16.gmra.mxu0 %v1824
        %v2178 = vpop.f32.mrf.mxu0
        %v2179 = vadd.f32 0.0, %v2178
        %v2180 = vpop.f32.mrf.mxu0
        %v2181 = vadd.f32 0.0, %v2180
        %v2182 = vpop.f32.mrf.mxu0
        %v2183 = vadd.f32 0.0, %v2182
        %v2184 = vpop.f32.mrf.mxu0
        %v2185 = vadd.f32 0.0, %v2184
        %2186 = vmatprep.mubr.bf16.mxu0 %v1827
        %2187 = vmatmul.mubr.bf16.gmra.mxu0 %v1826
        %v2188 = vpop.f32.mrf.mxu0
        %v2189 = vadd.f32 0.0, %v2188
        %v2190 = vpop.f32.mrf.mxu0
        %v2191 = vadd.f32 0.0, %v2190
        %v2192 = vpop.f32.mrf.mxu0
        %v2193 = vadd.f32 0.0, %v2192
        %v2194 = vpop.f32.mrf.mxu0
        %v2195 = vadd.f32 0.0, %v2194
        %2196 = vmatprep.mubr.bf16.mxu0 %v1829
        %2197 = vmatmul.mubr.bf16.gmra.mxu0 %v1828
        %v2198 = vpop.f32.mrf.mxu0
        %v2199 = vadd.f32 0.0, %v2198
        %v2200 = vpop.f32.mrf.mxu0
        %v2201 = vadd.f32 0.0, %v2200
        %v2202 = vpop.f32.mrf.mxu0
        %v2203 = vadd.f32 0.0, %v2202
        %v2204 = vpop.f32.mrf.mxu0
        %v2205 = vadd.f32 0.0, %v2204
        %2206 = vmatprep.mubr.bf16.mxu0 %v1831
        %2207 = vmatmul.mubr.bf16.gmra.mxu0 %v1830
        %v2208 = vpop.f32.mrf.mxu0
        %v2209 = vadd.f32 0.0, %v2208
        %v2210 = vpop.f32.mrf.mxu0
        %v2211 = vadd.f32 0.0, %v2210
        %v2212 = vpop.f32.mrf.mxu0
        %v2213 = vadd.f32 0.0, %v2212
        %v2214 = vpop.f32.mrf.mxu0
        %v2215 = vadd.f32 0.0, %v2214
        %2216 = vdwg.mxu0
        %p2217 = scmp.eq.s32.totalorder %s28, 0
        // Predicated region
        $region53: #{tpu_custom_call.1} parent=35 // pred_check
          %p2218 = pneg %p2217
        $region54: #{tpu_custom_call.1} parent=35 // pred_check_branch
          %2220 = sbr.rel (%p2218) target = $region56
        $region55: #{tpu_custom_call.1} parent=35 // pred_region
          %2221 = vst [vmem:[#allocation2] sm:$0xff] %v2059
          %2222 = vst [vmem:[#allocation2 + $0x8] sm:$0xff] %v2061
          %2223 = vst [vmem:[#allocation2 + $0x10] sm:$0xff] %v2063
          %2224 = vst [vmem:[#allocation2 + $0x18] sm:$0xff] %v2065
          %2225 = vst [vmem:[#allocation2 + $0x20] sm:$0xff] %v2069
          %2226 = vst [vmem:[#allocation2 + $0x28] sm:$0xff] %v2071
          %2227 = vst [vmem:[#allocation2 + $0x30] sm:$0xff] %v2073
          %2228 = vst [vmem:[#allocation2 + $0x38] sm:$0xff] %v2075
          %2229 = vst [vmem:[#allocation2 + $0x40] sm:$0xff] %v2079
          %2230 = vst [vmem:[#allocation2 + $0x48] sm:$0xff] %v2081
          %2231 = vst [vmem:[#allocation2 + $0x50] sm:$0xff] %v2083
          %2232 = vst [vmem:[#allocation2 + $0x58] sm:$0xff] %v2085
          %2233 = vst [vmem:[#allocation2 + $0x60] sm:$0xff] %v2089
          %2234 = vst [vmem:[#allocation2 + $0x68] sm:$0xff] %v2091
          %2235 = vst [vmem:[#allocation2 + $0x70] sm:$0xff] %v2093
          %2236 = vst [vmem:[#allocation2 + $0x78] sm:$0xff] %v2095
          %2237 = vst [vmem:[#allocation2 + $0x80] sm:$0xff] %v2099
          %2238 = vst [vmem:[#allocation2 + $0x88] sm:$0xff] %v2101
          %2239 = vst [vmem:[#allocation2 + $0x90] sm:$0xff] %v2103
          %2240 = vst [vmem:[#allocation2 + $0x98] sm:$0xff] %v2105
          %2241 = vst [vmem:[#allocation2 + $0xa0] sm:$0xff] %v2109
          %2242 = vst [vmem:[#allocation2 + $0xa8] sm:$0xff] %v2111
          %2243 = vst [vmem:[#allocation2 + $0xb0] sm:$0xff] %v2113
          %2244 = vst [vmem:[#allocation2 + $0xb8] sm:$0xff] %v2115
          %2245 = vst [vmem:[#allocation2 + $0xc0] sm:$0xff] %v2119
          %2246 = vst [vmem:[#allocation2 + $0xc8] sm:$0xff] %v2121
          %2247 = vst [vmem:[#allocation2 + $0xd0] sm:$0xff] %v2123
          %2248 = vst [vmem:[#allocation2 + $0xd8] sm:$0xff] %v2125
          %2249 = vst [vmem:[#allocation2 + $0xe0] sm:$0xff] %v2129
          %2250 = vst [vmem:[#allocation2 + $0xe8] sm:$0xff] %v2131
          %2251 = vst [vmem:[#allocation2 + $0xf0] sm:$0xff] %v2133
          %2252 = vst [vmem:[#allocation2 + $0xf8] sm:$0xff] %v2135
          %2253 = vst [vmem:[#allocation2 + $0x100] sm:$0xff] %v2139
          %2254 = vst [vmem:[#allocation2 + $0x108] sm:$0xff] %v2141
          %2255 = vst [vmem:[#allocation2 + $0x110] sm:$0xff] %v2143
          %2256 = vst [vmem:[#allocation2 + $0x118] sm:$0xff] %v2145
          %2257 = vst [vmem:[#allocation2 + $0x120] sm:$0xff] %v2149
          %2258 = vst [vmem:[#allocation2 + $0x128] sm:$0xff] %v2151
          %2259 = vst [vmem:[#allocation2 + $0x130] sm:$0xff] %v2153
          %2260 = vst [vmem:[#allocation2 + $0x138] sm:$0xff] %v2155
          %2261 = vst [vmem:[#allocation2 + $0x140] sm:$0xff] %v2159
          %2262 = vst [vmem:[#allocation2 + $0x148] sm:$0xff] %v2161
          %2263 = vst [vmem:[#allocation2 + $0x150] sm:$0xff] %v2163
          %2264 = vst [vmem:[#allocation2 + $0x158] sm:$0xff] %v2165
          %2265 = vst [vmem:[#allocation2 + $0x160] sm:$0xff] %v2169
          %2266 = vst [vmem:[#allocation2 + $0x168] sm:$0xff] %v2171
          %2267 = vst [vmem:[#allocation2 + $0x170] sm:$0xff] %v2173
          %2268 = vst [vmem:[#allocation2 + $0x178] sm:$0xff] %v2175
          %2269 = vst [vmem:[#allocation2 + $0x180] sm:$0xff] %v2179
          %2270 = vst [vmem:[#allocation2 + $0x188] sm:$0xff] %v2181
          %2271 = vst [vmem:[#allocation2 + $0x190] sm:$0xff] %v2183
          %2272 = vst [vmem:[#allocation2 + $0x198] sm:$0xff] %v2185
          %2273 = vst [vmem:[#allocation2 + $0x1a0] sm:$0xff] %v2189
          %2274 = vst [vmem:[#allocation2 + $0x1a8] sm:$0xff] %v2191
          %2275 = vst [vmem:[#allocation2 + $0x1b0] sm:$0xff] %v2193
          %2276 = vst [vmem:[#allocation2 + $0x1b8] sm:$0xff] %v2195
          %2277 = vst [vmem:[#allocation2 + $0x1c0] sm:$0xff] %v2199
          %2278 = vst [vmem:[#allocation2 + $0x1c8] sm:$0xff] %v2201
          %2279 = vst [vmem:[#allocation2 + $0x1d0] sm:$0xff] %v2203
          %2280 = vst [vmem:[#allocation2 + $0x1d8] sm:$0xff] %v2205
          %2281 = vst [vmem:[#allocation2 + $0x1e0] sm:$0xff] %v2209
          %2282 = vst [vmem:[#allocation2 + $0x1e8] sm:$0xff] %v2211
          %2283 = vst [vmem:[#allocation2 + $0x1f0] sm:$0xff] %v2213
          %2284 = vst [vmem:[#allocation2 + $0x1f8] sm:$0xff] %v2215
        $region56: #{tpu_custom_call.1} parent=35 // pred_fallthru
          _
        %p2285 = scmp.gt.s32.totalorder %s28, 0
        // Predicated region
        $region57: #{tpu_custom_call.1} parent=35 // pred_check
          %p2286 = pneg %p2285
        $region58: #{tpu_custom_call.1} parent=35 // pred_check_branch
          %2288 = sbr.rel (%p2286) target = $region60
        $region59: #{tpu_custom_call.1} parent=35 // pred_region
          %v2289 = vld [vmem:[#allocation2] sm:$0xff]
          %v2290 = vld [vmem:[#allocation2 + $0x8] sm:$0xff]
          %v2291 = vld [vmem:[#allocation2 + $0x10] sm:$0xff]
          %v2292 = vld [vmem:[#allocation2 + $0x18] sm:$0xff]
          %v2293 = vld [vmem:[#allocation2 + $0x20] sm:$0xff]
          %v2294 = vld [vmem:[#allocation2 + $0x28] sm:$0xff]
          %v2295 = vld [vmem:[#allocation2 + $0x30] sm:$0xff]
          %v2296 = vld [vmem:[#allocation2 + $0x38] sm:$0xff]
          %v2297 = vld [vmem:[#allocation2 + $0x40] sm:$0xff]
          %v2298 = vld [vmem:[#allocation2 + $0x48] sm:$0xff]
          %v2299 = vld [vmem:[#allocation2 + $0x50] sm:$0xff]
          %v2300 = vld [vmem:[#allocation2 + $0x58] sm:$0xff]
          %v2301 = vld [vmem:[#allocation2 + $0x60] sm:$0xff]
          %v2302 = vld [vmem:[#allocation2 + $0x68] sm:$0xff]
          %v2303 = vld [vmem:[#allocation2 + $0x70] sm:$0xff]
          %v2304 = vld [vmem:[#allocation2 + $0x78] sm:$0xff]
          %v2305 = vld [vmem:[#allocation2 + $0x80] sm:$0xff]
          %v2306 = vld [vmem:[#allocation2 + $0x88] sm:$0xff]
          %v2307 = vld [vmem:[#allocation2 + $0x90] sm:$0xff]
          %v2308 = vld [vmem:[#allocation2 + $0x98] sm:$0xff]
          %v2309 = vld [vmem:[#allocation2 + $0xa0] sm:$0xff]
          %v2310 = vld [vmem:[#allocation2 + $0xa8] sm:$0xff]
          %v2311 = vld [vmem:[#allocation2 + $0xb0] sm:$0xff]
          %v2312 = vld [vmem:[#allocation2 + $0xb8] sm:$0xff]
          %v2313 = vld [vmem:[#allocation2 + $0xc0] sm:$0xff]
          %v2314 = vld [vmem:[#allocation2 + $0xc8] sm:$0xff]
          %v2315 = vld [vmem:[#allocation2 + $0xd0] sm:$0xff]
          %v2316 = vld [vmem:[#allocation2 + $0xd8] sm:$0xff]
          %v2317 = vld [vmem:[#allocation2 + $0xe0] sm:$0xff]
          %v2318 = vld [vmem:[#allocation2 + $0xe8] sm:$0xff]
          %v2319 = vld [vmem:[#allocation2 + $0xf0] sm:$0xff]
          %v2320 = vld [vmem:[#allocation2 + $0xf8] sm:$0xff]
          %v2321 = vld [vmem:[#allocation2 + $0x100] sm:$0xff]
          %v2322 = vld [vmem:[#allocation2 + $0x108] sm:$0xff]
          %v2323 = vld [vmem:[#allocation2 + $0x110] sm:$0xff]
          %v2324 = vld [vmem:[#allocation2 + $0x118] sm:$0xff]
          %v2325 = vld [vmem:[#allocation2 + $0x120] sm:$0xff]
          %v2326 = vld [vmem:[#allocation2 + $0x128] sm:$0xff]
          %v2327 = vld [vmem:[#allocation2 + $0x130] sm:$0xff]
          %v2328 = vld [vmem:[#allocation2 + $0x138] sm:$0xff]
          %v2329 = vld [vmem:[#allocation2 + $0x140] sm:$0xff]
          %v2330 = vld [vmem:[#allocation2 + $0x148] sm:$0xff]
          %v2331 = vld [vmem:[#allocation2 + $0x150] sm:$0xff]
          %v2332 = vld [vmem:[#allocation2 + $0x158] sm:$0xff]
          %v2333 = vld [vmem:[#allocation2 + $0x160] sm:$0xff]
          %v2334 = vld [vmem:[#allocation2 + $0x168] sm:$0xff]
          %v2335 = vld [vmem:[#allocation2 + $0x170] sm:$0xff]
          %v2336 = vld [vmem:[#allocation2 + $0x178] sm:$0xff]
          %v2337 = vld [vmem:[#allocation2 + $0x180] sm:$0xff]
          %v2338 = vld [vmem:[#allocation2 + $0x188] sm:$0xff]
          %v2339 = vld [vmem:[#allocation2 + $0x190] sm:$0xff]
          %v2340 = vld [vmem:[#allocation2 + $0x198] sm:$0xff]
          %v2341 = vld [vmem:[#allocation2 + $0x1a0] sm:$0xff]
          %v2342 = vld [vmem:[#allocation2 + $0x1a8] sm:$0xff]
          %v2343 = vld [vmem:[#allocation2 + $0x1b0] sm:$0xff]
          %v2344 = vld [vmem:[#allocation2 + $0x1b8] sm:$0xff]
          %v2345 = vld [vmem:[#allocation2 + $0x1c0] sm:$0xff]
          %v2346 = vld [vmem:[#allocation2 + $0x1c8] sm:$0xff]
          %v2347 = vld [vmem:[#allocation2 + $0x1d0] sm:$0xff]
          %v2348 = vld [vmem:[#allocation2 + $0x1d8] sm:$0xff]
          %v2349 = vld [vmem:[#allocation2 + $0x1e0] sm:$0xff]
          %v2350 = vld [vmem:[#allocation2 + $0x1e8] sm:$0xff]
          %v2351 = vld [vmem:[#allocation2 + $0x1f0] sm:$0xff]
          %v2352 = vld [vmem:[#allocation2 + $0x1f8] sm:$0xff]
          %v2353 = vadd.f32 %v2289, %v2059
          %v2354 = vadd.f32 %v2290, %v2061
          %v2355 = vadd.f32 %v2291, %v2063
          %v2356 = vadd.f32 %v2292, %v2065
          %v2357 = vadd.f32 %v2293, %v2069
          %v2358 = vadd.f32 %v2294, %v2071
          %v2359 = vadd.f32 %v2295, %v2073
          %v2360 = vadd.f32 %v2296, %v2075
          %v2361 = vadd.f32 %v2297, %v2079
          %v2362 = vadd.f32 %v2298, %v2081
          %v2363 = vadd.f32 %v2299, %v2083
          %v2364 = vadd.f32 %v2300, %v2085
          %v2365 = vadd.f32 %v2301, %v2089
          %v2366 = vadd.f32 %v2302, %v2091
          %v2367 = vadd.f32 %v2303, %v2093
          %v2368 = vadd.f32 %v2304, %v2095
          %v2369 = vadd.f32 %v2305, %v2099
          %v2370 = vadd.f32 %v2306, %v2101
          %v2371 = vadd.f32 %v2307, %v2103
          %v2372 = vadd.f32 %v2308, %v2105
          %v2373 = vadd.f32 %v2309, %v2109
          %v2374 = vadd.f32 %v2310, %v2111
          %v2375 = vadd.f32 %v2311, %v2113
          %v2376 = vadd.f32 %v2312, %v2115
          %v2377 = vadd.f32 %v2313, %v2119
          %v2378 = vadd.f32 %v2314, %v2121
          %v2379 = vadd.f32 %v2315, %v2123
          %v2380 = vadd.f32 %v2316, %v2125
          %v2381 = vadd.f32 %v2317, %v2129
          %v2382 = vadd.f32 %v2318, %v2131
          %v2383 = vadd.f32 %v2319, %v2133
          %v2384 = vadd.f32 %v2320, %v2135
          %v2385 = vadd.f32 %v2321, %v2139
          %v2386 = vadd.f32 %v2322, %v2141
          %v2387 = vadd.f32 %v2323, %v2143
          %v2388 = vadd.f32 %v2324, %v2145
          %v2389 = vadd.f32 %v2325, %v2149
          %v2390 = vadd.f32 %v2326, %v2151
          %v2391 = vadd.f32 %v2327, %v2153
          %v2392 = vadd.f32 %v2328, %v2155
          %v2393 = vadd.f32 %v2329, %v2159
          %v2394 = vadd.f32 %v2330, %v2161
          %v2395 = vadd.f32 %v2331, %v2163
          %v2396 = vadd.f32 %v2332, %v2165
          %v2397 = vadd.f32 %v2333, %v2169
          %v2398 = vadd.f32 %v2334, %v2171
          %v2399 = vadd.f32 %v2335, %v2173
          %v2400 = vadd.f32 %v2336, %v2175
          %v2401 = vadd.f32 %v2337, %v2179
          %v2402 = vadd.f32 %v2338, %v2181
          %v2403 = vadd.f32 %v2339, %v2183
          %v2404 = vadd.f32 %v2340, %v2185
          %v2405 = vadd.f32 %v2341, %v2189
          %v2406 = vadd.f32 %v2342, %v2191
          %v2407 = vadd.f32 %v2343, %v2193
          %v2408 = vadd.f32 %v2344, %v2195
          %v2409 = vadd.f32 %v2345, %v2199
          %v2410 = vadd.f32 %v2346, %v2201
          %v2411 = vadd.f32 %v2347, %v2203
          %v2412 = vadd.f32 %v2348, %v2205
          %v2413 = vadd.f32 %v2349, %v2209
          %v2414 = vadd.f32 %v2350, %v2211
          %v2415 = vadd.f32 %v2351, %v2213
          %v2416 = vadd.f32 %v2352, %v2215
          %2417 = vst [vmem:[#allocation2] sm:$0xff] %v2353
          %2418 = vst [vmem:[#allocation2 + $0x8] sm:$0xff] %v2354
          %2419 = vst [vmem:[#allocation2 + $0x10] sm:$0xff] %v2355
          %2420 = vst [vmem:[#allocation2 + $0x18] sm:$0xff] %v2356
          %2421 = vst [vmem:[#allocation2 + $0x20] sm:$0xff] %v2357
          %2422 = vst [vmem:[#allocation2 + $0x28] sm:$0xff] %v2358
          %2423 = vst [vmem:[#allocation2 + $0x30] sm:$0xff] %v2359
          %2424 = vst [vmem:[#allocation2 + $0x38] sm:$0xff] %v2360
          %2425 = vst [vmem:[#allocation2 + $0x40] sm:$0xff] %v2361
          %2426 = vst [vmem:[#allocation2 + $0x48] sm:$0xff] %v2362
          %2427 = vst [vmem:[#allocation2 + $0x50] sm:$0xff] %v2363
          %2428 = vst [vmem:[#allocation2 + $0x58] sm:$0xff] %v2364
          %2429 = vst [vmem:[#allocation2 + $0x60] sm:$0xff] %v2365
          %2430 = vst [vmem:[#allocation2 + $0x68] sm:$0xff] %v2366
          %2431 = vst [vmem:[#allocation2 + $0x70] sm:$0xff] %v2367
          %2432 = vst [vmem:[#allocation2 + $0x78] sm:$0xff] %v2368
          %2433 = vst [vmem:[#allocation2 + $0x80] sm:$0xff] %v2369
          %2434 = vst [vmem:[#allocation2 + $0x88] sm:$0xff] %v2370
          %2435 = vst [vmem:[#allocation2 + $0x90] sm:$0xff] %v2371
          %2436 = vst [vmem:[#allocation2 + $0x98] sm:$0xff] %v2372
          %2437 = vst [vmem:[#allocation2 + $0xa0] sm:$0xff] %v2373
          %2438 = vst [vmem:[#allocation2 + $0xa8] sm:$0xff] %v2374
          %2439 = vst [vmem:[#allocation2 + $0xb0] sm:$0xff] %v2375
          %2440 = vst [vmem:[#allocation2 + $0xb8] sm:$0xff] %v2376
          %2441 = vst [vmem:[#allocation2 + $0xc0] sm:$0xff] %v2377
          %2442 = vst [vmem:[#allocation2 + $0xc8] sm:$0xff] %v2378
          %2443 = vst [vmem:[#allocation2 + $0xd0] sm:$0xff] %v2379
          %2444 = vst [vmem:[#allocation2 + $0xd8] sm:$0xff] %v2380
          %2445 = vst [vmem:[#allocation2 + $0xe0] sm:$0xff] %v2381
          %2446 = vst [vmem:[#allocation2 + $0xe8] sm:$0xff] %v2382
          %2447 = vst [vmem:[#allocation2 + $0xf0] sm:$0xff] %v2383
          %2448 = vst [vmem:[#allocation2 + $0xf8] sm:$0xff] %v2384
          %2449 = vst [vmem:[#allocation2 + $0x100] sm:$0xff] %v2385
          %2450 = vst [vmem:[#allocation2 + $0x108] sm:$0xff] %v2386
          %2451 = vst [vmem:[#allocation2 + $0x110] sm:$0xff] %v2387
          %2452 = vst [vmem:[#allocation2 + $0x118] sm:$0xff] %v2388
          %2453 = vst [vmem:[#allocation2 + $0x120] sm:$0xff] %v2389
          %2454 = vst [vmem:[#allocation2 + $0x128] sm:$0xff] %v2390
          %2455 = vst [vmem:[#allocation2 + $0x130] sm:$0xff] %v2391
          %2456 = vst [vmem:[#allocation2 + $0x138] sm:$0xff] %v2392
          %2457 = vst [vmem:[#allocation2 + $0x140] sm:$0xff] %v2393
          %2458 = vst [vmem:[#allocation2 + $0x148] sm:$0xff] %v2394
          %2459 = vst [vmem:[#allocation2 + $0x150] sm:$0xff] %v2395
          %2460 = vst [vmem:[#allocation2 + $0x158] sm:$0xff] %v2396
          %2461 = vst [vmem:[#allocation2 + $0x160] sm:$0xff] %v2397
          %2462 = vst [vmem:[#allocation2 + $0x168] sm:$0xff] %v2398
          %2463 = vst [vmem:[#allocation2 + $0x170] sm:$0xff] %v2399
          %2464 = vst [vmem:[#allocation2 + $0x178] sm:$0xff] %v2400
          %2465 = vst [vmem:[#allocation2 + $0x180] sm:$0xff] %v2401
          %2466 = vst [vmem:[#allocation2 + $0x188] sm:$0xff] %v2402
          %2467 = vst [vmem:[#allocation2 + $0x190] sm:$0xff] %v2403
          %2468 = vst [vmem:[#allocation2 + $0x198] sm:$0xff] %v2404
          %2469 = vst [vmem:[#allocation2 + $0x1a0] sm:$0xff] %v2405
          %2470 = vst [vmem:[#allocation2 + $0x1a8] sm:$0xff] %v2406
          %2471 = vst [vmem:[#allocation2 + $0x1b0] sm:$0xff] %v2407
          %2472 = vst [vmem:[#allocation2 + $0x1b8] sm:$0xff] %v2408
          %2473 = vst [vmem:[#allocation2 + $0x1c0] sm:$0xff] %v2409
          %2474 = vst [vmem:[#allocation2 + $0x1c8] sm:$0xff] %v2410
          %2475 = vst [vmem:[#allocation2 + $0x1d0] sm:$0xff] %v2411
          %2476 = vst [vmem:[#allocation2 + $0x1d8] sm:$0xff] %v2412
          %2477 = vst [vmem:[#allocation2 + $0x1e0] sm:$0xff] %v2413
          %2478 = vst [vmem:[#allocation2 + $0x1e8] sm:$0xff] %v2414
          %2479 = vst [vmem:[#allocation2 + $0x1f0] sm:$0xff] %v2415
          %2480 = vst [vmem:[#allocation2 + $0x1f8] sm:$0xff] %v2416
        $region60: #{tpu_custom_call.1} parent=35 // pred_fallthru
          _
        %p2481 = scmp.eq.s32.totalorder %s28, 3
        // Predicated region
        $region61: #{tpu_custom_call.1} parent=35 // pred_check
          %p2482 = pneg %p2481
        $region62: #{tpu_custom_call.1} parent=35 // pred_check_branch
          %2484 = sbr.rel (%p2482) target = $region64
        $region63: #{tpu_custom_call.1} parent=35 // pred_region
          %v2485 = vld [vmem:[#allocation2] sm:$0xff]
          %v2486 = vld [vmem:[#allocation2 + $0x8] sm:$0xff]
          %v2487 = vld [vmem:[#allocation2 + $0x10] sm:$0xff]
          %v2488 = vld [vmem:[#allocation2 + $0x18] sm:$0xff]
          %v2489 = vld [vmem:[#allocation2 + $0x20] sm:$0xff]
          %v2490 = vld [vmem:[#allocation2 + $0x28] sm:$0xff]
          %v2491 = vld [vmem:[#allocation2 + $0x30] sm:$0xff]
          %v2492 = vld [vmem:[#allocation2 + $0x38] sm:$0xff]
          %v2493 = vld [vmem:[#allocation2 + $0x40] sm:$0xff]
          %v2494 = vld [vmem:[#allocation2 + $0x48] sm:$0xff]
          %v2495 = vld [vmem:[#allocation2 + $0x50] sm:$0xff]
          %v2496 = vld [vmem:[#allocation2 + $0x58] sm:$0xff]
          %v2497 = vld [vmem:[#allocation2 + $0x60] sm:$0xff]
          %v2498 = vld [vmem:[#allocation2 + $0x68] sm:$0xff]
          %v2499 = vld [vmem:[#allocation2 + $0x70] sm:$0xff]
          %v2500 = vld [vmem:[#allocation2 + $0x78] sm:$0xff]
          %v2501 = vld [vmem:[#allocation2 + $0x80] sm:$0xff]
          %v2502 = vld [vmem:[#allocation2 + $0x88] sm:$0xff]
          %v2503 = vld [vmem:[#allocation2 + $0x90] sm:$0xff]
          %v2504 = vld [vmem:[#allocation2 + $0x98] sm:$0xff]
          %v2505 = vld [vmem:[#allocation2 + $0xa0] sm:$0xff]
          %v2506 = vld [vmem:[#allocation2 + $0xa8] sm:$0xff]
          %v2507 = vld [vmem:[#allocation2 + $0xb0] sm:$0xff]
          %v2508 = vld [vmem:[#allocation2 + $0xb8] sm:$0xff]
          %v2509 = vld [vmem:[#allocation2 + $0xc0] sm:$0xff]
          %v2510 = vld [vmem:[#allocation2 + $0xc8] sm:$0xff]
          %v2511 = vld [vmem:[#allocation2 + $0xd0] sm:$0xff]
          %v2512 = vld [vmem:[#allocation2 + $0xd8] sm:$0xff]
          %v2513 = vld [vmem:[#allocation2 + $0xe0] sm:$0xff]
          %v2514 = vld [vmem:[#allocation2 + $0xe8] sm:$0xff]
          %v2515 = vld [vmem:[#allocation2 + $0xf0] sm:$0xff]
          %v2516 = vld [vmem:[#allocation2 + $0xf8] sm:$0xff]
          %v2517 = vld [vmem:[#allocation2 + $0x100] sm:$0xff]
          %v2518 = vld [vmem:[#allocation2 + $0x108] sm:$0xff]
          %v2519 = vld [vmem:[#allocation2 + $0x110] sm:$0xff]
          %v2520 = vld [vmem:[#allocation2 + $0x118] sm:$0xff]
          %v2521 = vld [vmem:[#allocation2 + $0x120] sm:$0xff]
          %v2522 = vld [vmem:[#allocation2 + $0x128] sm:$0xff]
          %v2523 = vld [vmem:[#allocation2 + $0x130] sm:$0xff]
          %v2524 = vld [vmem:[#allocation2 + $0x138] sm:$0xff]
          %v2525 = vld [vmem:[#allocation2 + $0x140] sm:$0xff]
          %v2526 = vld [vmem:[#allocation2 + $0x148] sm:$0xff]
          %v2527 = vld [vmem:[#allocation2 + $0x150] sm:$0xff]
          %v2528 = vld [vmem:[#allocation2 + $0x158] sm:$0xff]
          %v2529 = vld [vmem:[#allocation2 + $0x160] sm:$0xff]
          %v2530 = vld [vmem:[#allocation2 + $0x168] sm:$0xff]
          %v2531 = vld [vmem:[#allocation2 + $0x170] sm:$0xff]
          %v2532 = vld [vmem:[#allocation2 + $0x178] sm:$0xff]
          %v2533 = vld [vmem:[#allocation2 + $0x180] sm:$0xff]
          %v2534 = vld [vmem:[#allocation2 + $0x188] sm:$0xff]
          %v2535 = vld [vmem:[#allocation2 + $0x190] sm:$0xff]
          %v2536 = vld [vmem:[#allocation2 + $0x198] sm:$0xff]
          %v2537 = vld [vmem:[#allocation2 + $0x1a0] sm:$0xff]
          %v2538 = vld [vmem:[#allocation2 + $0x1a8] sm:$0xff]
          %v2539 = vld [vmem:[#allocation2 + $0x1b0] sm:$0xff]
          %v2540 = vld [vmem:[#allocation2 + $0x1b8] sm:$0xff]
          %v2541 = vld [vmem:[#allocation2 + $0x1c0] sm:$0xff]
          %v2542 = vld [vmem:[#allocation2 + $0x1c8] sm:$0xff]
          %v2543 = vld [vmem:[#allocation2 + $0x1d0] sm:$0xff]
          %v2544 = vld [vmem:[#allocation2 + $0x1d8] sm:$0xff]
          %v2545 = vld [vmem:[#allocation2 + $0x1e0] sm:$0xff]
          %v2546 = vld [vmem:[#allocation2 + $0x1e8] sm:$0xff]
          %v2547 = vld [vmem:[#allocation2 + $0x1f0] sm:$0xff]
          %v2548 = vld [vmem:[#allocation2 + $0x1f8] sm:$0xff]
          %v2549 = vpack.c.bf16 %v2487, %v2485
          %v2550 = vpack.c.bf16 %v2488, %v2486
          %v2551 = vpack.c.bf16 %v2491, %v2489
          %v2552 = vpack.c.bf16 %v2492, %v2490
          %v2553 = vpack.c.bf16 %v2495, %v2493
          %v2554 = vpack.c.bf16 %v2496, %v2494
          %v2555 = vpack.c.bf16 %v2499, %v2497
          %v2556 = vpack.c.bf16 %v2500, %v2498
          %v2557 = vpack.c.bf16 %v2503, %v2501
          %v2558 = vpack.c.bf16 %v2504, %v2502
          %v2559 = vpack.c.bf16 %v2507, %v2505
          %v2560 = vpack.c.bf16 %v2508, %v2506
          %v2561 = vpack.c.bf16 %v2511, %v2509
          %v2562 = vpack.c.bf16 %v2512, %v2510
          %v2563 = vpack.c.bf16 %v2515, %v2513
          %v2564 = vpack.c.bf16 %v2516, %v2514
          %v2565 = vpack.c.bf16 %v2519, %v2517
          %v2566 = vpack.c.bf16 %v2520, %v2518
          %v2567 = vpack.c.bf16 %v2523, %v2521
          %v2568 = vpack.c.bf16 %v2524, %v2522
          %v2569 = vpack.c.bf16 %v2527, %v2525
          %v2570 = vpack.c.bf16 %v2528, %v2526
          %v2571 = vpack.c.bf16 %v2531, %v2529
          %v2572 = vpack.c.bf16 %v2532, %v2530
          %v2573 = vpack.c.bf16 %v2535, %v2533
          %v2574 = vpack.c.bf16 %v2536, %v2534
          %v2575 = vpack.c.bf16 %v2539, %v2537
          %v2576 = vpack.c.bf16 %v2540, %v2538
          %v2577 = vpack.c.bf16 %v2543, %v2541
          %v2578 = vpack.c.bf16 %v2544, %v2542
          %v2579 = vpack.c.bf16 %v2547, %v2545
          %v2580 = vpack.c.bf16 %v2548, %v2546
          %v2613 = vunpack.c.l.b16 %v2549
          %v2614 = vunpack.c.l.b16 %v2550
          %v2615 = vunpack.c.h.b16 %v2549
          %v2616 = vunpack.c.h.b16 %v2550
          %v2617 = vunpack.c.l.b16 %v2551
          %v2618 = vunpack.c.l.b16 %v2552
          %v2619 = vunpack.c.h.b16 %v2551
          %v2620 = vunpack.c.h.b16 %v2552
          %v2621 = vunpack.c.l.b16 %v2553
          %v2622 = vunpack.c.l.b16 %v2554
          %v2623 = vunpack.c.h.b16 %v2553
          %v2624 = vunpack.c.h.b16 %v2554
          %v2625 = vunpack.c.l.b16 %v2555
          %v2626 = vunpack.c.l.b16 %v2556
          %v2627 = vunpack.c.h.b16 %v2555
          %v2628 = vunpack.c.h.b16 %v2556
          %v2629 = vunpack.c.l.b16 %v2557
          %v2630 = vunpack.c.l.b16 %v2558
          %v2631 = vunpack.c.h.b16 %v2557
          %v2632 = vunpack.c.h.b16 %v2558
          %v2633 = vunpack.c.l.b16 %v2559
          %v2634 = vunpack.c.l.b16 %v2560
          %v2635 = vunpack.c.h.b16 %v2559
          %v2636 = vunpack.c.h.b16 %v2560
          %v2637 = vunpack.c.l.b16 %v2561
          %v2638 = vunpack.c.l.b16 %v2562
          %v2639 = vunpack.c.h.b16 %v2561
          %v2640 = vunpack.c.h.b16 %v2562
          %v2641 = vunpack.c.l.b16 %v2563
          %v2642 = vunpack.c.l.b16 %v2564
          %v2643 = vunpack.c.h.b16 %v2563
          %v2644 = vunpack.c.h.b16 %v2564
          %v2645 = vunpack.c.l.b16 %v2565
          %v2646 = vunpack.c.l.b16 %v2566
          %v2647 = vunpack.c.h.b16 %v2565
          %v2648 = vunpack.c.h.b16 %v2566
          %v2649 = vunpack.c.l.b16 %v2567
          %v2650 = vunpack.c.l.b16 %v2568
          %v2651 = vunpack.c.h.b16 %v2567
          %v2652 = vunpack.c.h.b16 %v2568
          %v2653 = vunpack.c.l.b16 %v2569
          %v2654 = vunpack.c.l.b16 %v2570
          %v2655 = vunpack.c.h.b16 %v2569
          %v2656 = vunpack.c.h.b16 %v2570
          %v2657 = vunpack.c.l.b16 %v2571
          %v2658 = vunpack.c.l.b16 %v2572
          %v2659 = vunpack.c.h.b16 %v2571
          %v2660 = vunpack.c.h.b16 %v2572
          %v2661 = vunpack.c.l.b16 %v2573
          %v2662 = vunpack.c.l.b16 %v2574
          %v2663 = vunpack.c.h.b16 %v2573
          %v2664 = vunpack.c.h.b16 %v2574
          %v2665 = vunpack.c.l.b16 %v2575
          %v2666 = vunpack.c.l.b16 %v2576
          %v2667 = vunpack.c.h.b16 %v2575
          %v2668 = vunpack.c.h.b16 %v2576
          %v2669 = vunpack.c.l.b16 %v2577
          %v2670 = vunpack.c.l.b16 %v2578
          %v2671 = vunpack.c.h.b16 %v2577
          %v2672 = vunpack.c.h.b16 %v2578
          %v2673 = vunpack.c.l.b16 %v2579
          %v2674 = vunpack.c.l.b16 %v2580
          %v2675 = vunpack.c.h.b16 %v2579
          %v2676 = vunpack.c.h.b16 %v2580
          %v2677 = vpack.c.b16 %v2614, %v2613
          %v2678 = vpack.c.b16 %v2616, %v2615
          %v2679 = vpack.c.b16 %v2618, %v2617
          %v2680 = vpack.c.b16 %v2620, %v2619
          %v2681 = vpack.c.b16 %v2622, %v2621
          %v2682 = vpack.c.b16 %v2624, %v2623
          %v2683 = vpack.c.b16 %v2626, %v2625
          %v2684 = vpack.c.b16 %v2628, %v2627
          %v2685 = vpack.c.b16 %v2630, %v2629
          %v2686 = vpack.c.b16 %v2632, %v2631
          %v2687 = vpack.c.b16 %v2634, %v2633
          %v2688 = vpack.c.b16 %v2636, %v2635
          %v2689 = vpack.c.b16 %v2638, %v2637
          %v2690 = vpack.c.b16 %v2640, %v2639
          %v2691 = vpack.c.b16 %v2642, %v2641
          %v2692 = vpack.c.b16 %v2644, %v2643
          %v2693 = vpack.c.b16 %v2646, %v2645
          %v2694 = vpack.c.b16 %v2648, %v2647
          %v2695 = vpack.c.b16 %v2650, %v2649
          %v2696 = vpack.c.b16 %v2652, %v2651
          %v2697 = vpack.c.b16 %v2654, %v2653
          %v2698 = vpack.c.b16 %v2656, %v2655
          %v2699 = vpack.c.b16 %v2658, %v2657
          %v2700 = vpack.c.b16 %v2660, %v2659
          %v2701 = vpack.c.b16 %v2662, %v2661
          %v2702 = vpack.c.b16 %v2664, %v2663
          %v2703 = vpack.c.b16 %v2666, %v2665
          %v2704 = vpack.c.b16 %v2668, %v2667
          %v2705 = vpack.c.b16 %v2670, %v2669
          %v2706 = vpack.c.b16 %v2672, %v2671
          %v2707 = vpack.c.b16 %v2674, %v2673
          %v2708 = vpack.c.b16 %v2676, %v2675
          %2741 = vst [vmem:[#allocation11] sm:$0xff] %v2677
          %2742 = vst [vmem:[#allocation11 + $0x8] sm:$0xff] %v2678
          %2743 = vst [vmem:[#allocation11 + $0x10] sm:$0xff] %v2679
          %2744 = vst [vmem:[#allocation11 + $0x18] sm:$0xff] %v2680
          %2745 = vst [vmem:[#allocation11 + $0x20] sm:$0xff] %v2681
          %2746 = vst [vmem:[#allocation11 + $0x28] sm:$0xff] %v2682
          %2747 = vst [vmem:[#allocation11 + $0x30] sm:$0xff] %v2683
          %2748 = vst [vmem:[#allocation11 + $0x38] sm:$0xff] %v2684
          %2749 = vst [vmem:[#allocation11 + $0x40] sm:$0xff] %v2685
          %2750 = vst [vmem:[#allocation11 + $0x48] sm:$0xff] %v2686
          %2751 = vst [vmem:[#allocation11 + $0x50] sm:$0xff] %v2687
          %2752 = vst [vmem:[#allocation11 + $0x58] sm:$0xff] %v2688
          %2753 = vst [vmem:[#allocation11 + $0x60] sm:$0xff] %v2689
          %2754 = vst [vmem:[#allocation11 + $0x68] sm:$0xff] %v2690
          %2755 = vst [vmem:[#allocation11 + $0x70] sm:$0xff] %v2691
          %2756 = vst [vmem:[#allocation11 + $0x78] sm:$0xff] %v2692
          %2757 = vst [vmem:[#allocation11 + $0x80] sm:$0xff] %v2693
          %2758 = vst [vmem:[#allocation11 + $0x88] sm:$0xff] %v2694
          %2759 = vst [vmem:[#allocation11 + $0x90] sm:$0xff] %v2695
          %2760 = vst [vmem:[#allocation11 + $0x98] sm:$0xff] %v2696
          %2761 = vst [vmem:[#allocation11 + $0xa0] sm:$0xff] %v2697
          %2762 = vst [vmem:[#allocation11 + $0xa8] sm:$0xff] %v2698
          %2763 = vst [vmem:[#allocation11 + $0xb0] sm:$0xff] %v2699
          %2764 = vst [vmem:[#allocation11 + $0xb8] sm:$0xff] %v2700
          %2765 = vst [vmem:[#allocation11 + $0xc0] sm:$0xff] %v2701
          %2766 = vst [vmem:[#allocation11 + $0xc8] sm:$0xff] %v2702
          %2767 = vst [vmem:[#allocation11 + $0xd0] sm:$0xff] %v2703
          %2768 = vst [vmem:[#allocation11 + $0xd8] sm:$0xff] %v2704
          %2769 = vst [vmem:[#allocation11 + $0xe0] sm:$0xff] %v2705
          %2770 = vst [vmem:[#allocation11 + $0xe8] sm:$0xff] %v2706
          %2771 = vst [vmem:[#allocation11 + $0xf0] sm:$0xff] %v2707
          %2772 = vst [vmem:[#allocation11 + $0xf8] sm:$0xff] %v2708
        $region64: #{tpu_custom_call.1} parent=35 // pred_fallthru
          _
        // Predicated region
        $region65: #{tpu_custom_call.1} parent=35 // pred_check
          %p2773 = pneg %p157
        $region66: #{tpu_custom_call.1} parent=35 // pred_check_branch
          %2775 = sbr.rel (%p2773) target = $region68
        $region67: #{tpu_custom_call.1} parent=35 // pred_region
          %s2776 = smul.u32 32, %s27
          %s2778 = ssub.s32 4096, 4096
          %2779 = vsyncadd [#allocation5], %s2778
          %s2780 = smul.addr %s2776, 2
          %s2781 = smul.addr %s2780, 64
          %s2782 = scalar_lea.hbm %s4, %s2781
          %s2783 = sshll.u32 [#allocation11], 4
          %s2784 = int_to_ptr.vmem [resolvable:$true] %s2783
          %2789 = dma.vmem_to_hbm [thread:$0]  %s2784, 4096, %s2782, [#allocation5], 128, 128, 8
        $region68: #{tpu_custom_call.1} parent=35 // pred_fallthru
          _
        // Predicated region
        $region69: #{tpu_custom_call.1} parent=35 // pred_check
          %p2790 = pneg %p157
        $region70: #{tpu_custom_call.1} parent=35 // pred_check_branch
          %2792 = sbr.rel (%p2790) target = $region72
        $region71: #{tpu_custom_call.1} parent=35 // pred_region
          %2793 = dma.done [#allocation5], 4096
        $region72: #{tpu_custom_call.1} parent=35 // pred_fallthru
          _
      $region36: #{tpu_custom_call.1} parent=5 // pred_fallthru
        _
      %p2794 = scmp.le.s32.totalorder 2, %s18
      // Predicated region
      $region73: #{tpu_custom_call.1} parent=5 // pred_check
        %p2795 = pneg %p2794
      $region74: #{tpu_custom_call.1} parent=5 // pred_check_branch
        %2797 = sbr.rel (%p2795) target = $region76
      $region75: #{tpu_custom_call.1} parent=5 // pred_region
        %s2798 = ssub.s32 %s18, 2
      $region76: #{tpu_custom_call.1} parent=5 // pred_fallthru
        _
    $region6: #{tpu_custom_call.1} parent=1 // loop_footer
      %s22 = sadd.s32 1, %s18
    $region7: #{tpu_custom_call.1} parent=1 // loop_footer_branch
      %17 = sbr.rel target = $region3
    $region8: #{tpu_custom_call.1} parent=1 // loop_exit
      _
    %2799 = vsyncpa [#allocation4], 1
    %s2800 = scalar_lea.sflag [#allocation4], 1
    %2801 = vsyncpa %s2800, 1
    %2802 = vsyncpa [#allocation7], 1
    %s2803 = scalar_lea.sflag [#allocation7], 1
    %2804 = vsyncpa %s2803, 1
    %2805 = vsyncpa [#allocation10], 1
    %s2806 = scalar_lea.sflag [#allocation10], 1
    %2807 = vsyncpa %s2806, 1
    %2808 = vsyncpa [#allocation5], 1
    %s2809 = scalar_lea.sflag [#allocation5], 1
    %2810 = vsyncpa %s2809, 1

// kernel: tpu_custom_call.1
$region0: #{tpu_custom_call.1}
  #allocation0 [shape = 'u32[]', space=smem, size = 0x4, offset = 0x4, fixed_abs, tag = 'smem constant byte address 0x4 - core index']
  #allocation1 [shape = 'u32[144,128]{1,0:T(1,128)}', space=vmem, size = 0x12000, scoped, tag = 'internal scratch']
  #allocation2 [shape = 'f32[256,256]{1,0:T(8,128)}', space=vmem, size = 0x40000, scoped, tag = 'scratch operand']
  %s0 = inlined_call_operand.hbm [shape: bf16[512,256], index: 0, kind: input, shape index: {}]
  %s1 = inlined_call_operand.hbm [shape: bf16[4,256,256], index: 1, kind: input, shape index: {}]
  %s2 = inlined_call_operand.hbm [shape: bf16[4,256,256], index: 2, kind: input, shape index: {}]
  %s3 = inlined_call_operand.hbm [shape: bf16[1024,256], index: 3, kind: input, shape index: {}]
  %s4 = inlined_call_operand.hbm [shape: bf16[512,256], index: 4, kind: output, shape index: {}]
  %s5 = sld [smem:[#allocation0]]
  $region77: #{tpu_custom_call.1} parent=0
    _
  %s7 = ssub.s32 1, %s5
  %s8 = scalar_select 0, %s7, %s5
  $region1: #{tpu_custom_call.1} parent=0
    #allocation3 [shape = 'u8[262144]{0}', space=vmem, size = 0x40000, scoped, tag = 'input window, operand 0']
    #allocation4 [shape = 's32[2]{0}', space=sflag, size = 0x8, scoped, tag = 'scoped memory for tpu_custom_call.1']
    #allocation5 [shape = 's32[2]{0}', space=sflag, size = 0x8, scoped, tag = 'scoped memory for tpu_custom_call.1']
    #allocation6 [shape = 'u8[262144]{0}', space=vmem, size = 0x40000, scoped, tag = 'input window, operand 1']
    #allocation7 [shape = 's32[2]{0}', space=sflag, size = 0x8, scoped, tag = 'scoped memory for tpu_custom_call.1']
    #allocation8 [shape = 'u8[262144]{0}', space=vmem, size = 0x40000, scoped, tag = 'input window, operand 2']
    #allocation9 [shape = 'u8[262144]{0}', space=vmem, size = 0x40000, scoped, tag = 'input window, operand 3']
    #allocation10 [shape = 's32[2]{0}', space=sflag, size = 0x8, scoped, tag = 'scoped memory for tpu_custom_call.1']
    #allocation11 [shape = 'u8[262144]{0}', space=vmem, size = 0x40000, scoped, tag = 'output window, operand 0']
    %9 = vsyncpa [#allocation4], 0
    %s10 = scalar_lea.sflag [#allocation4], 1
    %11 = vsyncpa %s10, 0
    %12 = vsyncpa [#allocation7], 0
    %s13 = scalar_lea.sflag [#allocation7], 1
    %14 = vsyncpa %s13, 0
    %15 = vsyncpa [#allocation10], 0
    %s16 = scalar_lea.sflag [#allocation10], 1
    %17 = vsyncpa %s16, 0
    %18 = vsyncpa [#allocation5], 0
    %s19 = scalar_lea.sflag [#allocation5], 1
    %20 = vsyncpa %s19, 0
    loop: start=0, step=1, limit=10
    $region2: #{tpu_custom_call.1} parent=1 // loop_pre_header
      _
    $region3: #{tpu_custom_call.1} parent=1 // loop_header
      %s22 = sphi 0, %s26
      %p23 = scmp.ge.s32.totalorder %s22, 10
      %s29 = sphi 0, %s41
      %s30 = sphi 0, %s37
      %s31 = sphi 0, %s29
      %s32 = sphi 0, %s30
      %s33 = sphi 0, %s31
      %s34 = sphi 0, %s32
      %s44 = sphi 0, %s46
      %s47 = sphi 0, %s44
      %s48 = sphi 0, %s47
      %s64 = sphi 0, %s48
      %s70 = sphi 0, %s72
      %s73 = sphi 0, %s70
      %s74 = sphi 0, %s73
      %s90 = sphi 0, %s74
      %s96 = sphi 0, %s98
      %s99 = sphi 0, %s96
      %s100 = sphi 0, %s99
      %s116 = sphi 0, %s100
      %s122 = sphi 0, %s124
      %s125 = sphi 0, %s122
      %s126 = sphi 0, %s125
      %s142 = sphi 0, %s126
      %s148 = sphi 0, %s150
      %s151 = sphi 0, %s148
      %s152 = sphi 0, %s151
      %s168 = sphi 0, %s152
    $region4: #{tpu_custom_call.1} parent=1 // loop_header_branch
      %25 = sbr.rel (%p23) target = $region8
    $region5: #{tpu_custom_call.1} parent=1 // loop_body
      %s27 = ssub.s32 %s22, 1
      %s28 = ssub.s32 %s22, 2
      %s35 = sadd.s32 1, %s30
      %p36 = scmp.ge.s32.totalorder %s35, 4
      %s37 = scalar_select %p36, 0, %s35
      %s38 = sadd.s32 1, %s29
      %s39 = scalar_select %p36, %s38, %s29
      %p40 = scmp.ge.s32.totalorder %s39, 2
      %s41 = scalar_select %p40, 0, %s39
      %s42 = ssub.s32 %s29, %s41
      %p43 = scmp.eq.s32.totalorder %s42, 0
      %s45 = sadd.s32 %s44, 1
      %s46 = scalar_select %p43, %s44, %s45
      %p49 = pneg %p43
      %p50 = scmp.eq.s32.totalorder %s22, 7
      %p51 = por %p49, %p50
      %p52 = scmp.ne.s32.totalorder %s44, %s47
      %p53 = scmp.eq.s32.totalorder %s22, 0
      %p54 = por %p52, %p53
      %p55 = scmp.ne.s32.totalorder %s44, %s47
      %p56 = scmp.eq.s32.totalorder %s27, 7
      %p57 = por %p55, %p56
      %p58 = scmp.ne.s32.totalorder %s47, %s48
      %p59 = scmp.eq.s32.totalorder %s27, 0
      %p60 = por %p58, %p59
      %p61 = scmp.ne.s32.totalorder %s47, %s48
      %p62 = scmp.eq.s32.totalorder %s28, 7
      %p63 = por %p61, %p62
      %p65 = scmp.ne.s32.totalorder %s48, %s64
      %p66 = scmp.eq.s32.totalorder %s28, 0
      %p67 = por %p65, %p66
      %s68 = ssub.s32 %s30, %s37
      %p69 = scmp.eq.s32.totalorder %s68, 0
      %s71 = sadd.s32 %s70, 1
      %s72 = scalar_select %p69, %s70, %s71
      %p75 = pneg %p69
      %p76 = scmp.eq.s32.totalorder %s22, 7
      %p77 = por %p75, %p76
      %p78 = scmp.ne.s32.totalorder %s70, %s73
      %p79 = scmp.eq.s32.totalorder %s22, 0
      %p80 = por %p78, %p79
      %p81 = scmp.ne.s32.totalorder %s70, %s73
      %p82 = scmp.eq.s32.totalorder %s27, 7
      %p83 = por %p81, %p82
      %p84 = scmp.ne.s32.totalorder %s73, %s74
      %p85 = scmp.eq.s32.totalorder %s27, 0
      %p86 = por %p84, %p85
      %p87 = scmp.ne.s32.totalorder %s73, %s74
      %p88 = scmp.eq.s32.totalorder %s28, 7
      %p89 = por %p87, %p88
      %p91 = scmp.ne.s32.totalorder %s74, %s90
      %p92 = scmp.eq.s32.totalorder %s28, 0
      %p93 = por %p91, %p92
      %s94 = ssub.s32 %s30, %s37
      %p95 = scmp.eq.s32.totalorder %s94, 0
      %s97 = sadd.s32 %s96, 1
      %s98 = scalar_select %p95, %s96, %s97
      %p101 = pneg %p95
      %p102 = scmp.eq.s32.totalorder %s22, 7
      %p103 = por %p101, %p102
      %p104 = scmp.ne.s32.totalorder %s96, %s99
      %p105 = scmp.eq.s32.totalorder %s22, 0
      %p106 = por %p104, %p105
      %p107 = scmp.ne.s32.totalorder %s96, %s99
      %p108 = scmp.eq.s32.totalorder %s27, 7
      %p109 = por %p107, %p108
      %p110 = scmp.ne.s32.totalorder %s99, %s100
      %p111 = scmp.eq.s32.totalorder %s27, 0
      %p112 = por %p110, %p111
      %p113 = scmp.ne.s32.totalorder %s99, %s100
      %p114 = scmp.eq.s32.totalorder %s28, 7
      %p115 = por %p113, %p114
      %p117 = scmp.ne.s32.totalorder %s100, %s116
      %p118 = scmp.eq.s32.totalorder %s28, 0
      %p119 = por %p117, %p118
      %s120 = ssub.s32 %s30, %s37
      %p121 = scmp.eq.s32.totalorder %s120, 0
      %s123 = sadd.s32 %s122, 1
      %s124 = scalar_select %p121, %s122, %s123
      %p127 = pneg %p121
      %p128 = scmp.eq.s32.totalorder %s22, 7
      %p129 = por %p127, %p128
      %p130 = scmp.ne.s32.totalorder %s122, %s125
      %p131 = scmp.eq.s32.totalorder %s22, 0
      %p132 = por %p130, %p131
      %p133 = scmp.ne.s32.totalorder %s122, %s125
      %p134 = scmp.eq.s32.totalorder %s27, 7
      %p135 = por %p133, %p134
      %p136 = scmp.ne.s32.totalorder %s125, %s126
      %p137 = scmp.eq.s32.totalorder %s27, 0
      %p138 = por %p136, %p137
      %p139 = scmp.ne.s32.totalorder %s125, %s126
      %p140 = scmp.eq.s32.totalorder %s28, 7
      %p141 = por %p139, %p140
      %p143 = scmp.ne.s32.totalorder %s126, %s142
      %p144 = scmp.eq.s32.totalorder %s28, 0
      %p145 = por %p143, %p144
      %s146 = ssub.s32 %s29, %s41
      %p147 = scmp.eq.s32.totalorder %s146, 0
      %s149 = sadd.s32 %s148, 1
      %s150 = scalar_select %p147, %s148, %s149
      %p153 = pneg %p147
      %p154 = scmp.eq.s32.totalorder %s22, 7
      %p155 = por %p153, %p154
      %p156 = scmp.ne.s32.totalorder %s148, %s151
      %p157 = scmp.eq.s32.totalorder %s22, 0
      %p158 = por %p156, %p157
      %p159 = scmp.ne.s32.totalorder %s148, %s151
      %p160 = scmp.eq.s32.totalorder %s27, 7
      %p161 = por %p159, %p160
      %p162 = scmp.ne.s32.totalorder %s151, %s152
      %p163 = scmp.eq.s32.totalorder %s27, 0
      %p164 = por %p162, %p163
      %p165 = scmp.ne.s32.totalorder %s151, %s152
      %p166 = scmp.eq.s32.totalorder %s28, 7
      %p167 = por %p165, %p166
      %p169 = scmp.ne.s32.totalorder %s152, %s168
      %p170 = scmp.eq.s32.totalorder %s28, 0
      %p171 = por %p169, %p170
      %p172 = scmp.le.s32.totalorder 1, %s22
      %p173 = scmp.lt.s32.totalorder %s22, 9
      %p174 = pnand %p172, %p173
      %p175 = pneg %p174
      // Predicated region
      $region9: #{tpu_custom_call.1} parent=5 // pred_check
        _
      $region10: #{tpu_custom_call.1} parent=5 // pred_check_branch
        %177 = sbr.rel (%p174) target = $region12
      $region11: #{tpu_custom_call.1} parent=5 // pred_region
        %s178 = ssub.s32 %s22, 1
      $region12: #{tpu_custom_call.1} parent=5 // pred_fallthru
        _
      %p179 = scmp.lt.s32.totalorder %s22, 8
      // Predicated region
      $region13: #{tpu_custom_call.1} parent=5 // pred_check
        %p180 = pneg %p179
      $region14: #{tpu_custom_call.1} parent=5 // pred_check_branch
        %182 = sbr.rel (%p180) target = $region16
      $region15: #{tpu_custom_call.1} parent=5 // pred_region
        // Predicated region
        $region17: #{tpu_custom_call.1} parent=15 // pred_check
          %p183 = pneg %p54
        $region18: #{tpu_custom_call.1} parent=15 // pred_check_branch
          %185 = sbr.rel (%p183) target = $region20
        $region19: #{tpu_custom_call.1} parent=15 // pred_region
          %s186 = sand.u32 %s44, 1
          %s187 = scalar_lea.sflag [#allocation4], %s186
          %s188 = sand.u32 %s44, 1
          %s189 = smul.addr %s188, 256
          %s190 = scalar_lea.vmem [#allocation3], %s189
          %s191 = smul.u32 32, %s29
          %s193 = ssub.s32 4096, 4096
          %194 = vsyncadd %s187, %s193
          %s195 = smul.addr %s191, 2
          %s196 = smul.addr %s195, 64
          %s197 = scalar_lea.hbm %s0, %s196
          %s198 = sshll.u32 %s190, 4
          %s199 = int_to_ptr.vmem [resolvable:$true] %s198
          %204 = dma.hbm_to_vmem [thread:$0]  %s197, 4096, %s199, %s187, 128, 128, 8
        $region20: #{tpu_custom_call.1} parent=15 // pred_fallthru
          _
        // Predicated region
        $region21: #{tpu_custom_call.1} parent=15 // pred_check
          %p205 = pneg %p80
        $region22: #{tpu_custom_call.1} parent=15 // pred_check_branch
          %207 = sbr.rel (%p205) target = $region24
        $region23: #{tpu_custom_call.1} parent=15 // pred_region
          %s208 = sand.u32 %s22, 1
          %s209 = scalar_lea.sflag [#allocation7], %s208
          %s210 = sand.u32 %s70, 1
          %s211 = smul.addr %s210, 256
          %s212 = scalar_lea.vmem [#allocation6], %s211
          %s214 = ssub.s32 4096, 4096
          %215 = vsyncadd %s209, %s214
          %s216 = smul.addr %s30, 64
          %s217 = smul.addr %s216, 64
          %s218 = scalar_lea.hbm %s1, %s217
          %s219 = sshll.u32 %s212, 4
          %s220 = int_to_ptr.vmem [resolvable:$true] %s219
          %225 = dma.hbm_to_vmem [thread:$0]  %s218, 4096, %s220, %s209, 128, 128, 8
        $region24: #{tpu_custom_call.1} parent=15 // pred_fallthru
          _
        // Predicated region
        $region25: #{tpu_custom_call.1} parent=15 // pred_check
          %p226 = pneg %p106
        $region26: #{tpu_custom_call.1} parent=15 // pred_check_branch
          %228 = sbr.rel (%p226) target = $region28
        $region27: #{tpu_custom_call.1} parent=15 // pred_region
          %s229 = sand.u32 %s22, 1
          %s230 = scalar_lea.sflag [#allocation7], %s229
          %s231 = sand.u32 %s96, 1
          %s232 = smul.addr %s231, 256
          %s233 = scalar_lea.vmem [#allocation8], %s232
          %s235 = ssub.s32 4096, 4096
          %236 = vsyncadd %s230, %s235
          %s237 = smul.addr %s30, 64
          %s238 = smul.addr %s237, 64
          %s239 = scalar_lea.hbm %s2, %s238
          %s240 = sshll.u32 %s233, 4
          %s241 = int_to_ptr.vmem [resolvable:$true] %s240
          %246 = dma.hbm_to_vmem [thread:$0]  %s239, 4096, %s241, %s230, 128, 128, 8
        $region28: #{tpu_custom_call.1} parent=15 // pred_fallthru
          _
        // Predicated region
        $region29: #{tpu_custom_call.1} parent=15 // pred_check
          %p247 = pneg %p132
        $region30: #{tpu_custom_call.1} parent=15 // pred_check_branch
          %249 = sbr.rel (%p247) target = $region32
        $region31: #{tpu_custom_call.1} parent=15 // pred_region
          %s250 = sand.u32 %s122, 1
          %s251 = scalar_lea.sflag [#allocation10], %s250
          %s252 = sand.u32 %s122, 1
          %s253 = smul.addr %s252, 256
          %s254 = scalar_lea.vmem [#allocation9], %s253
          %s255 = smul.u32 32, %s30
          %s257 = ssub.s32 4096, 4096
          %258 = vsyncadd %s251, %s257
          %s259 = smul.addr %s255, 2
          %s260 = smul.addr %s259, 64
          %s261 = scalar_lea.hbm %s3, %s260
          %s262 = sshll.u32 %s254, 4
          %s263 = int_to_ptr.vmem [resolvable:$true] %s262
          %268 = dma.hbm_to_vmem [thread:$0]  %s261, 4096, %s263, %s251, 128, 128, 8
        $region32: #{tpu_custom_call.1} parent=15 // pred_fallthru
          _
      $region16: #{tpu_custom_call.1} parent=5 // pred_fallthru
        _
      %p269 = scmp.le.s32.totalorder 1, %s22
      %p270 = scmp.lt.s32.totalorder %s22, 9
      %p271 = pnand %p269, %p270
      %p272 = pneg %p271
      // Predicated region
      $region33: #{tpu_custom_call.1} parent=5 // pred_check
        _
      $region34: #{tpu_custom_call.1} parent=5 // pred_check_branch
        %274 = sbr.rel (%p271) target = $region36
      $region35: #{tpu_custom_call.1} parent=5 // pred_region
        %s275 = ssub.s32 %s22, 1
        %s276 = sand.u32 %s47, 1
        %s277 = scalar_lea.sflag [#allocation4], %s276
        %s278 = sand.u32 %s47, 1
        %s279 = smul.addr %s278, 256
        %s280 = scalar_lea.vmem [#allocation3], %s279
        // Predicated region
        $region37: #{tpu_custom_call.1} parent=35 // pred_check
          %p281 = pneg %p60
        $region38: #{tpu_custom_call.1} parent=35 // pred_check_branch
          %283 = sbr.rel (%p281) target = $region40
        $region39: #{tpu_custom_call.1} parent=35 // pred_region
          %284 = dma.done %s277, 4096
        $region40: #{tpu_custom_call.1} parent=35 // pred_fallthru
          _
        %s285 = sand.u32 %s27, 1
        %s286 = scalar_lea.sflag [#allocation7], %s285
        %s287 = sand.u32 %s73, 1
        %s288 = smul.addr %s287, 256
        %s289 = scalar_lea.vmem [#allocation6], %s288
        // Predicated region
        $region41: #{tpu_custom_call.1} parent=35 // pred_check
          %p290 = pneg %p86
        $region42: #{tpu_custom_call.1} parent=35 // pred_check_branch
          %292 = sbr.rel (%p290) target = $region44
        $region43: #{tpu_custom_call.1} parent=35 // pred_region
          %293 = dma.done %s286, 4096
        $region44: #{tpu_custom_call.1} parent=35 // pred_fallthru
          _
        %s294 = sand.u32 %s27, 1
        %s295 = scalar_lea.sflag [#allocation7], %s294
        %s296 = sand.u32 %s99, 1
        %s297 = smul.addr %s296, 256
        %s298 = scalar_lea.vmem [#allocation8], %s297
        // Predicated region
        $region45: #{tpu_custom_call.1} parent=35 // pred_check
          %p299 = pneg %p112
        $region46: #{tpu_custom_call.1} parent=35 // pred_check_branch
          %301 = sbr.rel (%p299) target = $region48
        $region47: #{tpu_custom_call.1} parent=35 // pred_region
          %302 = dma.done %s295, 4096
        $region48: #{tpu_custom_call.1} parent=35 // pred_fallthru
          _
        %s303 = sand.u32 %s125, 1
        %s304 = scalar_lea.sflag [#allocation10], %s303
        %s305 = sand.u32 %s125, 1
        %s306 = smul.addr %s305, 256
        %s307 = scalar_lea.vmem [#allocation9], %s306
        // Predicated region
        $region49: #{tpu_custom_call.1} parent=35 // pred_check
          %p308 = pneg %p138
        $region50: #{tpu_custom_call.1} parent=35 // pred_check_branch
          %310 = sbr.rel (%p308) target = $region52
        $region51: #{tpu_custom_call.1} parent=35 // pred_region
          %311 = dma.done %s304, 4096
        $region52: #{tpu_custom_call.1} parent=35 // pred_fallthru
          _
        %s312 = sand.u32 %s47, 1
        %s313 = scalar_lea.sflag [#allocation4], %s312
        %s314 = sand.u32 %s47, 1
        %s315 = smul.addr %s314, 256
        %s316 = scalar_lea.vmem [#allocation3], %s315
        %p317 = pneg %p60
        %p318 = pneg %p57
        %s319 = sand.u32 %s27, 1
        %s320 = scalar_lea.sflag [#allocation7], %s319
        %s321 = sand.u32 %s73, 1
        %s322 = smul.addr %s321, 256
        %s323 = scalar_lea.vmem [#allocation6], %s322
        %p324 = pneg %p86
        %p325 = pneg %p83
        %s326 = sand.u32 %s27, 1
        %s327 = scalar_lea.sflag [#allocation7], %s326
        %s328 = sand.u32 %s99, 1
        %s329 = smul.addr %s328, 256
        %s330 = scalar_lea.vmem [#allocation8], %s329
        %p331 = pneg %p112
        %p332 = pneg %p109
        %s333 = sand.u32 %s125, 1
        %s334 = scalar_lea.sflag [#allocation10], %s333
        %s335 = sand.u32 %s125, 1
        %s336 = smul.addr %s335, 256
        %s337 = scalar_lea.vmem [#allocation9], %s336
        %p338 = pneg %p138
        %p339 = pneg %p135
        %p340 = pneg %p164
        %p341 = pneg %p161
        %s342 = sand.u32 %s151, 1
        %s343 = scalar_lea.sflag [#allocation5], %s342
        %s344 = sand.u32 %s151, 1
        %s345 = smul.addr %s344, 256
        %s346 = scalar_lea.vmem [#allocation11], %s345
        %s347 = smul.u32 32, %s31
        %s348 = smul.u32 32, %s32
        %s349 = smul.u32 32, %s31
        %v350 = vld [vmem:[%s280] sm:$0xff]
        %v351 = vld [vmem:[%s280 + $0x8] sm:$0xff]
        %v352 = vld [vmem:[%s280 + $0x10] sm:$0xff]
        %v353 = vld [vmem:[%s280 + $0x18] sm:$0xff]
        %v354 = vld [vmem:[%s280 + $0x20] sm:$0xff]
        %v355 = vld [vmem:[%s280 + $0x28] sm:$0xff]
        %v356 = vld [vmem:[%s280 + $0x30] sm:$0xff]
        %v357 = vld [vmem:[%s280 + $0x38] sm:$0xff]
        %v358 = vld [vmem:[%s280 + $0x40] sm:$0xff]
        %v359 = vld [vmem:[%s280 + $0x48] sm:$0xff]
        %v360 = vld [vmem:[%s280 + $0x50] sm:$0xff]
        %v361 = vld [vmem:[%s280 + $0x58] sm:$0xff]
        %v362 = vld [vmem:[%s280 + $0x60] sm:$0xff]
        %v363 = vld [vmem:[%s280 + $0x68] sm:$0xff]
        %v364 = vld [vmem:[%s280 + $0x70] sm:$0xff]
        %v365 = vld [vmem:[%s280 + $0x78] sm:$0xff]
        %v366 = vld [vmem:[%s280 + $0x80] sm:$0xff]
        %v367 = vld [vmem:[%s280 + $0x88] sm:$0xff]
        %v368 = vld [vmem:[%s280 + $0x90] sm:$0xff]
        %v369 = vld [vmem:[%s280 + $0x98] sm:$0xff]
        %v370 = vld [vmem:[%s280 + $0xa0] sm:$0xff]
        %v371 = vld [vmem:[%s280 + $0xa8] sm:$0xff]
        %v372 = vld [vmem:[%s280 + $0xb0] sm:$0xff]
        %v373 = vld [vmem:[%s280 + $0xb8] sm:$0xff]
        %v374 = vld [vmem:[%s280 + $0xc0] sm:$0xff]
        %v375 = vld [vmem:[%s280 + $0xc8] sm:$0xff]
        %v376 = vld [vmem:[%s280 + $0xd0] sm:$0xff]
        %v377 = vld [vmem:[%s280 + $0xd8] sm:$0xff]
        %v378 = vld [vmem:[%s280 + $0xe0] sm:$0xff]
        %v379 = vld [vmem:[%s280 + $0xe8] sm:$0xff]
        %v380 = vld [vmem:[%s280 + $0xf0] sm:$0xff]
        %v381 = vld [vmem:[%s280 + $0xf8] sm:$0xff]
        %v382 = vld [vmem:[%s289] sm:$0xff]
        %v383 = vld [vmem:[%s289 + $0x8] sm:$0xff]
        %v384 = vld [vmem:[%s289 + $0x10] sm:$0xff]
        %v385 = vld [vmem:[%s289 + $0x18] sm:$0xff]
        %v386 = vld [vmem:[%s289 + $0x20] sm:$0xff]
        %v387 = vld [vmem:[%s289 + $0x28] sm:$0xff]
        %v388 = vld [vmem:[%s289 + $0x30] sm:$0xff]
        %v389 = vld [vmem:[%s289 + $0x38] sm:$0xff]
        %v390 = vld [vmem:[%s289 + $0x40] sm:$0xff]
        %v391 = vld [vmem:[%s289 + $0x48] sm:$0xff]
        %v392 = vld [vmem:[%s289 + $0x50] sm:$0xff]
        %v393 = vld [vmem:[%s289 + $0x58] sm:$0xff]
        %v394 = vld [vmem:[%s289 + $0x60] sm:$0xff]
        %v395 = vld [vmem:[%s289 + $0x68] sm:$0xff]
        %v396 = vld [vmem:[%s289 + $0x70] sm:$0xff]
        %v397 = vld [vmem:[%s289 + $0x78] sm:$0xff]
        %v398 = vld [vmem:[%s289 + $0x80] sm:$0xff]
        %v399 = vld [vmem:[%s289 + $0x88] sm:$0xff]
        %v400 = vld [vmem:[%s289 + $0x90] sm:$0xff]
        %v401 = vld [vmem:[%s289 + $0x98] sm:$0xff]
        %v402 = vld [vmem:[%s289 + $0xa0] sm:$0xff]
        %v403 = vld [vmem:[%s289 + $0xa8] sm:$0xff]
        %v404 = vld [vmem:[%s289 + $0xb0] sm:$0xff]
        %v405 = vld [vmem:[%s289 + $0xb8] sm:$0xff]
        %v406 = vld [vmem:[%s289 + $0xc0] sm:$0xff]
        %v407 = vld [vmem:[%s289 + $0xc8] sm:$0xff]
        %v408 = vld [vmem:[%s289 + $0xd0] sm:$0xff]
        %v409 = vld [vmem:[%s289 + $0xd8] sm:$0xff]
        %v410 = vld [vmem:[%s289 + $0xe0] sm:$0xff]
        %v411 = vld [vmem:[%s289 + $0xe8] sm:$0xff]
        %v412 = vld [vmem:[%s289 + $0xf0] sm:$0xff]
        %v413 = vld [vmem:[%s289 + $0xf8] sm:$0xff]
        %v446 = vunpack.c.l.b16 %v350
        %v447 = vunpack.c.h.b16 %v350
        %v448 = vunpack.c.l.b16 %v351
        %v449 = vunpack.c.h.b16 %v351
        %v450 = vunpack.c.l.b16 %v352
        %v451 = vunpack.c.h.b16 %v352
        %v452 = vunpack.c.l.b16 %v353
        %v453 = vunpack.c.h.b16 %v353
        %v454 = vunpack.c.l.b16 %v354
        %v455 = vunpack.c.h.b16 %v354
        %v456 = vunpack.c.l.b16 %v355
        %v457 = vunpack.c.h.b16 %v355
        %v458 = vunpack.c.l.b16 %v356
        %v459 = vunpack.c.h.b16 %v356
        %v460 = vunpack.c.l.b16 %v357
        %v461 = vunpack.c.h.b16 %v357
        %v462 = vunpack.c.l.b16 %v358
        %v463 = vunpack.c.h.b16 %v358
        %v464 = vunpack.c.l.b16 %v359
        %v465 = vunpack.c.h.b16 %v359
        %v466 = vunpack.c.l.b16 %v360
        %v467 = vunpack.c.h.b16 %v360
        %v468 = vunpack.c.l.b16 %v361
        %v469 = vunpack.c.h.b16 %v361
        %v470 = vunpack.c.l.b16 %v362
        %v471 = vunpack.c.h.b16 %v362
        %v472 = vunpack.c.l.b16 %v363
        %v473 = vunpack.c.h.b16 %v363
        %v474 = vunpack.c.l.b16 %v364
        %v475 = vunpack.c.h.b16 %v364
        %v476 = vunpack.c.l.b16 %v365
        %v477 = vunpack.c.h.b16 %v365
        %v478 = vunpack.c.l.b16 %v366
        %v479 = vunpack.c.h.b16 %v366
        %v480 = vunpack.c.l.b16 %v367
        %v481 = vunpack.c.h.b16 %v367
        %v482 = vunpack.c.l.b16 %v368
        %v483 = vunpack.c.h.b16 %v368
        %v484 = vunpack.c.l.b16 %v369
        %v485 = vunpack.c.h.b16 %v369
        %v486 = vunpack.c.l.b16 %v370
        %v487 = vunpack.c.h.b16 %v370
        %v488 = vunpack.c.l.b16 %v371
        %v489 = vunpack.c.h.b16 %v371
        %v490 = vunpack.c.l.b16 %v372
        %v491 = vunpack.c.h.b16 %v372
        %v492 = vunpack.c.l.b16 %v373
        %v493 = vunpack.c.h.b16 %v373
        %v494 = vunpack.c.l.b16 %v374
        %v495 = vunpack.c.h.b16 %v374
        %v496 = vunpack.c.l.b16 %v375
        %v497 = vunpack.c.h.b16 %v375
        %v498 = vunpack.c.l.b16 %v376
        %v499 = vunpack.c.h.b16 %v376
        %v500 = vunpack.c.l.b16 %v377
        %v501 = vunpack.c.h.b16 %v377
        %v502 = vunpack.c.l.b16 %v378
        %v503 = vunpack.c.h.b16 %v378
        %v504 = vunpack.c.l.b16 %v379
        %v505 = vunpack.c.h.b16 %v379
        %v506 = vunpack.c.l.b16 %v380
        %v507 = vunpack.c.h.b16 %v380
        %v508 = vunpack.c.l.b16 %v381
        %v509 = vunpack.c.h.b16 %v381
        %v510 = vpack.c.b16 %v448, %v446
        %v511 = vpack.c.b16 %v449, %v447
        %v512 = vpack.c.b16 %v452, %v450
        %v513 = vpack.c.b16 %v453, %v451
        %v514 = vpack.c.b16 %v456, %v454
        %v515 = vpack.c.b16 %v457, %v455
        %v516 = vpack.c.b16 %v460, %v458
        %v517 = vpack.c.b16 %v461, %v459
        %v518 = vpack.c.b16 %v464, %v462
        %v519 = vpack.c.b16 %v465, %v463
        %v520 = vpack.c.b16 %v468, %v466
        %v521 = vpack.c.b16 %v469, %v467
        %v522 = vpack.c.b16 %v472, %v470
        %v523 = vpack.c.b16 %v473, %v471
        %v524 = vpack.c.b16 %v476, %v474
        %v525 = vpack.c.b16 %v477, %v475
        %v526 = vpack.c.b16 %v480, %v478
        %v527 = vpack.c.b16 %v481, %v479
        %v528 = vpack.c.b16 %v484, %v482
        %v529 = vpack.c.b16 %v485, %v483
        %v530 = vpack.c.b16 %v488, %v486
        %v531 = vpack.c.b16 %v489, %v487
        %v532 = vpack.c.b16 %v492, %v490
        %v533 = vpack.c.b16 %v493, %v491
        %v534 = vpack.c.b16 %v496, %v494
        %v535 = vpack.c.b16 %v497, %v495
        %v536 = vpack.c.b16 %v500, %v498
        %v537 = vpack.c.b16 %v501, %v499
        %v538 = vpack.c.b16 %v504, %v502
        %v539 = vpack.c.b16 %v505, %v503
        %v540 = vpack.c.b16 %v508, %v506
        %v541 = vpack.c.b16 %v509, %v507
        %v606 = vunpack.c.l.b16 %v382
        %v607 = vunpack.c.h.b16 %v382
        %v608 = vunpack.c.l.b16 %v383
        %v609 = vunpack.c.h.b16 %v383
        %v610 = vunpack.c.l.b16 %v384
        %v611 = vunpack.c.h.b16 %v384
        %v612 = vunpack.c.l.b16 %v385
        %v613 = vunpack.c.h.b16 %v385
        %v614 = vunpack.c.l.b16 %v386
        %v615 = vunpack.c.h.b16 %v386
        %v616 = vunpack.c.l.b16 %v387
        %v617 = vunpack.c.h.b16 %v387
        %v618 = vunpack.c.l.b16 %v388
        %v619 = vunpack.c.h.b16 %v388
        %v620 = vunpack.c.l.b16 %v389
        %v621 = vunpack.c.h.b16 %v389
        %v622 = vunpack.c.l.b16 %v390
        %v623 = vunpack.c.h.b16 %v390
        %v624 = vunpack.c.l.b16 %v391
        %v625 = vunpack.c.h.b16 %v391
        %v626 = vunpack.c.l.b16 %v392
        %v627 = vunpack.c.h.b16 %v392
        %v628 = vunpack.c.l.b16 %v393
        %v629 = vunpack.c.h.b16 %v393
        %v630 = vunpack.c.l.b16 %v394
        %v631 = vunpack.c.h.b16 %v394
        %v632 = vunpack.c.l.b16 %v395
        %v633 = vunpack.c.h.b16 %v395
        %v634 = vunpack.c.l.b16 %v396
        %v635 = vunpack.c.h.b16 %v396
        %v636 = vunpack.c.l.b16 %v397
        %v637 = vunpack.c.h.b16 %v397
        %v638 = vunpack.c.l.b16 %v398
        %v639 = vunpack.c.h.b16 %v398
        %v640 = vunpack.c.l.b16 %v399
        %v641 = vunpack.c.h.b16 %v399
        %v642 = vunpack.c.l.b16 %v400
        %v643 = vunpack.c.h.b16 %v400
        %v644 = vunpack.c.l.b16 %v401
        %v645 = vunpack.c.h.b16 %v401
        %v646 = vunpack.c.l.b16 %v402
        %v647 = vunpack.c.h.b16 %v402
        %v648 = vunpack.c.l.b16 %v403
        %v649 = vunpack.c.h.b16 %v403
        %v650 = vunpack.c.l.b16 %v404
        %v651 = vunpack.c.h.b16 %v404
        %v652 = vunpack.c.l.b16 %v405
        %v653 = vunpack.c.h.b16 %v405
        %v654 = vunpack.c.l.b16 %v406
        %v655 = vunpack.c.h.b16 %v406
        %v656 = vunpack.c.l.b16 %v407
        %v657 = vunpack.c.h.b16 %v407
        %v658 = vunpack.c.l.b16 %v408
        %v659 = vunpack.c.h.b16 %v408
        %v660 = vunpack.c.l.b16 %v409
        %v661 = vunpack.c.h.b16 %v409
        %v662 = vunpack.c.l.b16 %v410
        %v663 = vunpack.c.h.b16 %v410
        %v664 = vunpack.c.l.b16 %v411
        %v665 = vunpack.c.h.b16 %v411
        %v666 = vunpack.c.l.b16 %v412
        %v667 = vunpack.c.h.b16 %v412
        %v668 = vunpack.c.l.b16 %v413
        %v669 = vunpack.c.h.b16 %v413
        %v670 = vpack.c.b16 %v608, %v606
        %v671 = vpack.c.b16 %v609, %v607
        %v672 = vpack.c.b16 %v612, %v610
        %v673 = vpack.c.b16 %v613, %v611
        %v674 = vpack.c.b16 %v616, %v614
        %v675 = vpack.c.b16 %v617, %v615
        %v676 = vpack.c.b16 %v620, %v618
        %v677 = vpack.c.b16 %v621, %v619
        %v678 = vpack.c.b16 %v624, %v622
        %v679 = vpack.c.b16 %v625, %v623
        %v680 = vpack.c.b16 %v628, %v626
        %v681 = vpack.c.b16 %v629, %v627
        %v682 = vpack.c.b16 %v632, %v630
        %v683 = vpack.c.b16 %v633, %v631
        %v684 = vpack.c.b16 %v636, %v634
        %v685 = vpack.c.b16 %v637, %v635
        %v686 = vpack.c.b16 %v640, %v638
        %v687 = vpack.c.b16 %v641, %v639
        %v688 = vpack.c.b16 %v644, %v642
        %v689 = vpack.c.b16 %v645, %v643
        %v690 = vpack.c.b16 %v648, %v646
        %v691 = vpack.c.b16 %v649, %v647
        %v692 = vpack.c.b16 %v652, %v650
        %v693 = vpack.c.b16 %v653, %v651
        %v694 = vpack.c.b16 %v656, %v654
        %v695 = vpack.c.b16 %v657, %v655
        %v696 = vpack.c.b16 %v660, %v658
        %v697 = vpack.c.b16 %v661, %v659
        %v698 = vpack.c.b16 %v664, %v662
        %v699 = vpack.c.b16 %v665, %v663
        %v700 = vpack.c.b16 %v668, %v666
        %v701 = vpack.c.b16 %v669, %v667
        %734 = vmatprep.subr.bf16.mxu0 %v685
        %735 = vmatpush1.bf16.msra.mxu0 %v684
        %736 = vmatprep.subr.bf16.mxu0 %v683
        %737 = vmatpush1.bf16.msra.mxu0 %v682
        %738 = vmatprep.subr.bf16.mxu0 %v681
        %739 = vmatpush1.bf16.msra.mxu0 %v680
        %740 = vmatprep.subr.bf16.mxu0 %v679
        %741 = vmatpush1.bf16.msra.mxu0 %v678
        %742 = vmatprep.subr.bf16.mxu0 %v677
        %743 = vmatpush1.bf16.msra.mxu0 %v676
        %744 = vmatprep.subr.bf16.mxu0 %v675
        %745 = vmatpush1.bf16.msra.mxu0 %v674
        %746 = vmatprep.subr.bf16.mxu0 %v673
        %747 = vmatpush1.bf16.msra.mxu0 %v672
        %748 = vmatprep.subr.bf16.mxu0 %v671
        %749 = vmatpush1.bf16.msra.mxu0 %v670
        %750 = vmatprep.subr.bf16.mxu0 %v701
        %751 = vmatpush2.bf16.msra.mxu0 %v700
        %752 = vmatprep.subr.bf16.mxu0 %v699
        %753 = vmatpush2.bf16.msra.mxu0 %v698
        %754 = vmatprep.subr.bf16.mxu0 %v697
        %755 = vmatpush2.bf16.msra.mxu0 %v696
        %756 = vmatprep.subr.bf16.mxu0 %v695
        %757 = vmatpush2.bf16.msra.mxu0 %v694
        %758 = vmatprep.subr.bf16.mxu0 %v693
        %759 = vmatpush2.bf16.msra.mxu0 %v692
        %760 = vmatprep.subr.bf16.mxu0 %v691
        %761 = vmatpush2.bf16.msra.mxu0 %v690
        %762 = vmatprep.subr.bf16.mxu0 %v689
        %763 = vmatpush2.bf16.msra.mxu0 %v688
        %764 = vmatprep.subr.bf16.mxu0 %v687
        %765 = vmatpush2.bf16.msra.mxu0 %v686
        %766 = vmatprep.mubr.bf16.mxu0 %v511
        %767 = vmatmul.mubr.bf16.gmra.mxu0 %v510
        %v768 = vpop.f32.mrf.mxu0
        %v769 = vadd.f32 0.0, %v768
        %v770 = vpop.f32.mrf.mxu0
        %v771 = vadd.f32 0.0, %v770
        %v772 = vpop.f32.mrf.mxu0
        %v773 = vadd.f32 0.0, %v772
        %v774 = vpop.f32.mrf.mxu0
        %v775 = vadd.f32 0.0, %v774
        %776 = vmatprep.mubr.bf16.mxu0 %v513
        %777 = vmatmul.mubr.bf16.gmra.mxu0 %v512
        %v778 = vpop.f32.mrf.mxu0
        %v779 = vadd.f32 0.0, %v778
        %v780 = vpop.f32.mrf.mxu0
        %v781 = vadd.f32 0.0, %v780
        %v782 = vpop.f32.mrf.mxu0
        %v783 = vadd.f32 0.0, %v782
        %v784 = vpop.f32.mrf.mxu0
        %v785 = vadd.f32 0.0, %v784
        %786 = vmatprep.mubr.bf16.mxu0 %v515
        %787 = vmatmul.mubr.bf16.gmra.mxu0 %v514
        %v788 = vpop.f32.mrf.mxu0
        %v789 = vadd.f32 0.0, %v788
        %v790 = vpop.f32.mrf.mxu0
        %v791 = vadd.f32 0.0, %v790
        %v792 = vpop.f32.mrf.mxu0
        %v793 = vadd.f32 0.0, %v792
        %v794 = vpop.f32.mrf.mxu0
        %v795 = vadd.f32 0.0, %v794
        %796 = vmatprep.mubr.bf16.mxu0 %v517
        %797 = vmatmul.mubr.bf16.gmra.mxu0 %v516
        %v798 = vpop.f32.mrf.mxu0
        %v799 = vadd.f32 0.0, %v798
        %v800 = vpop.f32.mrf.mxu0
        %v801 = vadd.f32 0.0, %v800
        %v802 = vpop.f32.mrf.mxu0
        %v803 = vadd.f32 0.0, %v802
        %v804 = vpop.f32.mrf.mxu0
        %v805 = vadd.f32 0.0, %v804
        %806 = vmatprep.mubr.bf16.mxu0 %v519
        %807 = vmatmul.mubr.bf16.gmra.mxu0 %v518
        %v808 = vpop.f32.mrf.mxu0
        %v809 = vadd.f32 0.0, %v808
        %v810 = vpop.f32.mrf.mxu0
        %v811 = vadd.f32 0.0, %v810
        %v812 = vpop.f32.mrf.mxu0
        %v813 = vadd.f32 0.0, %v812
        %v814 = vpop.f32.mrf.mxu0
        %v815 = vadd.f32 0.0, %v814
        %816 = vmatprep.mubr.bf16.mxu0 %v521
        %817 = vmatmul.mubr.bf16.gmra.mxu0 %v520
        %v818 = vpop.f32.mrf.mxu0
        %v819 = vadd.f32 0.0, %v818
        %v820 = vpop.f32.mrf.mxu0
        %v821 = vadd.f32 0.0, %v820
        %v822 = vpop.f32.mrf.mxu0
        %v823 = vadd.f32 0.0, %v822
        %v824 = vpop.f32.mrf.mxu0
        %v825 = vadd.f32 0.0, %v824
        %826 = vmatprep.mubr.bf16.mxu0 %v523
        %827 = vmatmul.mubr.bf16.gmra.mxu0 %v522
        %v828 = vpop.f32.mrf.mxu0
        %v829 = vadd.f32 0.0, %v828
        %v830 = vpop.f32.mrf.mxu0
        %v831 = vadd.f32 0.0, %v830
        %v832 = vpop.f32.mrf.mxu0
        %v833 = vadd.f32 0.0, %v832
        %v834 = vpop.f32.mrf.mxu0
        %v835 = vadd.f32 0.0, %v834
        %836 = vmatprep.mubr.bf16.mxu0 %v525
        %837 = vmatmul.mubr.bf16.gmra.mxu0 %v524
        %v838 = vpop.f32.mrf.mxu0
        %v839 = vadd.f32 0.0, %v838
        %v840 = vpop.f32.mrf.mxu0
        %v841 = vadd.f32 0.0, %v840
        %v842 = vpop.f32.mrf.mxu0
        %v843 = vadd.f32 0.0, %v842
        %v844 = vpop.f32.mrf.mxu0
        %v845 = vadd.f32 0.0, %v844
        %846 = vmatprep.mubr.bf16.mxu0 %v527
        %847 = vmatmul.mubr.bf16.gmra.mxu0 %v526
        %v848 = vpop.f32.mrf.mxu0
        %v849 = vadd.f32 0.0, %v848
        %v850 = vpop.f32.mrf.mxu0
        %v851 = vadd.f32 0.0, %v850
        %v852 = vpop.f32.mrf.mxu0
        %v853 = vadd.f32 0.0, %v852
        %v854 = vpop.f32.mrf.mxu0
        %v855 = vadd.f32 0.0, %v854
        %856 = vmatprep.mubr.bf16.mxu0 %v529
        %857 = vmatmul.mubr.bf16.gmra.mxu0 %v528
        %v858 = vpop.f32.mrf.mxu0
        %v859 = vadd.f32 0.0, %v858
        %v860 = vpop.f32.mrf.mxu0
        %v861 = vadd.f32 0.0, %v860
        %v862 = vpop.f32.mrf.mxu0
        %v863 = vadd.f32 0.0, %v862
        %v864 = vpop.f32.mrf.mxu0
        %v865 = vadd.f32 0.0, %v864
        %866 = vmatprep.mubr.bf16.mxu0 %v531
        %867 = vmatmul.mubr.bf16.gmra.mxu0 %v530
        %v868 = vpop.f32.mrf.mxu0
        %v869 = vadd.f32 0.0, %v868
        %v870 = vpop.f32.mrf.mxu0
        %v871 = vadd.f32 0.0, %v870
        %v872 = vpop.f32.mrf.mxu0
        %v873 = vadd.f32 0.0, %v872
        %v874 = vpop.f32.mrf.mxu0
        %v875 = vadd.f32 0.0, %v874
        %876 = vmatprep.mubr.bf16.mxu0 %v533
        %877 = vmatmul.mubr.bf16.gmra.mxu0 %v532
        %v878 = vpop.f32.mrf.mxu0
        %v879 = vadd.f32 0.0, %v878
        %v880 = vpop.f32.mrf.mxu0
        %v881 = vadd.f32 0.0, %v880
        %v882 = vpop.f32.mrf.mxu0
        %v883 = vadd.f32 0.0, %v882
        %v884 = vpop.f32.mrf.mxu0
        %v885 = vadd.f32 0.0, %v884
        %886 = vmatprep.mubr.bf16.mxu0 %v535
        %887 = vmatmul.mubr.bf16.gmra.mxu0 %v534
        %v888 = vpop.f32.mrf.mxu0
        %v889 = vadd.f32 0.0, %v888
        %v890 = vpop.f32.mrf.mxu0
        %v891 = vadd.f32 0.0, %v890
        %v892 = vpop.f32.mrf.mxu0
        %v893 = vadd.f32 0.0, %v892
        %v894 = vpop.f32.mrf.mxu0
        %v895 = vadd.f32 0.0, %v894
        %896 = vmatprep.mubr.bf16.mxu0 %v537
        %897 = vmatmul.mubr.bf16.gmra.mxu0 %v536
        %v898 = vpop.f32.mrf.mxu0
        %v899 = vadd.f32 0.0, %v898
        %v900 = vpop.f32.mrf.mxu0
        %v901 = vadd.f32 0.0, %v900
        %v902 = vpop.f32.mrf.mxu0
        %v903 = vadd.f32 0.0, %v902
        %v904 = vpop.f32.mrf.mxu0
        %v905 = vadd.f32 0.0, %v904
        %906 = vmatprep.mubr.bf16.mxu0 %v539
        %907 = vmatmul.mubr.bf16.gmra.mxu0 %v538
        %v908 = vpop.f32.mrf.mxu0
        %v909 = vadd.f32 0.0, %v908
        %v910 = vpop.f32.mrf.mxu0
        %v911 = vadd.f32 0.0, %v910
        %v912 = vpop.f32.mrf.mxu0
        %v913 = vadd.f32 0.0, %v912
        %v914 = vpop.f32.mrf.mxu0
        %v915 = vadd.f32 0.0, %v914
        %916 = vmatprep.mubr.bf16.mxu0 %v541
        %917 = vmatmul.mubr.bf16.gmra.mxu0 %v540
        %v918 = vpop.f32.mrf.mxu0
        %v919 = vadd.f32 0.0, %v918
        %v920 = vpop.f32.mrf.mxu0
        %v921 = vadd.f32 0.0, %v920
        %v922 = vpop.f32.mrf.mxu0
        %v923 = vadd.f32 0.0, %v922
        %v924 = vpop.f32.mrf.mxu0
        %v925 = vadd.f32 0.0, %v924
        %926 = vdwg.mxu0
        %v927 = vld [vmem:[%s298] sm:$0xff]
        %v928 = vld [vmem:[%s298 + $0x8] sm:$0xff]
        %v929 = vld [vmem:[%s298 + $0x10] sm:$0xff]
        %v930 = vld [vmem:[%s298 + $0x18] sm:$0xff]
        %v931 = vld [vmem:[%s298 + $0x20] sm:$0xff]
        %v932 = vld [vmem:[%s298 + $0x28] sm:$0xff]
        %v933 = vld [vmem:[%s298 + $0x30] sm:$0xff]
        %v934 = vld [vmem:[%s298 + $0x38] sm:$0xff]
        %v935 = vld [vmem:[%s298 + $0x40] sm:$0xff]
        %v936 = vld [vmem:[%s298 + $0x48] sm:$0xff]
        %v937 = vld [vmem:[%s298 + $0x50] sm:$0xff]
        %v938 = vld [vmem:[%s298 + $0x58] sm:$0xff]
        %v939 = vld [vmem:[%s298 + $0x60] sm:$0xff]
        %v940 = vld [vmem:[%s298 + $0x68] sm:$0xff]
        %v941 = vld [vmem:[%s298 + $0x70] sm:$0xff]
        %v942 = vld [vmem:[%s298 + $0x78] sm:$0xff]
        %v943 = vld [vmem:[%s298 + $0x80] sm:$0xff]
        %v944 = vld [vmem:[%s298 + $0x88] sm:$0xff]
        %v945 = vld [vmem:[%s298 + $0x90] sm:$0xff]
        %v946 = vld [vmem:[%s298 + $0x98] sm:$0xff]
        %v947 = vld [vmem:[%s298 + $0xa0] sm:$0xff]
        %v948 = vld [vmem:[%s298 + $0xa8] sm:$0xff]
        %v949 = vld [vmem:[%s298 + $0xb0] sm:$0xff]
        %v950 = vld [vmem:[%s298 + $0xb8] sm:$0xff]
        %v951 = vld [vmem:[%s298 + $0xc0] sm:$0xff]
        %v952 = vld [vmem:[%s298 + $0xc8] sm:$0xff]
        %v953 = vld [vmem:[%s298 + $0xd0] sm:$0xff]
        %v954 = vld [vmem:[%s298 + $0xd8] sm:$0xff]
        %v955 = vld [vmem:[%s298 + $0xe0] sm:$0xff]
        %v956 = vld [vmem:[%s298 + $0xe8] sm:$0xff]
        %v957 = vld [vmem:[%s298 + $0xf0] sm:$0xff]
        %v958 = vld [vmem:[%s298 + $0xf8] sm:$0xff]
        %v991 = vunpack.c.l.b16 %v927
        %v992 = vunpack.c.h.b16 %v927
        %v993 = vunpack.c.l.b16 %v928
        %v994 = vunpack.c.h.b16 %v928
        %v995 = vunpack.c.l.b16 %v929
        %v996 = vunpack.c.h.b16 %v929
        %v997 = vunpack.c.l.b16 %v930
        %v998 = vunpack.c.h.b16 %v930
        %v999 = vunpack.c.l.b16 %v931
        %v1000 = vunpack.c.h.b16 %v931
        %v1001 = vunpack.c.l.b16 %v932
        %v1002 = vunpack.c.h.b16 %v932
        %v1003 = vunpack.c.l.b16 %v933
        %v1004 = vunpack.c.h.b16 %v933
        %v1005 = vunpack.c.l.b16 %v934
        %v1006 = vunpack.c.h.b16 %v934
        %v1007 = vunpack.c.l.b16 %v935
        %v1008 = vunpack.c.h.b16 %v935
        %v1009 = vunpack.c.l.b16 %v936
        %v1010 = vunpack.c.h.b16 %v936
        %v1011 = vunpack.c.l.b16 %v937
        %v1012 = vunpack.c.h.b16 %v937
        %v1013 = vunpack.c.l.b16 %v938
        %v1014 = vunpack.c.h.b16 %v938
        %v1015 = vunpack.c.l.b16 %v939
        %v1016 = vunpack.c.h.b16 %v939
        %v1017 = vunpack.c.l.b16 %v940
        %v1018 = vunpack.c.h.b16 %v940
        %v1019 = vunpack.c.l.b16 %v941
        %v1020 = vunpack.c.h.b16 %v941
        %v1021 = vunpack.c.l.b16 %v942
        %v1022 = vunpack.c.h.b16 %v942
        %v1023 = vunpack.c.l.b16 %v943
        %v1024 = vunpack.c.h.b16 %v943
        %v1025 = vunpack.c.l.b16 %v944
        %v1026 = vunpack.c.h.b16 %v944
        %v1027 = vunpack.c.l.b16 %v945
        %v1028 = vunpack.c.h.b16 %v945
        %v1029 = vunpack.c.l.b16 %v946
        %v1030 = vunpack.c.h.b16 %v946
        %v1031 = vunpack.c.l.b16 %v947
        %v1032 = vunpack.c.h.b16 %v947
        %v1033 = vunpack.c.l.b16 %v948
        %v1034 = vunpack.c.h.b16 %v948
        %v1035 = vunpack.c.l.b16 %v949
        %v1036 = vunpack.c.h.b16 %v949
        %v1037 = vunpack.c.l.b16 %v950
        %v1038 = vunpack.c.h.b16 %v950
        %v1039 = vunpack.c.l.b16 %v951
        %v1040 = vunpack.c.h.b16 %v951
        %v1041 = vunpack.c.l.b16 %v952
        %v1042 = vunpack.c.h.b16 %v952
        %v1043 = vunpack.c.l.b16 %v953
        %v1044 = vunpack.c.h.b16 %v953
        %v1045 = vunpack.c.l.b16 %v954
        %v1046 = vunpack.c.h.b16 %v954
        %v1047 = vunpack.c.l.b16 %v955
        %v1048 = vunpack.c.h.b16 %v955
        %v1049 = vunpack.c.l.b16 %v956
        %v1050 = vunpack.c.h.b16 %v956
        %v1051 = vunpack.c.l.b16 %v957
        %v1052 = vunpack.c.h.b16 %v957
        %v1053 = vunpack.c.l.b16 %v958
        %v1054 = vunpack.c.h.b16 %v958
        %v1055 = vpack.c.b16 %v993, %v991
        %v1056 = vpack.c.b16 %v994, %v992
        %v1057 = vpack.c.b16 %v997, %v995
        %v1058 = vpack.c.b16 %v998, %v996
        %v1059 = vpack.c.b16 %v1001, %v999
        %v1060 = vpack.c.b16 %v1002, %v1000
        %v1061 = vpack.c.b16 %v1005, %v1003
        %v1062 = vpack.c.b16 %v1006, %v1004
        %v1063 = vpack.c.b16 %v1009, %v1007
        %v1064 = vpack.c.b16 %v1010, %v1008
        %v1065 = vpack.c.b16 %v1013, %v1011
        %v1066 = vpack.c.b16 %v1014, %v1012
        %v1067 = vpack.c.b16 %v1017, %v1015
        %v1068 = vpack.c.b16 %v1018, %v1016
        %v1069 = vpack.c.b16 %v1021, %v1019
        %v1070 = vpack.c.b16 %v1022, %v1020
        %v1071 = vpack.c.b16 %v1025, %v1023
        %v1072 = vpack.c.b16 %v1026, %v1024
        %v1073 = vpack.c.b16 %v1029, %v1027
        %v1074 = vpack.c.b16 %v1030, %v1028
        %v1075 = vpack.c.b16 %v1033, %v1031
        %v1076 = vpack.c.b16 %v1034, %v1032
        %v1077 = vpack.c.b16 %v1037, %v1035
        %v1078 = vpack.c.b16 %v1038, %v1036
        %v1079 = vpack.c.b16 %v1041, %v1039
        %v1080 = vpack.c.b16 %v1042, %v1040
        %v1081 = vpack.c.b16 %v1045, %v1043
        %v1082 = vpack.c.b16 %v1046, %v1044
        %v1083 = vpack.c.b16 %v1049, %v1047
        %v1084 = vpack.c.b16 %v1050, %v1048
        %v1085 = vpack.c.b16 %v1053, %v1051
        %v1086 = vpack.c.b16 %v1054, %v1052
        %1119 = vmatprep.subr.bf16.mxu0 %v1070
        %1120 = vmatpush1.bf16.msra.mxu0 %v1069
        %1121 = vmatprep.subr.bf16.mxu0 %v1068
        %1122 = vmatpush1.bf16.msra.mxu0 %v1067
        %1123 = vmatprep.subr.bf16.mxu0 %v1066
        %1124 = vmatpush1.bf16.msra.mxu0 %v1065
        %1125 = vmatprep.subr.bf16.mxu0 %v1064
        %1126 = vmatpush1.bf16.msra.mxu0 %v1063
        %1127 = vmatprep.subr.bf16.mxu0 %v1062
        %1128 = vmatpush1.bf16.msra.mxu0 %v1061
        %1129 = vmatprep.subr.bf16.mxu0 %v1060
        %1130 = vmatpush1.bf16.msra.mxu0 %v1059
        %1131 = vmatprep.subr.bf16.mxu0 %v1058
        %1132 = vmatpush1.bf16.msra.mxu0 %v1057
        %1133 = vmatprep.subr.bf16.mxu0 %v1056
        %1134 = vmatpush1.bf16.msra.mxu0 %v1055
        %1135 = vmatprep.subr.bf16.mxu0 %v1086
        %1136 = vmatpush2.bf16.msra.mxu0 %v1085
        %1137 = vmatprep.subr.bf16.mxu0 %v1084
        %1138 = vmatpush2.bf16.msra.mxu0 %v1083
        %1139 = vmatprep.subr.bf16.mxu0 %v1082
        %1140 = vmatpush2.bf16.msra.mxu0 %v1081
        %1141 = vmatprep.subr.bf16.mxu0 %v1080
        %1142 = vmatpush2.bf16.msra.mxu0 %v1079
        %1143 = vmatprep.subr.bf16.mxu0 %v1078
        %1144 = vmatpush2.bf16.msra.mxu0 %v1077
        %1145 = vmatprep.subr.bf16.mxu0 %v1076
        %1146 = vmatpush2.bf16.msra.mxu0 %v1075
        %1147 = vmatprep.subr.bf16.mxu0 %v1074
        %1148 = vmatpush2.bf16.msra.mxu0 %v1073
        %1149 = vmatprep.subr.bf16.mxu0 %v1072
        %1150 = vmatpush2.bf16.msra.mxu0 %v1071
        %1151 = vmatprep.mubr.bf16.mxu0 %v511
        %1152 = vmatmul.mubr.bf16.gmra.mxu0 %v510
        %v1153 = vpop.f32.mrf.mxu0
        %v1154 = vadd.f32 0.0, %v1153
        %v1155 = vpop.f32.mrf.mxu0
        %v1156 = vadd.f32 0.0, %v1155
        %v1157 = vpop.f32.mrf.mxu0
        %v1158 = vadd.f32 0.0, %v1157
        %v1159 = vpop.f32.mrf.mxu0
        %v1160 = vadd.f32 0.0, %v1159
        %1161 = vmatprep.mubr.bf16.mxu0 %v513
        %1162 = vmatmul.mubr.bf16.gmra.mxu0 %v512
        %v1163 = vpop.f32.mrf.mxu0
        %v1164 = vadd.f32 0.0, %v1163
        %v1165 = vpop.f32.mrf.mxu0
        %v1166 = vadd.f32 0.0, %v1165
        %v1167 = vpop.f32.mrf.mxu0
        %v1168 = vadd.f32 0.0, %v1167
        %v1169 = vpop.f32.mrf.mxu0
        %v1170 = vadd.f32 0.0, %v1169
        %1171 = vmatprep.mubr.bf16.mxu0 %v515
        %1172 = vmatmul.mubr.bf16.gmra.mxu0 %v514
        %v1173 = vpop.f32.mrf.mxu0
        %v1174 = vadd.f32 0.0, %v1173
        %v1175 = vpop.f32.mrf.mxu0
        %v1176 = vadd.f32 0.0, %v1175
        %v1177 = vpop.f32.mrf.mxu0
        %v1178 = vadd.f32 0.0, %v1177
        %v1179 = vpop.f32.mrf.mxu0
        %v1180 = vadd.f32 0.0, %v1179
        %1181 = vmatprep.mubr.bf16.mxu0 %v517
        %1182 = vmatmul.mubr.bf16.gmra.mxu0 %v516
        %v1183 = vpop.f32.mrf.mxu0
        %v1184 = vadd.f32 0.0, %v1183
        %v1185 = vpop.f32.mrf.mxu0
        %v1186 = vadd.f32 0.0, %v1185
        %v1187 = vpop.f32.mrf.mxu0
        %v1188 = vadd.f32 0.0, %v1187
        %v1189 = vpop.f32.mrf.mxu0
        %v1190 = vadd.f32 0.0, %v1189
        %1191 = vmatprep.mubr.bf16.mxu0 %v519
        %1192 = vmatmul.mubr.bf16.gmra.mxu0 %v518
        %v1193 = vpop.f32.mrf.mxu0
        %v1194 = vadd.f32 0.0, %v1193
        %v1195 = vpop.f32.mrf.mxu0
        %v1196 = vadd.f32 0.0, %v1195
        %v1197 = vpop.f32.mrf.mxu0
        %v1198 = vadd.f32 0.0, %v1197
        %v1199 = vpop.f32.mrf.mxu0
        %v1200 = vadd.f32 0.0, %v1199
        %1201 = vmatprep.mubr.bf16.mxu0 %v521
        %1202 = vmatmul.mubr.bf16.gmra.mxu0 %v520
        %v1203 = vpop.f32.mrf.mxu0
        %v1204 = vadd.f32 0.0, %v1203
        %v1205 = vpop.f32.mrf.mxu0
        %v1206 = vadd.f32 0.0, %v1205
        %v1207 = vpop.f32.mrf.mxu0
        %v1208 = vadd.f32 0.0, %v1207
        %v1209 = vpop.f32.mrf.mxu0
        %v1210 = vadd.f32 0.0, %v1209
        %1211 = vmatprep.mubr.bf16.mxu0 %v523
        %1212 = vmatmul.mubr.bf16.gmra.mxu0 %v522
        %v1213 = vpop.f32.mrf.mxu0
        %v1214 = vadd.f32 0.0, %v1213
        %v1215 = vpop.f32.mrf.mxu0
        %v1216 = vadd.f32 0.0, %v1215
        %v1217 = vpop.f32.mrf.mxu0
        %v1218 = vadd.f32 0.0, %v1217
        %v1219 = vpop.f32.mrf.mxu0
        %v1220 = vadd.f32 0.0, %v1219
        %1221 = vmatprep.mubr.bf16.mxu0 %v525
        %1222 = vmatmul.mubr.bf16.gmra.mxu0 %v524
        %v1223 = vpop.f32.mrf.mxu0
        %v1224 = vadd.f32 0.0, %v1223
        %v1225 = vpop.f32.mrf.mxu0
        %v1226 = vadd.f32 0.0, %v1225
        %v1227 = vpop.f32.mrf.mxu0
        %v1228 = vadd.f32 0.0, %v1227
        %v1229 = vpop.f32.mrf.mxu0
        %v1230 = vadd.f32 0.0, %v1229
        %1231 = vmatprep.mubr.bf16.mxu0 %v527
        %1232 = vmatmul.mubr.bf16.gmra.mxu0 %v526
        %v1233 = vpop.f32.mrf.mxu0
        %v1234 = vadd.f32 0.0, %v1233
        %v1235 = vpop.f32.mrf.mxu0
        %v1236 = vadd.f32 0.0, %v1235
        %v1237 = vpop.f32.mrf.mxu0
        %v1238 = vadd.f32 0.0, %v1237
        %v1239 = vpop.f32.mrf.mxu0
        %v1240 = vadd.f32 0.0, %v1239
        %1241 = vmatprep.mubr.bf16.mxu0 %v529
        %1242 = vmatmul.mubr.bf16.gmra.mxu0 %v528
        %v1243 = vpop.f32.mrf.mxu0
        %v1244 = vadd.f32 0.0, %v1243
        %v1245 = vpop.f32.mrf.mxu0
        %v1246 = vadd.f32 0.0, %v1245
        %v1247 = vpop.f32.mrf.mxu0
        %v1248 = vadd.f32 0.0, %v1247
        %v1249 = vpop.f32.mrf.mxu0
        %v1250 = vadd.f32 0.0, %v1249
        %1251 = vmatprep.mubr.bf16.mxu0 %v531
        %1252 = vmatmul.mubr.bf16.gmra.mxu0 %v530
        %v1253 = vpop.f32.mrf.mxu0
        %v1254 = vadd.f32 0.0, %v1253
        %v1255 = vpop.f32.mrf.mxu0
        %v1256 = vadd.f32 0.0, %v1255
        %v1257 = vpop.f32.mrf.mxu0
        %v1258 = vadd.f32 0.0, %v1257
        %v1259 = vpop.f32.mrf.mxu0
        %v1260 = vadd.f32 0.0, %v1259
        %1261 = vmatprep.mubr.bf16.mxu0 %v533
        %1262 = vmatmul.mubr.bf16.gmra.mxu0 %v532
        %v1263 = vpop.f32.mrf.mxu0
        %v1264 = vadd.f32 0.0, %v1263
        %v1265 = vpop.f32.mrf.mxu0
        %v1266 = vadd.f32 0.0, %v1265
        %v1267 = vpop.f32.mrf.mxu0
        %v1268 = vadd.f32 0.0, %v1267
        %v1269 = vpop.f32.mrf.mxu0
        %v1270 = vadd.f32 0.0, %v1269
        %1271 = vmatprep.mubr.bf16.mxu0 %v535
        %1272 = vmatmul.mubr.bf16.gmra.mxu0 %v534
        %v1273 = vpop.f32.mrf.mxu0
        %v1274 = vadd.f32 0.0, %v1273
        %v1275 = vpop.f32.mrf.mxu0
        %v1276 = vadd.f32 0.0, %v1275
        %v1277 = vpop.f32.mrf.mxu0
        %v1278 = vadd.f32 0.0, %v1277
        %v1279 = vpop.f32.mrf.mxu0
        %v1280 = vadd.f32 0.0, %v1279
        %1281 = vmatprep.mubr.bf16.mxu0 %v537
        %1282 = vmatmul.mubr.bf16.gmra.mxu0 %v536
        %v1283 = vpop.f32.mrf.mxu0
        %v1284 = vadd.f32 0.0, %v1283
        %v1285 = vpop.f32.mrf.mxu0
        %v1286 = vadd.f32 0.0, %v1285
        %v1287 = vpop.f32.mrf.mxu0
        %v1288 = vadd.f32 0.0, %v1287
        %v1289 = vpop.f32.mrf.mxu0
        %v1290 = vadd.f32 0.0, %v1289
        %1291 = vmatprep.mubr.bf16.mxu0 %v539
        %1292 = vmatmul.mubr.bf16.gmra.mxu0 %v538
        %v1293 = vpop.f32.mrf.mxu0
        %v1294 = vadd.f32 0.0, %v1293
        %v1295 = vpop.f32.mrf.mxu0
        %v1296 = vadd.f32 0.0, %v1295
        %v1297 = vpop.f32.mrf.mxu0
        %v1298 = vadd.f32 0.0, %v1297
        %v1299 = vpop.f32.mrf.mxu0
        %v1300 = vadd.f32 0.0, %v1299
        %1301 = vmatprep.mubr.bf16.mxu0 %v541
        %1302 = vmatmul.mubr.bf16.gmra.mxu0 %v540
        %v1303 = vpop.f32.mrf.mxu0
        %v1304 = vadd.f32 0.0, %v1303
        %v1305 = vpop.f32.mrf.mxu0
        %v1306 = vadd.f32 0.0, %v1305
        %v1307 = vpop.f32.mrf.mxu0
        %v1308 = vadd.f32 0.0, %v1307
        %v1309 = vpop.f32.mrf.mxu0
        %v1310 = vadd.f32 0.0, %v1309
        %1311 = vdwg.mxu0
        %v1312 = vxor.u32 %v769, 2147483648
        %v1313 = vxor.u32 %v771, 2147483648
        %v1314 = vxor.u32 %v773, 2147483648
        %v1315 = vxor.u32 %v775, 2147483648
        %v1316 = vxor.u32 %v779, 2147483648
        %v1317 = vxor.u32 %v781, 2147483648
        %v1318 = vxor.u32 %v783, 2147483648
        %v1319 = vxor.u32 %v785, 2147483648
        %v1320 = vxor.u32 %v789, 2147483648
        %v1321 = vxor.u32 %v791, 2147483648
        %v1322 = vxor.u32 %v793, 2147483648
        %v1323 = vxor.u32 %v795, 2147483648
        %v1324 = vxor.u32 %v799, 2147483648
        %v1325 = vxor.u32 %v801, 2147483648
        %v1326 = vxor.u32 %v803, 2147483648
        %v1327 = vxor.u32 %v805, 2147483648
        %v1328 = vxor.u32 %v809, 2147483648
        %v1329 = vxor.u32 %v811, 2147483648
        %v1330 = vxor.u32 %v813, 2147483648
        %v1331 = vxor.u32 %v815, 2147483648
        %v1332 = vxor.u32 %v819, 2147483648
        %v1333 = vxor.u32 %v821, 2147483648
        %v1334 = vxor.u32 %v823, 2147483648
        %v1335 = vxor.u32 %v825, 2147483648
        %v1336 = vxor.u32 %v829, 2147483648
        %v1337 = vxor.u32 %v831, 2147483648
        %v1338 = vxor.u32 %v833, 2147483648
        %v1339 = vxor.u32 %v835, 2147483648
        %v1340 = vxor.u32 %v839, 2147483648
        %v1341 = vxor.u32 %v841, 2147483648
        %v1342 = vxor.u32 %v843, 2147483648
        %v1343 = vxor.u32 %v845, 2147483648
        %v1344 = vxor.u32 %v849, 2147483648
        %v1345 = vxor.u32 %v851, 2147483648
        %v1346 = vxor.u32 %v853, 2147483648
        %v1347 = vxor.u32 %v855, 2147483648
        %v1348 = vxor.u32 %v859, 2147483648
        %v1349 = vxor.u32 %v861, 2147483648
        %v1350 = vxor.u32 %v863, 2147483648
        %v1351 = vxor.u32 %v865, 2147483648
        %v1352 = vxor.u32 %v869, 2147483648
        %v1353 = vxor.u32 %v871, 2147483648
        %v1354 = vxor.u32 %v873, 2147483648
        %v1355 = vxor.u32 %v875, 2147483648
        %v1356 = vxor.u32 %v879, 2147483648
        %v1357 = vxor.u32 %v881, 2147483648
        %v1358 = vxor.u32 %v883, 2147483648
        %v1359 = vxor.u32 %v885, 2147483648
        %v1360 = vxor.u32 %v889, 2147483648
        %v1361 = vxor.u32 %v891, 2147483648
        %v1362 = vxor.u32 %v893, 2147483648
        %v1363 = vxor.u32 %v895, 2147483648
        %v1364 = vxor.u32 %v899, 2147483648
        %v1365 = vxor.u32 %v901, 2147483648
        %v1366 = vxor.u32 %v903, 2147483648
        %v1367 = vxor.u32 %v905, 2147483648
        %v1368 = vxor.u32 %v909, 2147483648
        %v1369 = vxor.u32 %v911, 2147483648
        %v1370 = vxor.u32 %v913, 2147483648
        %v1371 = vxor.u32 %v915, 2147483648
        %v1372 = vxor.u32 %v919, 2147483648
        %v1373 = vxor.u32 %v921, 2147483648
        %v1374 = vxor.u32 %v923, 2147483648
        %v1375 = vxor.u32 %v925, 2147483648
        %v1376 = vmul.f32 %v1312, 1.442695
        %v1377 = vpow.pop %v1376
        %v1378 = vmul.f32 %v1313, 1.442695
        %v1379 = vpow.pop %v1378
        %v1380 = vmul.f32 %v1314, 1.442695
        %v1381 = vpow.pop %v1380
        %v1382 = vmul.f32 %v1315, 1.442695
        %v1383 = vpow.pop %v1382
        %v1384 = vmul.f32 %v1316, 1.442695
        %v1385 = vpow.pop %v1384
        %v1386 = vmul.f32 %v1317, 1.442695
        %v1387 = vpow.pop %v1386
        %v1388 = vmul.f32 %v1318, 1.442695
        %v1389 = vpow.pop %v1388
        %v1390 = vmul.f32 %v1319, 1.442695
        %v1391 = vpow.pop %v1390
        %v1392 = vmul.f32 %v1320, 1.442695
        %v1393 = vpow.pop %v1392
        %v1394 = vmul.f32 %v1321, 1.442695
        %v1395 = vpow.pop %v1394
        %v1396 = vmul.f32 %v1322, 1.442695
        %v1397 = vpow.pop %v1396
        %v1398 = vmul.f32 %v1323, 1.442695
        %v1399 = vpow.pop %v1398
        %v1400 = vmul.f32 %v1324, 1.442695
        %v1401 = vpow.pop %v1400
        %v1402 = vmul.f32 %v1325, 1.442695
        %v1403 = vpow.pop %v1402
        %v1404 = vmul.f32 %v1326, 1.442695
        %v1405 = vpow.pop %v1404
        %v1406 = vmul.f32 %v1327, 1.442695
        %v1407 = vpow.pop %v1406
        %v1408 = vmul.f32 %v1328, 1.442695
        %v1409 = vpow.pop %v1408
        %v1410 = vmul.f32 %v1329, 1.442695
        %v1411 = vpow.pop %v1410
        %v1412 = vmul.f32 %v1330, 1.442695
        %v1413 = vpow.pop %v1412
        %v1414 = vmul.f32 %v1331, 1.442695
        %v1415 = vpow.pop %v1414
        %v1416 = vmul.f32 %v1332, 1.442695
        %v1417 = vpow.pop %v1416
        %v1418 = vmul.f32 %v1333, 1.442695
        %v1419 = vpow.pop %v1418
        %v1420 = vmul.f32 %v1334, 1.442695
        %v1421 = vpow.pop %v1420
        %v1422 = vmul.f32 %v1335, 1.442695
        %v1423 = vpow.pop %v1422
        %v1424 = vmul.f32 %v1336, 1.442695
        %v1425 = vpow.pop %v1424
        %v1426 = vmul.f32 %v1337, 1.442695
        %v1427 = vpow.pop %v1426
        %v1428 = vmul.f32 %v1338, 1.442695
        %v1429 = vpow.pop %v1428
        %v1430 = vmul.f32 %v1339, 1.442695
        %v1431 = vpow.pop %v1430
        %v1432 = vmul.f32 %v1340, 1.442695
        %v1433 = vpow.pop %v1432
        %v1434 = vmul.f32 %v1341, 1.442695
        %v1435 = vpow.pop %v1434
        %v1436 = vmul.f32 %v1342, 1.442695
        %v1437 = vpow.pop %v1436
        %v1438 = vmul.f32 %v1343, 1.442695
        %v1439 = vpow.pop %v1438
        %v1440 = vmul.f32 %v1344, 1.442695
        %v1441 = vpow.pop %v1440
        %v1442 = vmul.f32 %v1345, 1.442695
        %v1443 = vpow.pop %v1442
        %v1444 = vmul.f32 %v1346, 1.442695
        %v1445 = vpow.pop %v1444
        %v1446 = vmul.f32 %v1347, 1.442695
        %v1447 = vpow.pop %v1446
        %v1448 = vmul.f32 %v1348, 1.442695
        %v1449 = vpow.pop %v1448
        %v1450 = vmul.f32 %v1349, 1.442695
        %v1451 = vpow.pop %v1450
        %v1452 = vmul.f32 %v1350, 1.442695
        %v1453 = vpow.pop %v1452
        %v1454 = vmul.f32 %v1351, 1.442695
        %v1455 = vpow.pop %v1454
        %v1456 = vmul.f32 %v1352, 1.442695
        %v1457 = vpow.pop %v1456
        %v1458 = vmul.f32 %v1353, 1.442695
        %v1459 = vpow.pop %v1458
        %v1460 = vmul.f32 %v1354, 1.442695
        %v1461 = vpow.pop %v1460
        %v1462 = vmul.f32 %v1355, 1.442695
        %v1463 = vpow.pop %v1462
        %v1464 = vmul.f32 %v1356, 1.442695
        %v1465 = vpow.pop %v1464
        %v1466 = vmul.f32 %v1357, 1.442695
        %v1467 = vpow.pop %v1466
        %v1468 = vmul.f32 %v1358, 1.442695
        %v1469 = vpow.pop %v1468
        %v1470 = vmul.f32 %v1359, 1.442695
        %v1471 = vpow.pop %v1470
        %v1472 = vmul.f32 %v1360, 1.442695
        %v1473 = vpow.pop %v1472
        %v1474 = vmul.f32 %v1361, 1.442695
        %v1475 = vpow.pop %v1474
        %v1476 = vmul.f32 %v1362, 1.442695
        %v1477 = vpow.pop %v1476
        %v1478 = vmul.f32 %v1363, 1.442695
        %v1479 = vpow.pop %v1478
        %v1480 = vmul.f32 %v1364, 1.442695
        %v1481 = vpow.pop %v1480
        %v1482 = vmul.f32 %v1365, 1.442695
        %v1483 = vpow.pop %v1482
        %v1484 = vmul.f32 %v1366, 1.442695
        %v1485 = vpow.pop %v1484
        %v1486 = vmul.f32 %v1367, 1.442695
        %v1487 = vpow.pop %v1486
        %v1488 = vmul.f32 %v1368, 1.442695
        %v1489 = vpow.pop %v1488
        %v1490 = vmul.f32 %v1369, 1.442695
        %v1491 = vpow.pop %v1490
        %v1492 = vmul.f32 %v1370, 1.442695
        %v1493 = vpow.pop %v1492
        %v1494 = vmul.f32 %v1371, 1.442695
        %v1495 = vpow.pop %v1494
        %v1496 = vmul.f32 %v1372, 1.442695
        %v1497 = vpow.pop %v1496
        %v1498 = vmul.f32 %v1373, 1.442695
        %v1499 = vpow.pop %v1498
        %v1500 = vmul.f32 %v1374, 1.442695
        %v1501 = vpow.pop %v1500
        %v1502 = vmul.f32 %v1375, 1.442695
        %v1503 = vpow.pop %v1502
        %v1504 = vadd.f32 %v1377, 1.0
        %v1505 = vadd.f32 %v1379, 1.0
        %v1506 = vadd.f32 %v1381, 1.0
        %v1507 = vadd.f32 %v1383, 1.0
        %v1508 = vadd.f32 %v1385, 1.0
        %v1509 = vadd.f32 %v1387, 1.0
        %v1510 = vadd.f32 %v1389, 1.0
        %v1511 = vadd.f32 %v1391, 1.0
        %v1512 = vadd.f32 %v1393, 1.0
        %v1513 = vadd.f32 %v1395, 1.0
        %v1514 = vadd.f32 %v1397, 1.0
        %v1515 = vadd.f32 %v1399, 1.0
        %v1516 = vadd.f32 %v1401, 1.0
        %v1517 = vadd.f32 %v1403, 1.0
        %v1518 = vadd.f32 %v1405, 1.0
        %v1519 = vadd.f32 %v1407, 1.0
        %v1520 = vadd.f32 %v1409, 1.0
        %v1521 = vadd.f32 %v1411, 1.0
        %v1522 = vadd.f32 %v1413, 1.0
        %v1523 = vadd.f32 %v1415, 1.0
        %v1524 = vadd.f32 %v1417, 1.0
        %v1525 = vadd.f32 %v1419, 1.0
        %v1526 = vadd.f32 %v1421, 1.0
        %v1527 = vadd.f32 %v1423, 1.0
        %v1528 = vadd.f32 %v1425, 1.0
        %v1529 = vadd.f32 %v1427, 1.0
        %v1530 = vadd.f32 %v1429, 1.0
        %v1531 = vadd.f32 %v1431, 1.0
        %v1532 = vadd.f32 %v1433, 1.0
        %v1533 = vadd.f32 %v1435, 1.0
        %v1534 = vadd.f32 %v1437, 1.0
        %v1535 = vadd.f32 %v1439, 1.0
        %v1536 = vadd.f32 %v1441, 1.0
        %v1537 = vadd.f32 %v1443, 1.0
        %v1538 = vadd.f32 %v1445, 1.0
        %v1539 = vadd.f32 %v1447, 1.0
        %v1540 = vadd.f32 %v1449, 1.0
        %v1541 = vadd.f32 %v1451, 1.0
        %v1542 = vadd.f32 %v1453, 1.0
        %v1543 = vadd.f32 %v1455, 1.0
        %v1544 = vadd.f32 %v1457, 1.0
        %v1545 = vadd.f32 %v1459, 1.0
        %v1546 = vadd.f32 %v1461, 1.0
        %v1547 = vadd.f32 %v1463, 1.0
        %v1548 = vadd.f32 %v1465, 1.0
        %v1549 = vadd.f32 %v1467, 1.0
        %v1550 = vadd.f32 %v1469, 1.0
        %v1551 = vadd.f32 %v1471, 1.0
        %v1552 = vadd.f32 %v1473, 1.0
        %v1553 = vadd.f32 %v1475, 1.0
        %v1554 = vadd.f32 %v1477, 1.0
        %v1555 = vadd.f32 %v1479, 1.0
        %v1556 = vadd.f32 %v1481, 1.0
        %v1557 = vadd.f32 %v1483, 1.0
        %v1558 = vadd.f32 %v1485, 1.0
        %v1559 = vadd.f32 %v1487, 1.0
        %v1560 = vadd.f32 %v1489, 1.0
        %v1561 = vadd.f32 %v1491, 1.0
        %v1562 = vadd.f32 %v1493, 1.0
        %v1563 = vadd.f32 %v1495, 1.0
        %v1564 = vadd.f32 %v1497, 1.0
        %v1565 = vadd.f32 %v1499, 1.0
        %v1566 = vadd.f32 %v1501, 1.0
        %v1567 = vadd.f32 %v1503, 1.0
        %v1568 = vrcp.pop %v1504
        %v1569 = vmul.f32 1.0, %v1568
        %v1570 = vrcp.pop %v1505
        %v1571 = vmul.f32 1.0, %v1570
        %v1572 = vrcp.pop %v1506
        %v1573 = vmul.f32 1.0, %v1572
        %v1574 = vrcp.pop %v1507
        %v1575 = vmul.f32 1.0, %v1574
        %v1576 = vrcp.pop %v1508
        %v1577 = vmul.f32 1.0, %v1576
        %v1578 = vrcp.pop %v1509
        %v1579 = vmul.f32 1.0, %v1578
        %v1580 = vrcp.pop %v1510
        %v1581 = vmul.f32 1.0, %v1580
        %v1582 = vrcp.pop %v1511
        %v1583 = vmul.f32 1.0, %v1582
        %v1584 = vrcp.pop %v1512
        %v1585 = vmul.f32 1.0, %v1584
        %v1586 = vrcp.pop %v1513
        %v1587 = vmul.f32 1.0, %v1586
        %v1588 = vrcp.pop %v1514
        %v1589 = vmul.f32 1.0, %v1588
        %v1590 = vrcp.pop %v1515
        %v1591 = vmul.f32 1.0, %v1590
        %v1592 = vrcp.pop %v1516
        %v1593 = vmul.f32 1.0, %v1592
        %v1594 = vrcp.pop %v1517
        %v1595 = vmul.f32 1.0, %v1594
        %v1596 = vrcp.pop %v1518
        %v1597 = vmul.f32 1.0, %v1596
        %v1598 = vrcp.pop %v1519
        %v1599 = vmul.f32 1.0, %v1598
        %v1600 = vrcp.pop %v1520
        %v1601 = vmul.f32 1.0, %v1600
        %v1602 = vrcp.pop %v1521
        %v1603 = vmul.f32 1.0, %v1602
        %v1604 = vrcp.pop %v1522
        %v1605 = vmul.f32 1.0, %v1604
        %v1606 = vrcp.pop %v1523
        %v1607 = vmul.f32 1.0, %v1606
        %v1608 = vrcp.pop %v1524
        %v1609 = vmul.f32 1.0, %v1608
        %v1610 = vrcp.pop %v1525
        %v1611 = vmul.f32 1.0, %v1610
        %v1612 = vrcp.pop %v1526
        %v1613 = vmul.f32 1.0, %v1612
        %v1614 = vrcp.pop %v1527
        %v1615 = vmul.f32 1.0, %v1614
        %v1616 = vrcp.pop %v1528
        %v1617 = vmul.f32 1.0, %v1616
        %v1618 = vrcp.pop %v1529
        %v1619 = vmul.f32 1.0, %v1618
        %v1620 = vrcp.pop %v1530
        %v1621 = vmul.f32 1.0, %v1620
        %v1622 = vrcp.pop %v1531
        %v1623 = vmul.f32 1.0, %v1622
        %v1624 = vrcp.pop %v1532
        %v1625 = vmul.f32 1.0, %v1624
        %v1626 = vrcp.pop %v1533
        %v1627 = vmul.f32 1.0, %v1626
        %v1628 = vrcp.pop %v1534
        %v1629 = vmul.f32 1.0, %v1628
        %v1630 = vrcp.pop %v1535
        %v1631 = vmul.f32 1.0, %v1630
        %v1632 = vrcp.pop %v1536
        %v1633 = vmul.f32 1.0, %v1632
        %v1634 = vrcp.pop %v1537
        %v1635 = vmul.f32 1.0, %v1634
        %v1636 = vrcp.pop %v1538
        %v1637 = vmul.f32 1.0, %v1636
        %v1638 = vrcp.pop %v1539
        %v1639 = vmul.f32 1.0, %v1638
        %v1640 = vrcp.pop %v1540
        %v1641 = vmul.f32 1.0, %v1640
        %v1642 = vrcp.pop %v1541
        %v1643 = vmul.f32 1.0, %v1642
        %v1644 = vrcp.pop %v1542
        %v1645 = vmul.f32 1.0, %v1644
        %v1646 = vrcp.pop %v1543
        %v1647 = vmul.f32 1.0, %v1646
        %v1648 = vrcp.pop %v1544
        %v1649 = vmul.f32 1.0, %v1648
        %v1650 = vrcp.pop %v1545
        %v1651 = vmul.f32 1.0, %v1650
        %v1652 = vrcp.pop %v1546
        %v1653 = vmul.f32 1.0, %v1652
        %v1654 = vrcp.pop %v1547
        %v1655 = vmul.f32 1.0, %v1654
        %v1656 = vrcp.pop %v1548
        %v1657 = vmul.f32 1.0, %v1656
        %v1658 = vrcp.pop %v1549
        %v1659 = vmul.f32 1.0, %v1658
        %v1660 = vrcp.pop %v1550
        %v1661 = vmul.f32 1.0, %v1660
        %v1662 = vrcp.pop %v1551
        %v1663 = vmul.f32 1.0, %v1662
        %v1664 = vrcp.pop %v1552
        %v1665 = vmul.f32 1.0, %v1664
        %v1666 = vrcp.pop %v1553
        %v1667 = vmul.f32 1.0, %v1666
        %v1668 = vrcp.pop %v1554
        %v1669 = vmul.f32 1.0, %v1668
        %v1670 = vrcp.pop %v1555
        %v1671 = vmul.f32 1.0, %v1670
        %v1672 = vrcp.pop %v1556
        %v1673 = vmul.f32 1.0, %v1672
        %v1674 = vrcp.pop %v1557
        %v1675 = vmul.f32 1.0, %v1674
        %v1676 = vrcp.pop %v1558
        %v1677 = vmul.f32 1.0, %v1676
        %v1678 = vrcp.pop %v1559
        %v1679 = vmul.f32 1.0, %v1678
        %v1680 = vrcp.pop %v1560
        %v1681 = vmul.f32 1.0, %v1680
        %v1682 = vrcp.pop %v1561
        %v1683 = vmul.f32 1.0, %v1682
        %v1684 = vrcp.pop %v1562
        %v1685 = vmul.f32 1.0, %v1684
        %v1686 = vrcp.pop %v1563
        %v1687 = vmul.f32 1.0, %v1686
        %v1688 = vrcp.pop %v1564
        %v1689 = vmul.f32 1.0, %v1688
        %v1690 = vrcp.pop %v1565
        %v1691 = vmul.f32 1.0, %v1690
        %v1692 = vrcp.pop %v1566
        %v1693 = vmul.f32 1.0, %v1692
        %v1694 = vrcp.pop %v1567
        %v1695 = vmul.f32 1.0, %v1694
        %v1696 = vmul.f32 %v769, %v1569
        %v1697 = vmul.f32 %v771, %v1571
        %v1698 = vmul.f32 %v773, %v1573
        %v1699 = vmul.f32 %v775, %v1575
        %v1700 = vmul.f32 %v779, %v1577
        %v1701 = vmul.f32 %v781, %v1579
        %v1702 = vmul.f32 %v783, %v1581
        %v1703 = vmul.f32 %v785, %v1583
        %v1704 = vmul.f32 %v789, %v1585
        %v1705 = vmul.f32 %v791, %v1587
        %v1706 = vmul.f32 %v793, %v1589
        %v1707 = vmul.f32 %v795, %v1591
        %v1708 = vmul.f32 %v799, %v1593
        %v1709 = vmul.f32 %v801, %v1595
        %v1710 = vmul.f32 %v803, %v1597
        %v1711 = vmul.f32 %v805, %v1599
        %v1712 = vmul.f32 %v809, %v1601
        %v1713 = vmul.f32 %v811, %v1603
        %v1714 = vmul.f32 %v813, %v1605
        %v1715 = vmul.f32 %v815, %v1607
        %v1716 = vmul.f32 %v819, %v1609
        %v1717 = vmul.f32 %v821, %v1611
        %v1718 = vmul.f32 %v823, %v1613
        %v1719 = vmul.f32 %v825, %v1615
        %v1720 = vmul.f32 %v829, %v1617
        %v1721 = vmul.f32 %v831, %v1619
        %v1722 = vmul.f32 %v833, %v1621
        %v1723 = vmul.f32 %v835, %v1623
        %v1724 = vmul.f32 %v839, %v1625
        %v1725 = vmul.f32 %v841, %v1627
        %v1726 = vmul.f32 %v843, %v1629
        %v1727 = vmul.f32 %v845, %v1631
        %v1728 = vmul.f32 %v849, %v1633
        %v1729 = vmul.f32 %v851, %v1635
        %v1730 = vmul.f32 %v853, %v1637
        %v1731 = vmul.f32 %v855, %v1639
        %v1732 = vmul.f32 %v859, %v1641
        %v1733 = vmul.f32 %v861, %v1643
        %v1734 = vmul.f32 %v863, %v1645
        %v1735 = vmul.f32 %v865, %v1647
        %v1736 = vmul.f32 %v869, %v1649
        %v1737 = vmul.f32 %v871, %v1651
        %v1738 = vmul.f32 %v873, %v1653
        %v1739 = vmul.f32 %v875, %v1655
        %v1740 = vmul.f32 %v879, %v1657
        %v1741 = vmul.f32 %v881, %v1659
        %v1742 = vmul.f32 %v883, %v1661
        %v1743 = vmul.f32 %v885, %v1663
        %v1744 = vmul.f32 %v889, %v1665
        %v1745 = vmul.f32 %v891, %v1667
        %v1746 = vmul.f32 %v893, %v1669
        %v1747 = vmul.f32 %v895, %v1671
        %v1748 = vmul.f32 %v899, %v1673
        %v1749 = vmul.f32 %v901, %v1675
        %v1750 = vmul.f32 %v903, %v1677
        %v1751 = vmul.f32 %v905, %v1679
        %v1752 = vmul.f32 %v909, %v1681
        %v1753 = vmul.f32 %v911, %v1683
        %v1754 = vmul.f32 %v913, %v1685
        %v1755 = vmul.f32 %v915, %v1687
        %v1756 = vmul.f32 %v919, %v1689
        %v1757 = vmul.f32 %v921, %v1691
        %v1758 = vmul.f32 %v923, %v1693
        %v1759 = vmul.f32 %v925, %v1695
        %v1760 = vmul.f32 %v1696, %v1154
        %v1761 = vmul.f32 %v1697, %v1156
        %v1762 = vmul.f32 %v1698, %v1158
        %v1763 = vmul.f32 %v1699, %v1160
        %v1764 = vmul.f32 %v1700, %v1164
        %v1765 = vmul.f32 %v1701, %v1166
        %v1766 = vmul.f32 %v1702, %v1168
        %v1767 = vmul.f32 %v1703, %v1170
        %v1768 = vmul.f32 %v1704, %v1174
        %v1769 = vmul.f32 %v1705, %v1176
        %v1770 = vmul.f32 %v1706, %v1178
        %v1771 = vmul.f32 %v1707, %v1180
        %v1772 = vmul.f32 %v1708, %v1184
        %v1773 = vmul.f32 %v1709, %v1186
        %v1774 = vmul.f32 %v1710, %v1188
        %v1775 = vmul.f32 %v1711, %v1190
        %v1776 = vmul.f32 %v1712, %v1194
        %v1777 = vmul.f32 %v1713, %v1196
        %v1778 = vmul.f32 %v1714, %v1198
        %v1779 = vmul.f32 %v1715, %v1200
        %v1780 = vmul.f32 %v1716, %v1204
        %v1781 = vmul.f32 %v1717, %v1206
        %v1782 = vmul.f32 %v1718, %v1208
        %v1783 = vmul.f32 %v1719, %v1210
        %v1784 = vmul.f32 %v1720, %v1214
        %v1785 = vmul.f32 %v1721, %v1216
        %v1786 = vmul.f32 %v1722, %v1218
        %v1787 = vmul.f32 %v1723, %v1220
        %v1788 = vmul.f32 %v1724, %v1224
        %v1789 = vmul.f32 %v1725, %v1226
        %v1790 = vmul.f32 %v1726, %v1228
        %v1791 = vmul.f32 %v1727, %v1230
        %v1792 = vmul.f32 %v1728, %v1234
        %v1793 = vmul.f32 %v1729, %v1236
        %v1794 = vmul.f32 %v1730, %v1238
        %v1795 = vmul.f32 %v1731, %v1240
        %v1796 = vmul.f32 %v1732, %v1244
        %v1797 = vmul.f32 %v1733, %v1246
        %v1798 = vmul.f32 %v1734, %v1248
        %v1799 = vmul.f32 %v1735, %v1250
        %v1800 = vmul.f32 %v1736, %v1254
        %v1801 = vmul.f32 %v1737, %v1256
        %v1802 = vmul.f32 %v1738, %v1258
        %v1803 = vmul.f32 %v1739, %v1260
        %v1804 = vmul.f32 %v1740, %v1264
        %v1805 = vmul.f32 %v1741, %v1266
        %v1806 = vmul.f32 %v1742, %v1268
        %v1807 = vmul.f32 %v1743, %v1270
        %v1808 = vmul.f32 %v1744, %v1274
        %v1809 = vmul.f32 %v1745, %v1276
        %v1810 = vmul.f32 %v1746, %v1278
        %v1811 = vmul.f32 %v1747, %v1280
        %v1812 = vmul.f32 %v1748, %v1284
        %v1813 = vmul.f32 %v1749, %v1286
        %v1814 = vmul.f32 %v1750, %v1288
        %v1815 = vmul.f32 %v1751, %v1290
        %v1816 = vmul.f32 %v1752, %v1294
        %v1817 = vmul.f32 %v1753, %v1296
        %v1818 = vmul.f32 %v1754, %v1298
        %v1819 = vmul.f32 %v1755, %v1300
        %v1820 = vmul.f32 %v1756, %v1304
        %v1821 = vmul.f32 %v1757, %v1306
        %v1822 = vmul.f32 %v1758, %v1308
        %v1823 = vmul.f32 %v1759, %v1310
        %v1824 = vpack.c.bf16 %v1762, %v1760
        %v1825 = vpack.c.bf16 %v1763, %v1761
        %v1826 = vpack.c.bf16 %v1766, %v1764
        %v1827 = vpack.c.bf16 %v1767, %v1765
        %v1828 = vpack.c.bf16 %v1770, %v1768
        %v1829 = vpack.c.bf16 %v1771, %v1769
        %v1830 = vpack.c.bf16 %v1774, %v1772
        %v1831 = vpack.c.bf16 %v1775, %v1773
        %v1832 = vpack.c.bf16 %v1778, %v1776
        %v1833 = vpack.c.bf16 %v1779, %v1777
        %v1834 = vpack.c.bf16 %v1782, %v1780
        %v1835 = vpack.c.bf16 %v1783, %v1781
        %v1836 = vpack.c.bf16 %v1786, %v1784
        %v1837 = vpack.c.bf16 %v1787, %v1785
        %v1838 = vpack.c.bf16 %v1790, %v1788
        %v1839 = vpack.c.bf16 %v1791, %v1789
        %v1840 = vpack.c.bf16 %v1794, %v1792
        %v1841 = vpack.c.bf16 %v1795, %v1793
        %v1842 = vpack.c.bf16 %v1798, %v1796
        %v1843 = vpack.c.bf16 %v1799, %v1797
        %v1844 = vpack.c.bf16 %v1802, %v1800
        %v1845 = vpack.c.bf16 %v1803, %v1801
        %v1846 = vpack.c.bf16 %v1806, %v1804
        %v1847 = vpack.c.bf16 %v1807, %v1805
        %v1848 = vpack.c.bf16 %v1810, %v1808
        %v1849 = vpack.c.bf16 %v1811, %v1809
        %v1850 = vpack.c.bf16 %v1814, %v1812
        %v1851 = vpack.c.bf16 %v1815, %v1813
        %v1852 = vpack.c.bf16 %v1818, %v1816
        %v1853 = vpack.c.bf16 %v1819, %v1817
        %v1854 = vpack.c.bf16 %v1822, %v1820
        %v1855 = vpack.c.bf16 %v1823, %v1821
        %v1856 = vld [vmem:[%s307] sm:$0xff]
        %v1857 = vld [vmem:[%s307 + $0x8] sm:$0xff]
        %v1858 = vld [vmem:[%s307 + $0x10] sm:$0xff]
        %v1859 = vld [vmem:[%s307 + $0x18] sm:$0xff]
        %v1860 = vld [vmem:[%s307 + $0x20] sm:$0xff]
        %v1861 = vld [vmem:[%s307 + $0x28] sm:$0xff]
        %v1862 = vld [vmem:[%s307 + $0x30] sm:$0xff]
        %v1863 = vld [vmem:[%s307 + $0x38] sm:$0xff]
        %v1864 = vld [vmem:[%s307 + $0x40] sm:$0xff]
        %v1865 = vld [vmem:[%s307 + $0x48] sm:$0xff]
        %v1866 = vld [vmem:[%s307 + $0x50] sm:$0xff]
        %v1867 = vld [vmem:[%s307 + $0x58] sm:$0xff]
        %v1868 = vld [vmem:[%s307 + $0x60] sm:$0xff]
        %v1869 = vld [vmem:[%s307 + $0x68] sm:$0xff]
        %v1870 = vld [vmem:[%s307 + $0x70] sm:$0xff]
        %v1871 = vld [vmem:[%s307 + $0x78] sm:$0xff]
        %v1872 = vld [vmem:[%s307 + $0x80] sm:$0xff]
        %v1873 = vld [vmem:[%s307 + $0x88] sm:$0xff]
        %v1874 = vld [vmem:[%s307 + $0x90] sm:$0xff]
        %v1875 = vld [vmem:[%s307 + $0x98] sm:$0xff]
        %v1876 = vld [vmem:[%s307 + $0xa0] sm:$0xff]
        %v1877 = vld [vmem:[%s307 + $0xa8] sm:$0xff]
        %v1878 = vld [vmem:[%s307 + $0xb0] sm:$0xff]
        %v1879 = vld [vmem:[%s307 + $0xb8] sm:$0xff]
        %v1880 = vld [vmem:[%s307 + $0xc0] sm:$0xff]
        %v1881 = vld [vmem:[%s307 + $0xc8] sm:$0xff]
        %v1882 = vld [vmem:[%s307 + $0xd0] sm:$0xff]
        %v1883 = vld [vmem:[%s307 + $0xd8] sm:$0xff]
        %v1884 = vld [vmem:[%s307 + $0xe0] sm:$0xff]
        %v1885 = vld [vmem:[%s307 + $0xe8] sm:$0xff]
        %v1886 = vld [vmem:[%s307 + $0xf0] sm:$0xff]
        %v1887 = vld [vmem:[%s307 + $0xf8] sm:$0xff]
        %v1920 = vunpack.c.l.b16 %v1856
        %v1921 = vunpack.c.h.b16 %v1856
        %v1922 = vunpack.c.l.b16 %v1857
        %v1923 = vunpack.c.h.b16 %v1857
        %v1924 = vunpack.c.l.b16 %v1858
        %v1925 = vunpack.c.h.b16 %v1858
        %v1926 = vunpack.c.l.b16 %v1859
        %v1927 = vunpack.c.h.b16 %v1859
        %v1928 = vunpack.c.l.b16 %v1860
        %v1929 = vunpack.c.h.b16 %v1860
        %v1930 = vunpack.c.l.b16 %v1861
        %v1931 = vunpack.c.h.b16 %v1861
        %v1932 = vunpack.c.l.b16 %v1862
        %v1933 = vunpack.c.h.b16 %v1862
        %v1934 = vunpack.c.l.b16 %v1863
        %v1935 = vunpack.c.h.b16 %v1863
        %v1936 = vunpack.c.l.b16 %v1864
        %v1937 = vunpack.c.h.b16 %v1864
        %v1938 = vunpack.c.l.b16 %v1865
        %v1939 = vunpack.c.h.b16 %v1865
        %v1940 = vunpack.c.l.b16 %v1866
        %v1941 = vunpack.c.h.b16 %v1866
        %v1942 = vunpack.c.l.b16 %v1867
        %v1943 = vunpack.c.h.b16 %v1867
        %v1944 = vunpack.c.l.b16 %v1868
        %v1945 = vunpack.c.h.b16 %v1868
        %v1946 = vunpack.c.l.b16 %v1869
        %v1947 = vunpack.c.h.b16 %v1869
        %v1948 = vunpack.c.l.b16 %v1870
        %v1949 = vunpack.c.h.b16 %v1870
        %v1950 = vunpack.c.l.b16 %v1871
        %v1951 = vunpack.c.h.b16 %v1871
        %v1952 = vunpack.c.l.b16 %v1872
        %v1953 = vunpack.c.h.b16 %v1872
        %v1954 = vunpack.c.l.b16 %v1873
        %v1955 = vunpack.c.h.b16 %v1873
        %v1956 = vunpack.c.l.b16 %v1874
        %v1957 = vunpack.c.h.b16 %v1874
        %v1958 = vunpack.c.l.b16 %v1875
        %v1959 = vunpack.c.h.b16 %v1875
        %v1960 = vunpack.c.l.b16 %v1876
        %v1961 = vunpack.c.h.b16 %v1876
        %v1962 = vunpack.c.l.b16 %v1877
        %v1963 = vunpack.c.h.b16 %v1877
        %v1964 = vunpack.c.l.b16 %v1878
        %v1965 = vunpack.c.h.b16 %v1878
        %v1966 = vunpack.c.l.b16 %v1879
        %v1967 = vunpack.c.h.b16 %v1879
        %v1968 = vunpack.c.l.b16 %v1880
        %v1969 = vunpack.c.h.b16 %v1880
        %v1970 = vunpack.c.l.b16 %v1881
        %v1971 = vunpack.c.h.b16 %v1881
        %v1972 = vunpack.c.l.b16 %v1882
        %v1973 = vunpack.c.h.b16 %v1882
        %v1974 = vunpack.c.l.b16 %v1883
        %v1975 = vunpack.c.h.b16 %v1883
        %v1976 = vunpack.c.l.b16 %v1884
        %v1977 = vunpack.c.h.b16 %v1884
        %v1978 = vunpack.c.l.b16 %v1885
        %v1979 = vunpack.c.h.b16 %v1885
        %v1980 = vunpack.c.l.b16 %v1886
        %v1981 = vunpack.c.h.b16 %v1886
        %v1982 = vunpack.c.l.b16 %v1887
        %v1983 = vunpack.c.h.b16 %v1887
        %v1984 = vpack.c.b16 %v1922, %v1920
        %v1985 = vpack.c.b16 %v1923, %v1921
        %v1986 = vpack.c.b16 %v1926, %v1924
        %v1987 = vpack.c.b16 %v1927, %v1925
        %v1988 = vpack.c.b16 %v1930, %v1928
        %v1989 = vpack.c.b16 %v1931, %v1929
        %v1990 = vpack.c.b16 %v1934, %v1932
        %v1991 = vpack.c.b16 %v1935, %v1933
        %v1992 = vpack.c.b16 %v1938, %v1936
        %v1993 = vpack.c.b16 %v1939, %v1937
        %v1994 = vpack.c.b16 %v1942, %v1940
        %v1995 = vpack.c.b16 %v1943, %v1941
        %v1996 = vpack.c.b16 %v1946, %v1944
        %v1997 = vpack.c.b16 %v1947, %v1945
        %v1998 = vpack.c.b16 %v1950, %v1948
        %v1999 = vpack.c.b16 %v1951, %v1949
        %v2000 = vpack.c.b16 %v1954, %v1952
        %v2001 = vpack.c.b16 %v1955, %v1953
        %v2002 = vpack.c.b16 %v1958, %v1956
        %v2003 = vpack.c.b16 %v1959, %v1957
        %v2004 = vpack.c.b16 %v1962, %v1960
        %v2005 = vpack.c.b16 %v1963, %v1961
        %v2006 = vpack.c.b16 %v1966, %v1964
        %v2007 = vpack.c.b16 %v1967, %v1965
        %v2008 = vpack.c.b16 %v1970, %v1968
        %v2009 = vpack.c.b16 %v1971, %v1969
        %v2010 = vpack.c.b16 %v1974, %v1972
        %v2011 = vpack.c.b16 %v1975, %v1973
        %v2012 = vpack.c.b16 %v1978, %v1976
        %v2013 = vpack.c.b16 %v1979, %v1977
        %v2014 = vpack.c.b16 %v1982, %v1980
        %v2015 = vpack.c.b16 %v1983, %v1981
        %2048 = vmatprep.subr.bf16.mxu0 %v1999
        %2049 = vmatpush1.bf16.msra.mxu0 %v1998
        %2050 = vmatprep.subr.bf16.mxu0 %v1997
        %2051 = vmatpush1.bf16.msra.mxu0 %v1996
        %2052 = vmatprep.subr.bf16.mxu0 %v1995
        %2053 = vmatpush1.bf16.msra.mxu0 %v1994
        %2054 = vmatprep.subr.bf16.mxu0 %v1993
        %2055 = vmatpush1.bf16.msra.mxu0 %v1992
        %2056 = vmatprep.subr.bf16.mxu0 %v1991
        %2057 = vmatpush1.bf16.msra.mxu0 %v1990
        %2058 = vmatprep.subr.bf16.mxu0 %v1989
        %2059 = vmatpush1.bf16.msra.mxu0 %v1988
        %2060 = vmatprep.subr.bf16.mxu0 %v1987
        %2061 = vmatpush1.bf16.msra.mxu0 %v1986
        %2062 = vmatprep.subr.bf16.mxu0 %v1985
        %2063 = vmatpush1.bf16.msra.mxu0 %v1984
        %2064 = vmatprep.subr.bf16.mxu0 %v2015
        %2065 = vmatpush2.bf16.msra.mxu0 %v2014
        %2066 = vmatprep.subr.bf16.mxu0 %v2013
        %2067 = vmatpush2.bf16.msra.mxu0 %v2012
        %2068 = vmatprep.subr.bf16.mxu0 %v2011
        %2069 = vmatpush2.bf16.msra.mxu0 %v2010
        %2070 = vmatprep.subr.bf16.mxu0 %v2009
        %2071 = vmatpush2.bf16.msra.mxu0 %v2008
        %2072 = vmatprep.subr.bf16.mxu0 %v2007
        %2073 = vmatpush2.bf16.msra.mxu0 %v2006
        %2074 = vmatprep.subr.bf16.mxu0 %v2005
        %2075 = vmatpush2.bf16.msra.mxu0 %v2004
        %2076 = vmatprep.subr.bf16.mxu0 %v2003
        %2077 = vmatpush2.bf16.msra.mxu0 %v2002
        %2078 = vmatprep.subr.bf16.mxu0 %v2001
        %2079 = vmatpush2.bf16.msra.mxu0 %v2000
        %2080 = vmatprep.mubr.bf16.mxu0 %v1825
        %2081 = vmatmul.mubr.bf16.gmra.mxu0 %v1824
        %v2082 = vpop.f32.mrf.mxu0
        %v2083 = vadd.f32 0.0, %v2082
        %v2084 = vpop.f32.mrf.mxu0
        %v2085 = vadd.f32 0.0, %v2084
        %v2086 = vpop.f32.mrf.mxu0
        %v2087 = vadd.f32 0.0, %v2086
        %v2088 = vpop.f32.mrf.mxu0
        %v2089 = vadd.f32 0.0, %v2088
        %2090 = vmatprep.mubr.bf16.mxu0 %v1827
        %2091 = vmatmul.mubr.bf16.gmra.mxu0 %v1826
        %v2092 = vpop.f32.mrf.mxu0
        %v2093 = vadd.f32 0.0, %v2092
        %v2094 = vpop.f32.mrf.mxu0
        %v2095 = vadd.f32 0.0, %v2094
        %v2096 = vpop.f32.mrf.mxu0
        %v2097 = vadd.f32 0.0, %v2096
        %v2098 = vpop.f32.mrf.mxu0
        %v2099 = vadd.f32 0.0, %v2098
        %2100 = vmatprep.mubr.bf16.mxu0 %v1829
        %2101 = vmatmul.mubr.bf16.gmra.mxu0 %v1828
        %v2102 = vpop.f32.mrf.mxu0
        %v2103 = vadd.f32 0.0, %v2102
        %v2104 = vpop.f32.mrf.mxu0
        %v2105 = vadd.f32 0.0, %v2104
        %v2106 = vpop.f32.mrf.mxu0
        %v2107 = vadd.f32 0.0, %v2106
        %v2108 = vpop.f32.mrf.mxu0
        %v2109 = vadd.f32 0.0, %v2108
        %2110 = vmatprep.mubr.bf16.mxu0 %v1831
        %2111 = vmatmul.mubr.bf16.gmra.mxu0 %v1830
        %v2112 = vpop.f32.mrf.mxu0
        %v2113 = vadd.f32 0.0, %v2112
        %v2114 = vpop.f32.mrf.mxu0
        %v2115 = vadd.f32 0.0, %v2114
        %v2116 = vpop.f32.mrf.mxu0
        %v2117 = vadd.f32 0.0, %v2116
        %v2118 = vpop.f32.mrf.mxu0
        %v2119 = vadd.f32 0.0, %v2118
        %2120 = vmatprep.mubr.bf16.mxu0 %v1833
        %2121 = vmatmul.mubr.bf16.gmra.mxu0 %v1832
        %v2122 = vpop.f32.mrf.mxu0
        %v2123 = vadd.f32 0.0, %v2122
        %v2124 = vpop.f32.mrf.mxu0
        %v2125 = vadd.f32 0.0, %v2124
        %v2126 = vpop.f32.mrf.mxu0
        %v2127 = vadd.f32 0.0, %v2126
        %v2128 = vpop.f32.mrf.mxu0
        %v2129 = vadd.f32 0.0, %v2128
        %2130 = vmatprep.mubr.bf16.mxu0 %v1835
        %2131 = vmatmul.mubr.bf16.gmra.mxu0 %v1834
        %v2132 = vpop.f32.mrf.mxu0
        %v2133 = vadd.f32 0.0, %v2132
        %v2134 = vpop.f32.mrf.mxu0
        %v2135 = vadd.f32 0.0, %v2134
        %v2136 = vpop.f32.mrf.mxu0
        %v2137 = vadd.f32 0.0, %v2136
        %v2138 = vpop.f32.mrf.mxu0
        %v2139 = vadd.f32 0.0, %v2138
        %2140 = vmatprep.mubr.bf16.mxu0 %v1837
        %2141 = vmatmul.mubr.bf16.gmra.mxu0 %v1836
        %v2142 = vpop.f32.mrf.mxu0
        %v2143 = vadd.f32 0.0, %v2142
        %v2144 = vpop.f32.mrf.mxu0
        %v2145 = vadd.f32 0.0, %v2144
        %v2146 = vpop.f32.mrf.mxu0
        %v2147 = vadd.f32 0.0, %v2146
        %v2148 = vpop.f32.mrf.mxu0
        %v2149 = vadd.f32 0.0, %v2148
        %2150 = vmatprep.mubr.bf16.mxu0 %v1839
        %2151 = vmatmul.mubr.bf16.gmra.mxu0 %v1838
        %v2152 = vpop.f32.mrf.mxu0
        %v2153 = vadd.f32 0.0, %v2152
        %v2154 = vpop.f32.mrf.mxu0
        %v2155 = vadd.f32 0.0, %v2154
        %v2156 = vpop.f32.mrf.mxu0
        %v2157 = vadd.f32 0.0, %v2156
        %v2158 = vpop.f32.mrf.mxu0
        %v2159 = vadd.f32 0.0, %v2158
        %2160 = vmatprep.mubr.bf16.mxu0 %v1841
        %2161 = vmatmul.mubr.bf16.gmra.mxu0 %v1840
        %v2162 = vpop.f32.mrf.mxu0
        %v2163 = vadd.f32 0.0, %v2162
        %v2164 = vpop.f32.mrf.mxu0
        %v2165 = vadd.f32 0.0, %v2164
        %v2166 = vpop.f32.mrf.mxu0
        %v2167 = vadd.f32 0.0, %v2166
        %v2168 = vpop.f32.mrf.mxu0
        %v2169 = vadd.f32 0.0, %v2168
        %2170 = vmatprep.mubr.bf16.mxu0 %v1843
        %2171 = vmatmul.mubr.bf16.gmra.mxu0 %v1842
        %v2172 = vpop.f32.mrf.mxu0
        %v2173 = vadd.f32 0.0, %v2172
        %v2174 = vpop.f32.mrf.mxu0
        %v2175 = vadd.f32 0.0, %v2174
        %v2176 = vpop.f32.mrf.mxu0
        %v2177 = vadd.f32 0.0, %v2176
        %v2178 = vpop.f32.mrf.mxu0
        %v2179 = vadd.f32 0.0, %v2178
        %2180 = vmatprep.mubr.bf16.mxu0 %v1845
        %2181 = vmatmul.mubr.bf16.gmra.mxu0 %v1844
        %v2182 = vpop.f32.mrf.mxu0
        %v2183 = vadd.f32 0.0, %v2182
        %v2184 = vpop.f32.mrf.mxu0
        %v2185 = vadd.f32 0.0, %v2184
        %v2186 = vpop.f32.mrf.mxu0
        %v2187 = vadd.f32 0.0, %v2186
        %v2188 = vpop.f32.mrf.mxu0
        %v2189 = vadd.f32 0.0, %v2188
        %2190 = vmatprep.mubr.bf16.mxu0 %v1847
        %2191 = vmatmul.mubr.bf16.gmra.mxu0 %v1846
        %v2192 = vpop.f32.mrf.mxu0
        %v2193 = vadd.f32 0.0, %v2192
        %v2194 = vpop.f32.mrf.mxu0
        %v2195 = vadd.f32 0.0, %v2194
        %v2196 = vpop.f32.mrf.mxu0
        %v2197 = vadd.f32 0.0, %v2196
        %v2198 = vpop.f32.mrf.mxu0
        %v2199 = vadd.f32 0.0, %v2198
        %2200 = vmatprep.mubr.bf16.mxu0 %v1849
        %2201 = vmatmul.mubr.bf16.gmra.mxu0 %v1848
        %v2202 = vpop.f32.mrf.mxu0
        %v2203 = vadd.f32 0.0, %v2202
        %v2204 = vpop.f32.mrf.mxu0
        %v2205 = vadd.f32 0.0, %v2204
        %v2206 = vpop.f32.mrf.mxu0
        %v2207 = vadd.f32 0.0, %v2206
        %v2208 = vpop.f32.mrf.mxu0
        %v2209 = vadd.f32 0.0, %v2208
        %2210 = vmatprep.mubr.bf16.mxu0 %v1851
        %2211 = vmatmul.mubr.bf16.gmra.mxu0 %v1850
        %v2212 = vpop.f32.mrf.mxu0
        %v2213 = vadd.f32 0.0, %v2212
        %v2214 = vpop.f32.mrf.mxu0
        %v2215 = vadd.f32 0.0, %v2214
        %v2216 = vpop.f32.mrf.mxu0
        %v2217 = vadd.f32 0.0, %v2216
        %v2218 = vpop.f32.mrf.mxu0
        %v2219 = vadd.f32 0.0, %v2218
        %2220 = vmatprep.mubr.bf16.mxu0 %v1853
        %2221 = vmatmul.mubr.bf16.gmra.mxu0 %v1852
        %v2222 = vpop.f32.mrf.mxu0
        %v2223 = vadd.f32 0.0, %v2222
        %v2224 = vpop.f32.mrf.mxu0
        %v2225 = vadd.f32 0.0, %v2224
        %v2226 = vpop.f32.mrf.mxu0
        %v2227 = vadd.f32 0.0, %v2226
        %v2228 = vpop.f32.mrf.mxu0
        %v2229 = vadd.f32 0.0, %v2228
        %2230 = vmatprep.mubr.bf16.mxu0 %v1855
        %2231 = vmatmul.mubr.bf16.gmra.mxu0 %v1854
        %v2232 = vpop.f32.mrf.mxu0
        %v2233 = vadd.f32 0.0, %v2232
        %v2234 = vpop.f32.mrf.mxu0
        %v2235 = vadd.f32 0.0, %v2234
        %v2236 = vpop.f32.mrf.mxu0
        %v2237 = vadd.f32 0.0, %v2236
        %v2238 = vpop.f32.mrf.mxu0
        %v2239 = vadd.f32 0.0, %v2238
        %2240 = vdwg.mxu0
        %p2241 = scmp.eq.s32.totalorder %s32, 0
        // Predicated region
        $region53: #{tpu_custom_call.1} parent=35 // pred_check
          %p2242 = pneg %p2241
        $region54: #{tpu_custom_call.1} parent=35 // pred_check_branch
          %2244 = sbr.rel (%p2242) target = $region56
        $region55: #{tpu_custom_call.1} parent=35 // pred_region
          %2245 = vst [vmem:[#allocation2] sm:$0xff] %v2083
          %2246 = vst [vmem:[#allocation2 + $0x8] sm:$0xff] %v2085
          %2247 = vst [vmem:[#allocation2 + $0x10] sm:$0xff] %v2087
          %2248 = vst [vmem:[#allocation2 + $0x18] sm:$0xff] %v2089
          %2249 = vst [vmem:[#allocation2 + $0x20] sm:$0xff] %v2093
          %2250 = vst [vmem:[#allocation2 + $0x28] sm:$0xff] %v2095
          %2251 = vst [vmem:[#allocation2 + $0x30] sm:$0xff] %v2097
          %2252 = vst [vmem:[#allocation2 + $0x38] sm:$0xff] %v2099
          %2253 = vst [vmem:[#allocation2 + $0x40] sm:$0xff] %v2103
          %2254 = vst [vmem:[#allocation2 + $0x48] sm:$0xff] %v2105
          %2255 = vst [vmem:[#allocation2 + $0x50] sm:$0xff] %v2107
          %2256 = vst [vmem:[#allocation2 + $0x58] sm:$0xff] %v2109
          %2257 = vst [vmem:[#allocation2 + $0x60] sm:$0xff] %v2113
          %2258 = vst [vmem:[#allocation2 + $0x68] sm:$0xff] %v2115
          %2259 = vst [vmem:[#allocation2 + $0x70] sm:$0xff] %v2117
          %2260 = vst [vmem:[#allocation2 + $0x78] sm:$0xff] %v2119
          %2261 = vst [vmem:[#allocation2 + $0x80] sm:$0xff] %v2123
          %2262 = vst [vmem:[#allocation2 + $0x88] sm:$0xff] %v2125
          %2263 = vst [vmem:[#allocation2 + $0x90] sm:$0xff] %v2127
          %2264 = vst [vmem:[#allocation2 + $0x98] sm:$0xff] %v2129
          %2265 = vst [vmem:[#allocation2 + $0xa0] sm:$0xff] %v2133
          %2266 = vst [vmem:[#allocation2 + $0xa8] sm:$0xff] %v2135
          %2267 = vst [vmem:[#allocation2 + $0xb0] sm:$0xff] %v2137
          %2268 = vst [vmem:[#allocation2 + $0xb8] sm:$0xff] %v2139
          %2269 = vst [vmem:[#allocation2 + $0xc0] sm:$0xff] %v2143
          %2270 = vst [vmem:[#allocation2 + $0xc8] sm:$0xff] %v2145
          %2271 = vst [vmem:[#allocation2 + $0xd0] sm:$0xff] %v2147
          %2272 = vst [vmem:[#allocation2 + $0xd8] sm:$0xff] %v2149
          %2273 = vst [vmem:[#allocation2 + $0xe0] sm:$0xff] %v2153
          %2274 = vst [vmem:[#allocation2 + $0xe8] sm:$0xff] %v2155
          %2275 = vst [vmem:[#allocation2 + $0xf0] sm:$0xff] %v2157
          %2276 = vst [vmem:[#allocation2 + $0xf8] sm:$0xff] %v2159
          %2277 = vst [vmem:[#allocation2 + $0x100] sm:$0xff] %v2163
          %2278 = vst [vmem:[#allocation2 + $0x108] sm:$0xff] %v2165
          %2279 = vst [vmem:[#allocation2 + $0x110] sm:$0xff] %v2167
          %2280 = vst [vmem:[#allocation2 + $0x118] sm:$0xff] %v2169
          %2281 = vst [vmem:[#allocation2 + $0x120] sm:$0xff] %v2173
          %2282 = vst [vmem:[#allocation2 + $0x128] sm:$0xff] %v2175
          %2283 = vst [vmem:[#allocation2 + $0x130] sm:$0xff] %v2177
          %2284 = vst [vmem:[#allocation2 + $0x138] sm:$0xff] %v2179
          %2285 = vst [vmem:[#allocation2 + $0x140] sm:$0xff] %v2183
          %2286 = vst [vmem:[#allocation2 + $0x148] sm:$0xff] %v2185
          %2287 = vst [vmem:[#allocation2 + $0x150] sm:$0xff] %v2187
          %2288 = vst [vmem:[#allocation2 + $0x158] sm:$0xff] %v2189
          %2289 = vst [vmem:[#allocation2 + $0x160] sm:$0xff] %v2193
          %2290 = vst [vmem:[#allocation2 + $0x168] sm:$0xff] %v2195
          %2291 = vst [vmem:[#allocation2 + $0x170] sm:$0xff] %v2197
          %2292 = vst [vmem:[#allocation2 + $0x178] sm:$0xff] %v2199
          %2293 = vst [vmem:[#allocation2 + $0x180] sm:$0xff] %v2203
          %2294 = vst [vmem:[#allocation2 + $0x188] sm:$0xff] %v2205
          %2295 = vst [vmem:[#allocation2 + $0x190] sm:$0xff] %v2207
          %2296 = vst [vmem:[#allocation2 + $0x198] sm:$0xff] %v2209
          %2297 = vst [vmem:[#allocation2 + $0x1a0] sm:$0xff] %v2213
          %2298 = vst [vmem:[#allocation2 + $0x1a8] sm:$0xff] %v2215
          %2299 = vst [vmem:[#allocation2 + $0x1b0] sm:$0xff] %v2217
          %2300 = vst [vmem:[#allocation2 + $0x1b8] sm:$0xff] %v2219
          %2301 = vst [vmem:[#allocation2 + $0x1c0] sm:$0xff] %v2223
          %2302 = vst [vmem:[#allocation2 + $0x1c8] sm:$0xff] %v2225
          %2303 = vst [vmem:[#allocation2 + $0x1d0] sm:$0xff] %v2227
          %2304 = vst [vmem:[#allocation2 + $0x1d8] sm:$0xff] %v2229
          %2305 = vst [vmem:[#allocation2 + $0x1e0] sm:$0xff] %v2233
          %2306 = vst [vmem:[#allocation2 + $0x1e8] sm:$0xff] %v2235
          %2307 = vst [vmem:[#allocation2 + $0x1f0] sm:$0xff] %v2237
          %2308 = vst [vmem:[#allocation2 + $0x1f8] sm:$0xff] %v2239
        $region56: #{tpu_custom_call.1} parent=35 // pred_fallthru
          _
        %p2309 = scmp.gt.s32.totalorder %s32, 0
        // Predicated region
        $region57: #{tpu_custom_call.1} parent=35 // pred_check
          %p2310 = pneg %p2309
        $region58: #{tpu_custom_call.1} parent=35 // pred_check_branch
          %2312 = sbr.rel (%p2310) target = $region60
        $region59: #{tpu_custom_call.1} parent=35 // pred_region
          %v2313 = vld [vmem:[#allocation2] sm:$0xff]
          %v2314 = vld [vmem:[#allocation2 + $0x8] sm:$0xff]
          %v2315 = vld [vmem:[#allocation2 + $0x10] sm:$0xff]
          %v2316 = vld [vmem:[#allocation2 + $0x18] sm:$0xff]
          %v2317 = vld [vmem:[#allocation2 + $0x20] sm:$0xff]
          %v2318 = vld [vmem:[#allocation2 + $0x28] sm:$0xff]
          %v2319 = vld [vmem:[#allocation2 + $0x30] sm:$0xff]
          %v2320 = vld [vmem:[#allocation2 + $0x38] sm:$0xff]
          %v2321 = vld [vmem:[#allocation2 + $0x40] sm:$0xff]
          %v2322 = vld [vmem:[#allocation2 + $0x48] sm:$0xff]
          %v2323 = vld [vmem:[#allocation2 + $0x50] sm:$0xff]
          %v2324 = vld [vmem:[#allocation2 + $0x58] sm:$0xff]
          %v2325 = vld [vmem:[#allocation2 + $0x60] sm:$0xff]
          %v2326 = vld [vmem:[#allocation2 + $0x68] sm:$0xff]
          %v2327 = vld [vmem:[#allocation2 + $0x70] sm:$0xff]
          %v2328 = vld [vmem:[#allocation2 + $0x78] sm:$0xff]
          %v2329 = vld [vmem:[#allocation2 + $0x80] sm:$0xff]
          %v2330 = vld [vmem:[#allocation2 + $0x88] sm:$0xff]
          %v2331 = vld [vmem:[#allocation2 + $0x90] sm:$0xff]
          %v2332 = vld [vmem:[#allocation2 + $0x98] sm:$0xff]
          %v2333 = vld [vmem:[#allocation2 + $0xa0] sm:$0xff]
          %v2334 = vld [vmem:[#allocation2 + $0xa8] sm:$0xff]
          %v2335 = vld [vmem:[#allocation2 + $0xb0] sm:$0xff]
          %v2336 = vld [vmem:[#allocation2 + $0xb8] sm:$0xff]
          %v2337 = vld [vmem:[#allocation2 + $0xc0] sm:$0xff]
          %v2338 = vld [vmem:[#allocation2 + $0xc8] sm:$0xff]
          %v2339 = vld [vmem:[#allocation2 + $0xd0] sm:$0xff]
          %v2340 = vld [vmem:[#allocation2 + $0xd8] sm:$0xff]
          %v2341 = vld [vmem:[#allocation2 + $0xe0] sm:$0xff]
          %v2342 = vld [vmem:[#allocation2 + $0xe8] sm:$0xff]
          %v2343 = vld [vmem:[#allocation2 + $0xf0] sm:$0xff]
          %v2344 = vld [vmem:[#allocation2 + $0xf8] sm:$0xff]
          %v2345 = vld [vmem:[#allocation2 + $0x100] sm:$0xff]
          %v2346 = vld [vmem:[#allocation2 + $0x108] sm:$0xff]
          %v2347 = vld [vmem:[#allocation2 + $0x110] sm:$0xff]
          %v2348 = vld [vmem:[#allocation2 + $0x118] sm:$0xff]
          %v2349 = vld [vmem:[#allocation2 + $0x120] sm:$0xff]
          %v2350 = vld [vmem:[#allocation2 + $0x128] sm:$0xff]
          %v2351 = vld [vmem:[#allocation2 + $0x130] sm:$0xff]
          %v2352 = vld [vmem:[#allocation2 + $0x138] sm:$0xff]
          %v2353 = vld [vmem:[#allocation2 + $0x140] sm:$0xff]
          %v2354 = vld [vmem:[#allocation2 + $0x148] sm:$0xff]
          %v2355 = vld [vmem:[#allocation2 + $0x150] sm:$0xff]
          %v2356 = vld [vmem:[#allocation2 + $0x158] sm:$0xff]
          %v2357 = vld [vmem:[#allocation2 + $0x160] sm:$0xff]
          %v2358 = vld [vmem:[#allocation2 + $0x168] sm:$0xff]
          %v2359 = vld [vmem:[#allocation2 + $0x170] sm:$0xff]
          %v2360 = vld [vmem:[#allocation2 + $0x178] sm:$0xff]
          %v2361 = vld [vmem:[#allocation2 + $0x180] sm:$0xff]
          %v2362 = vld [vmem:[#allocation2 + $0x188] sm:$0xff]
          %v2363 = vld [vmem:[#allocation2 + $0x190] sm:$0xff]
          %v2364 = vld [vmem:[#allocation2 + $0x198] sm:$0xff]
          %v2365 = vld [vmem:[#allocation2 + $0x1a0] sm:$0xff]
          %v2366 = vld [vmem:[#allocation2 + $0x1a8] sm:$0xff]
          %v2367 = vld [vmem:[#allocation2 + $0x1b0] sm:$0xff]
          %v2368 = vld [vmem:[#allocation2 + $0x1b8] sm:$0xff]
          %v2369 = vld [vmem:[#allocation2 + $0x1c0] sm:$0xff]
          %v2370 = vld [vmem:[#allocation2 + $0x1c8] sm:$0xff]
          %v2371 = vld [vmem:[#allocation2 + $0x1d0] sm:$0xff]
          %v2372 = vld [vmem:[#allocation2 + $0x1d8] sm:$0xff]
          %v2373 = vld [vmem:[#allocation2 + $0x1e0] sm:$0xff]
          %v2374 = vld [vmem:[#allocation2 + $0x1e8] sm:$0xff]
          %v2375 = vld [vmem:[#allocation2 + $0x1f0] sm:$0xff]
          %v2376 = vld [vmem:[#allocation2 + $0x1f8] sm:$0xff]
          %v2377 = vadd.f32 %v2313, %v2083
          %v2378 = vadd.f32 %v2314, %v2085
          %v2379 = vadd.f32 %v2315, %v2087
          %v2380 = vadd.f32 %v2316, %v2089
          %v2381 = vadd.f32 %v2317, %v2093
          %v2382 = vadd.f32 %v2318, %v2095
          %v2383 = vadd.f32 %v2319, %v2097
          %v2384 = vadd.f32 %v2320, %v2099
          %v2385 = vadd.f32 %v2321, %v2103
          %v2386 = vadd.f32 %v2322, %v2105
          %v2387 = vadd.f32 %v2323, %v2107
          %v2388 = vadd.f32 %v2324, %v2109
          %v2389 = vadd.f32 %v2325, %v2113
          %v2390 = vadd.f32 %v2326, %v2115
          %v2391 = vadd.f32 %v2327, %v2117
          %v2392 = vadd.f32 %v2328, %v2119
          %v2393 = vadd.f32 %v2329, %v2123
          %v2394 = vadd.f32 %v2330, %v2125
          %v2395 = vadd.f32 %v2331, %v2127
          %v2396 = vadd.f32 %v2332, %v2129
          %v2397 = vadd.f32 %v2333, %v2133
          %v2398 = vadd.f32 %v2334, %v2135
          %v2399 = vadd.f32 %v2335, %v2137
          %v2400 = vadd.f32 %v2336, %v2139
          %v2401 = vadd.f32 %v2337, %v2143
          %v2402 = vadd.f32 %v2338, %v2145
          %v2403 = vadd.f32 %v2339, %v2147
          %v2404 = vadd.f32 %v2340, %v2149
          %v2405 = vadd.f32 %v2341, %v2153
          %v2406 = vadd.f32 %v2342, %v2155
          %v2407 = vadd.f32 %v2343, %v2157
          %v2408 = vadd.f32 %v2344, %v2159
          %v2409 = vadd.f32 %v2345, %v2163
          %v2410 = vadd.f32 %v2346, %v2165
          %v2411 = vadd.f32 %v2347, %v2167
          %v2412 = vadd.f32 %v2348, %v2169
          %v2413 = vadd.f32 %v2349, %v2173
          %v2414 = vadd.f32 %v2350, %v2175
          %v2415 = vadd.f32 %v2351, %v2177
          %v2416 = vadd.f32 %v2352, %v2179
          %v2417 = vadd.f32 %v2353, %v2183
          %v2418 = vadd.f32 %v2354, %v2185
          %v2419 = vadd.f32 %v2355, %v2187
          %v2420 = vadd.f32 %v2356, %v2189
          %v2421 = vadd.f32 %v2357, %v2193
          %v2422 = vadd.f32 %v2358, %v2195
          %v2423 = vadd.f32 %v2359, %v2197
          %v2424 = vadd.f32 %v2360, %v2199
          %v2425 = vadd.f32 %v2361, %v2203
          %v2426 = vadd.f32 %v2362, %v2205
          %v2427 = vadd.f32 %v2363, %v2207
          %v2428 = vadd.f32 %v2364, %v2209
          %v2429 = vadd.f32 %v2365, %v2213
          %v2430 = vadd.f32 %v2366, %v2215
          %v2431 = vadd.f32 %v2367, %v2217
          %v2432 = vadd.f32 %v2368, %v2219
          %v2433 = vadd.f32 %v2369, %v2223
          %v2434 = vadd.f32 %v2370, %v2225
          %v2435 = vadd.f32 %v2371, %v2227
          %v2436 = vadd.f32 %v2372, %v2229
          %v2437 = vadd.f32 %v2373, %v2233
          %v2438 = vadd.f32 %v2374, %v2235
          %v2439 = vadd.f32 %v2375, %v2237
          %v2440 = vadd.f32 %v2376, %v2239
          %2441 = vst [vmem:[#allocation2] sm:$0xff] %v2377
          %2442 = vst [vmem:[#allocation2 + $0x8] sm:$0xff] %v2378
          %2443 = vst [vmem:[#allocation2 + $0x10] sm:$0xff] %v2379
          %2444 = vst [vmem:[#allocation2 + $0x18] sm:$0xff] %v2380
          %2445 = vst [vmem:[#allocation2 + $0x20] sm:$0xff] %v2381
          %2446 = vst [vmem:[#allocation2 + $0x28] sm:$0xff] %v2382
          %2447 = vst [vmem:[#allocation2 + $0x30] sm:$0xff] %v2383
          %2448 = vst [vmem:[#allocation2 + $0x38] sm:$0xff] %v2384
          %2449 = vst [vmem:[#allocation2 + $0x40] sm:$0xff] %v2385
          %2450 = vst [vmem:[#allocation2 + $0x48] sm:$0xff] %v2386
          %2451 = vst [vmem:[#allocation2 + $0x50] sm:$0xff] %v2387
          %2452 = vst [vmem:[#allocation2 + $0x58] sm:$0xff] %v2388
          %2453 = vst [vmem:[#allocation2 + $0x60] sm:$0xff] %v2389
          %2454 = vst [vmem:[#allocation2 + $0x68] sm:$0xff] %v2390
          %2455 = vst [vmem:[#allocation2 + $0x70] sm:$0xff] %v2391
          %2456 = vst [vmem:[#allocation2 + $0x78] sm:$0xff] %v2392
          %2457 = vst [vmem:[#allocation2 + $0x80] sm:$0xff] %v2393
          %2458 = vst [vmem:[#allocation2 + $0x88] sm:$0xff] %v2394
          %2459 = vst [vmem:[#allocation2 + $0x90] sm:$0xff] %v2395
          %2460 = vst [vmem:[#allocation2 + $0x98] sm:$0xff] %v2396
          %2461 = vst [vmem:[#allocation2 + $0xa0] sm:$0xff] %v2397
          %2462 = vst [vmem:[#allocation2 + $0xa8] sm:$0xff] %v2398
          %2463 = vst [vmem:[#allocation2 + $0xb0] sm:$0xff] %v2399
          %2464 = vst [vmem:[#allocation2 + $0xb8] sm:$0xff] %v2400
          %2465 = vst [vmem:[#allocation2 + $0xc0] sm:$0xff] %v2401
          %2466 = vst [vmem:[#allocation2 + $0xc8] sm:$0xff] %v2402
          %2467 = vst [vmem:[#allocation2 + $0xd0] sm:$0xff] %v2403
          %2468 = vst [vmem:[#allocation2 + $0xd8] sm:$0xff] %v2404
          %2469 = vst [vmem:[#allocation2 + $0xe0] sm:$0xff] %v2405
          %2470 = vst [vmem:[#allocation2 + $0xe8] sm:$0xff] %v2406
          %2471 = vst [vmem:[#allocation2 + $0xf0] sm:$0xff] %v2407
          %2472 = vst [vmem:[#allocation2 + $0xf8] sm:$0xff] %v2408
          %2473 = vst [vmem:[#allocation2 + $0x100] sm:$0xff] %v2409
          %2474 = vst [vmem:[#allocation2 + $0x108] sm:$0xff] %v2410
          %2475 = vst [vmem:[#allocation2 + $0x110] sm:$0xff] %v2411
          %2476 = vst [vmem:[#allocation2 + $0x118] sm:$0xff] %v2412
          %2477 = vst [vmem:[#allocation2 + $0x120] sm:$0xff] %v2413
          %2478 = vst [vmem:[#allocation2 + $0x128] sm:$0xff] %v2414
          %2479 = vst [vmem:[#allocation2 + $0x130] sm:$0xff] %v2415
          %2480 = vst [vmem:[#allocation2 + $0x138] sm:$0xff] %v2416
          %2481 = vst [vmem:[#allocation2 + $0x140] sm:$0xff] %v2417
          %2482 = vst [vmem:[#allocation2 + $0x148] sm:$0xff] %v2418
          %2483 = vst [vmem:[#allocation2 + $0x150] sm:$0xff] %v2419
          %2484 = vst [vmem:[#allocation2 + $0x158] sm:$0xff] %v2420
          %2485 = vst [vmem:[#allocation2 + $0x160] sm:$0xff] %v2421
          %2486 = vst [vmem:[#allocation2 + $0x168] sm:$0xff] %v2422
          %2487 = vst [vmem:[#allocation2 + $0x170] sm:$0xff] %v2423
          %2488 = vst [vmem:[#allocation2 + $0x178] sm:$0xff] %v2424
          %2489 = vst [vmem:[#allocation2 + $0x180] sm:$0xff] %v2425
          %2490 = vst [vmem:[#allocation2 + $0x188] sm:$0xff] %v2426
          %2491 = vst [vmem:[#allocation2 + $0x190] sm:$0xff] %v2427
          %2492 = vst [vmem:[#allocation2 + $0x198] sm:$0xff] %v2428
          %2493 = vst [vmem:[#allocation2 + $0x1a0] sm:$0xff] %v2429
          %2494 = vst [vmem:[#allocation2 + $0x1a8] sm:$0xff] %v2430
          %2495 = vst [vmem:[#allocation2 + $0x1b0] sm:$0xff] %v2431
          %2496 = vst [vmem:[#allocation2 + $0x1b8] sm:$0xff] %v2432
          %2497 = vst [vmem:[#allocation2 + $0x1c0] sm:$0xff] %v2433
          %2498 = vst [vmem:[#allocation2 + $0x1c8] sm:$0xff] %v2434
          %2499 = vst [vmem:[#allocation2 + $0x1d0] sm:$0xff] %v2435
          %2500 = vst [vmem:[#allocation2 + $0x1d8] sm:$0xff] %v2436
          %2501 = vst [vmem:[#allocation2 + $0x1e0] sm:$0xff] %v2437
          %2502 = vst [vmem:[#allocation2 + $0x1e8] sm:$0xff] %v2438
          %2503 = vst [vmem:[#allocation2 + $0x1f0] sm:$0xff] %v2439
          %2504 = vst [vmem:[#allocation2 + $0x1f8] sm:$0xff] %v2440
        $region60: #{tpu_custom_call.1} parent=35 // pred_fallthru
          _
        %p2505 = scmp.eq.s32.totalorder %s32, 3
        // Predicated region
        $region61: #{tpu_custom_call.1} parent=35 // pred_check
          %p2506 = pneg %p2505
        $region62: #{tpu_custom_call.1} parent=35 // pred_check_branch
          %2508 = sbr.rel (%p2506) target = $region64
        $region63: #{tpu_custom_call.1} parent=35 // pred_region
          %v2509 = vld [vmem:[#allocation2] sm:$0xff]
          %v2510 = vld [vmem:[#allocation2 + $0x8] sm:$0xff]
          %v2511 = vld [vmem:[#allocation2 + $0x10] sm:$0xff]
          %v2512 = vld [vmem:[#allocation2 + $0x18] sm:$0xff]
          %v2513 = vld [vmem:[#allocation2 + $0x20] sm:$0xff]
          %v2514 = vld [vmem:[#allocation2 + $0x28] sm:$0xff]
          %v2515 = vld [vmem:[#allocation2 + $0x30] sm:$0xff]
          %v2516 = vld [vmem:[#allocation2 + $0x38] sm:$0xff]
          %v2517 = vld [vmem:[#allocation2 + $0x40] sm:$0xff]
          %v2518 = vld [vmem:[#allocation2 + $0x48] sm:$0xff]
          %v2519 = vld [vmem:[#allocation2 + $0x50] sm:$0xff]
          %v2520 = vld [vmem:[#allocation2 + $0x58] sm:$0xff]
          %v2521 = vld [vmem:[#allocation2 + $0x60] sm:$0xff]
          %v2522 = vld [vmem:[#allocation2 + $0x68] sm:$0xff]
          %v2523 = vld [vmem:[#allocation2 + $0x70] sm:$0xff]
          %v2524 = vld [vmem:[#allocation2 + $0x78] sm:$0xff]
          %v2525 = vld [vmem:[#allocation2 + $0x80] sm:$0xff]
          %v2526 = vld [vmem:[#allocation2 + $0x88] sm:$0xff]
          %v2527 = vld [vmem:[#allocation2 + $0x90] sm:$0xff]
          %v2528 = vld [vmem:[#allocation2 + $0x98] sm:$0xff]
          %v2529 = vld [vmem:[#allocation2 + $0xa0] sm:$0xff]
          %v2530 = vld [vmem:[#allocation2 + $0xa8] sm:$0xff]
          %v2531 = vld [vmem:[#allocation2 + $0xb0] sm:$0xff]
          %v2532 = vld [vmem:[#allocation2 + $0xb8] sm:$0xff]
          %v2533 = vld [vmem:[#allocation2 + $0xc0] sm:$0xff]
          %v2534 = vld [vmem:[#allocation2 + $0xc8] sm:$0xff]
          %v2535 = vld [vmem:[#allocation2 + $0xd0] sm:$0xff]
          %v2536 = vld [vmem:[#allocation2 + $0xd8] sm:$0xff]
          %v2537 = vld [vmem:[#allocation2 + $0xe0] sm:$0xff]
          %v2538 = vld [vmem:[#allocation2 + $0xe8] sm:$0xff]
          %v2539 = vld [vmem:[#allocation2 + $0xf0] sm:$0xff]
          %v2540 = vld [vmem:[#allocation2 + $0xf8] sm:$0xff]
          %v2541 = vld [vmem:[#allocation2 + $0x100] sm:$0xff]
          %v2542 = vld [vmem:[#allocation2 + $0x108] sm:$0xff]
          %v2543 = vld [vmem:[#allocation2 + $0x110] sm:$0xff]
          %v2544 = vld [vmem:[#allocation2 + $0x118] sm:$0xff]
          %v2545 = vld [vmem:[#allocation2 + $0x120] sm:$0xff]
          %v2546 = vld [vmem:[#allocation2 + $0x128] sm:$0xff]
          %v2547 = vld [vmem:[#allocation2 + $0x130] sm:$0xff]
          %v2548 = vld [vmem:[#allocation2 + $0x138] sm:$0xff]
          %v2549 = vld [vmem:[#allocation2 + $0x140] sm:$0xff]
          %v2550 = vld [vmem:[#allocation2 + $0x148] sm:$0xff]
          %v2551 = vld [vmem:[#allocation2 + $0x150] sm:$0xff]
          %v2552 = vld [vmem:[#allocation2 + $0x158] sm:$0xff]
          %v2553 = vld [vmem:[#allocation2 + $0x160] sm:$0xff]
          %v2554 = vld [vmem:[#allocation2 + $0x168] sm:$0xff]
          %v2555 = vld [vmem:[#allocation2 + $0x170] sm:$0xff]
          %v2556 = vld [vmem:[#allocation2 + $0x178] sm:$0xff]
          %v2557 = vld [vmem:[#allocation2 + $0x180] sm:$0xff]
          %v2558 = vld [vmem:[#allocation2 + $0x188] sm:$0xff]
          %v2559 = vld [vmem:[#allocation2 + $0x190] sm:$0xff]
          %v2560 = vld [vmem:[#allocation2 + $0x198] sm:$0xff]
          %v2561 = vld [vmem:[#allocation2 + $0x1a0] sm:$0xff]
          %v2562 = vld [vmem:[#allocation2 + $0x1a8] sm:$0xff]
          %v2563 = vld [vmem:[#allocation2 + $0x1b0] sm:$0xff]
          %v2564 = vld [vmem:[#allocation2 + $0x1b8] sm:$0xff]
          %v2565 = vld [vmem:[#allocation2 + $0x1c0] sm:$0xff]
          %v2566 = vld [vmem:[#allocation2 + $0x1c8] sm:$0xff]
          %v2567 = vld [vmem:[#allocation2 + $0x1d0] sm:$0xff]
          %v2568 = vld [vmem:[#allocation2 + $0x1d8] sm:$0xff]
          %v2569 = vld [vmem:[#allocation2 + $0x1e0] sm:$0xff]
          %v2570 = vld [vmem:[#allocation2 + $0x1e8] sm:$0xff]
          %v2571 = vld [vmem:[#allocation2 + $0x1f0] sm:$0xff]
          %v2572 = vld [vmem:[#allocation2 + $0x1f8] sm:$0xff]
          %v2573 = vpack.c.bf16 %v2511, %v2509
          %v2574 = vpack.c.bf16 %v2512, %v2510
          %v2575 = vpack.c.bf16 %v2515, %v2513
          %v2576 = vpack.c.bf16 %v2516, %v2514
          %v2577 = vpack.c.bf16 %v2519, %v2517
          %v2578 = vpack.c.bf16 %v2520, %v2518
          %v2579 = vpack.c.bf16 %v2523, %v2521
          %v2580 = vpack.c.bf16 %v2524, %v2522
          %v2581 = vpack.c.bf16 %v2527, %v2525
          %v2582 = vpack.c.bf16 %v2528, %v2526
          %v2583 = vpack.c.bf16 %v2531, %v2529
          %v2584 = vpack.c.bf16 %v2532, %v2530
          %v2585 = vpack.c.bf16 %v2535, %v2533
          %v2586 = vpack.c.bf16 %v2536, %v2534
          %v2587 = vpack.c.bf16 %v2539, %v2537
          %v2588 = vpack.c.bf16 %v2540, %v2538
          %v2589 = vpack.c.bf16 %v2543, %v2541
          %v2590 = vpack.c.bf16 %v2544, %v2542
          %v2591 = vpack.c.bf16 %v2547, %v2545
          %v2592 = vpack.c.bf16 %v2548, %v2546
          %v2593 = vpack.c.bf16 %v2551, %v2549
          %v2594 = vpack.c.bf16 %v2552, %v2550
          %v2595 = vpack.c.bf16 %v2555, %v2553
          %v2596 = vpack.c.bf16 %v2556, %v2554
          %v2597 = vpack.c.bf16 %v2559, %v2557
          %v2598 = vpack.c.bf16 %v2560, %v2558
          %v2599 = vpack.c.bf16 %v2563, %v2561
          %v2600 = vpack.c.bf16 %v2564, %v2562
          %v2601 = vpack.c.bf16 %v2567, %v2565
          %v2602 = vpack.c.bf16 %v2568, %v2566
          %v2603 = vpack.c.bf16 %v2571, %v2569
          %v2604 = vpack.c.bf16 %v2572, %v2570
          %v2637 = vunpack.c.l.b16 %v2573
          %v2638 = vunpack.c.l.b16 %v2574
          %v2639 = vunpack.c.h.b16 %v2573
          %v2640 = vunpack.c.h.b16 %v2574
          %v2641 = vunpack.c.l.b16 %v2575
          %v2642 = vunpack.c.l.b16 %v2576
          %v2643 = vunpack.c.h.b16 %v2575
          %v2644 = vunpack.c.h.b16 %v2576
          %v2645 = vunpack.c.l.b16 %v2577
          %v2646 = vunpack.c.l.b16 %v2578
          %v2647 = vunpack.c.h.b16 %v2577
          %v2648 = vunpack.c.h.b16 %v2578
          %v2649 = vunpack.c.l.b16 %v2579
          %v2650 = vunpack.c.l.b16 %v2580
          %v2651 = vunpack.c.h.b16 %v2579
          %v2652 = vunpack.c.h.b16 %v2580
          %v2653 = vunpack.c.l.b16 %v2581
          %v2654 = vunpack.c.l.b16 %v2582
          %v2655 = vunpack.c.h.b16 %v2581
          %v2656 = vunpack.c.h.b16 %v2582
          %v2657 = vunpack.c.l.b16 %v2583
          %v2658 = vunpack.c.l.b16 %v2584
          %v2659 = vunpack.c.h.b16 %v2583
          %v2660 = vunpack.c.h.b16 %v2584
          %v2661 = vunpack.c.l.b16 %v2585
          %v2662 = vunpack.c.l.b16 %v2586
          %v2663 = vunpack.c.h.b16 %v2585
          %v2664 = vunpack.c.h.b16 %v2586
          %v2665 = vunpack.c.l.b16 %v2587
          %v2666 = vunpack.c.l.b16 %v2588
          %v2667 = vunpack.c.h.b16 %v2587
          %v2668 = vunpack.c.h.b16 %v2588
          %v2669 = vunpack.c.l.b16 %v2589
          %v2670 = vunpack.c.l.b16 %v2590
          %v2671 = vunpack.c.h.b16 %v2589
          %v2672 = vunpack.c.h.b16 %v2590
          %v2673 = vunpack.c.l.b16 %v2591
          %v2674 = vunpack.c.l.b16 %v2592
          %v2675 = vunpack.c.h.b16 %v2591
          %v2676 = vunpack.c.h.b16 %v2592
          %v2677 = vunpack.c.l.b16 %v2593
          %v2678 = vunpack.c.l.b16 %v2594
          %v2679 = vunpack.c.h.b16 %v2593
          %v2680 = vunpack.c.h.b16 %v2594
          %v2681 = vunpack.c.l.b16 %v2595
          %v2682 = vunpack.c.l.b16 %v2596
          %v2683 = vunpack.c.h.b16 %v2595
          %v2684 = vunpack.c.h.b16 %v2596
          %v2685 = vunpack.c.l.b16 %v2597
          %v2686 = vunpack.c.l.b16 %v2598
          %v2687 = vunpack.c.h.b16 %v2597
          %v2688 = vunpack.c.h.b16 %v2598
          %v2689 = vunpack.c.l.b16 %v2599
          %v2690 = vunpack.c.l.b16 %v2600
          %v2691 = vunpack.c.h.b16 %v2599
          %v2692 = vunpack.c.h.b16 %v2600
          %v2693 = vunpack.c.l.b16 %v2601
          %v2694 = vunpack.c.l.b16 %v2602
          %v2695 = vunpack.c.h.b16 %v2601
          %v2696 = vunpack.c.h.b16 %v2602
          %v2697 = vunpack.c.l.b16 %v2603
          %v2698 = vunpack.c.l.b16 %v2604
          %v2699 = vunpack.c.h.b16 %v2603
          %v2700 = vunpack.c.h.b16 %v2604
          %v2701 = vpack.c.b16 %v2638, %v2637
          %v2702 = vpack.c.b16 %v2640, %v2639
          %v2703 = vpack.c.b16 %v2642, %v2641
          %v2704 = vpack.c.b16 %v2644, %v2643
          %v2705 = vpack.c.b16 %v2646, %v2645
          %v2706 = vpack.c.b16 %v2648, %v2647
          %v2707 = vpack.c.b16 %v2650, %v2649
          %v2708 = vpack.c.b16 %v2652, %v2651
          %v2709 = vpack.c.b16 %v2654, %v2653
          %v2710 = vpack.c.b16 %v2656, %v2655
          %v2711 = vpack.c.b16 %v2658, %v2657
          %v2712 = vpack.c.b16 %v2660, %v2659
          %v2713 = vpack.c.b16 %v2662, %v2661
          %v2714 = vpack.c.b16 %v2664, %v2663
          %v2715 = vpack.c.b16 %v2666, %v2665
          %v2716 = vpack.c.b16 %v2668, %v2667
          %v2717 = vpack.c.b16 %v2670, %v2669
          %v2718 = vpack.c.b16 %v2672, %v2671
          %v2719 = vpack.c.b16 %v2674, %v2673
          %v2720 = vpack.c.b16 %v2676, %v2675
          %v2721 = vpack.c.b16 %v2678, %v2677
          %v2722 = vpack.c.b16 %v2680, %v2679
          %v2723 = vpack.c.b16 %v2682, %v2681
          %v2724 = vpack.c.b16 %v2684, %v2683
          %v2725 = vpack.c.b16 %v2686, %v2685
          %v2726 = vpack.c.b16 %v2688, %v2687
          %v2727 = vpack.c.b16 %v2690, %v2689
          %v2728 = vpack.c.b16 %v2692, %v2691
          %v2729 = vpack.c.b16 %v2694, %v2693
          %v2730 = vpack.c.b16 %v2696, %v2695
          %v2731 = vpack.c.b16 %v2698, %v2697
          %v2732 = vpack.c.b16 %v2700, %v2699
          %2765 = vst [vmem:[%s346] sm:$0xff] %v2701
          %2766 = vst [vmem:[%s346 + $0x8] sm:$0xff] %v2702
          %2767 = vst [vmem:[%s346 + $0x10] sm:$0xff] %v2703
          %2768 = vst [vmem:[%s346 + $0x18] sm:$0xff] %v2704
          %2769 = vst [vmem:[%s346 + $0x20] sm:$0xff] %v2705
          %2770 = vst [vmem:[%s346 + $0x28] sm:$0xff] %v2706
          %2771 = vst [vmem:[%s346 + $0x30] sm:$0xff] %v2707
          %2772 = vst [vmem:[%s346 + $0x38] sm:$0xff] %v2708
          %2773 = vst [vmem:[%s346 + $0x40] sm:$0xff] %v2709
          %2774 = vst [vmem:[%s346 + $0x48] sm:$0xff] %v2710
          %2775 = vst [vmem:[%s346 + $0x50] sm:$0xff] %v2711
          %2776 = vst [vmem:[%s346 + $0x58] sm:$0xff] %v2712
          %2777 = vst [vmem:[%s346 + $0x60] sm:$0xff] %v2713
          %2778 = vst [vmem:[%s346 + $0x68] sm:$0xff] %v2714
          %2779 = vst [vmem:[%s346 + $0x70] sm:$0xff] %v2715
          %2780 = vst [vmem:[%s346 + $0x78] sm:$0xff] %v2716
          %2781 = vst [vmem:[%s346 + $0x80] sm:$0xff] %v2717
          %2782 = vst [vmem:[%s346 + $0x88] sm:$0xff] %v2718
          %2783 = vst [vmem:[%s346 + $0x90] sm:$0xff] %v2719
          %2784 = vst [vmem:[%s346 + $0x98] sm:$0xff] %v2720
          %2785 = vst [vmem:[%s346 + $0xa0] sm:$0xff] %v2721
          %2786 = vst [vmem:[%s346 + $0xa8] sm:$0xff] %v2722
          %2787 = vst [vmem:[%s346 + $0xb0] sm:$0xff] %v2723
          %2788 = vst [vmem:[%s346 + $0xb8] sm:$0xff] %v2724
          %2789 = vst [vmem:[%s346 + $0xc0] sm:$0xff] %v2725
          %2790 = vst [vmem:[%s346 + $0xc8] sm:$0xff] %v2726
          %2791 = vst [vmem:[%s346 + $0xd0] sm:$0xff] %v2727
          %2792 = vst [vmem:[%s346 + $0xd8] sm:$0xff] %v2728
          %2793 = vst [vmem:[%s346 + $0xe0] sm:$0xff] %v2729
          %2794 = vst [vmem:[%s346 + $0xe8] sm:$0xff] %v2730
          %2795 = vst [vmem:[%s346 + $0xf0] sm:$0xff] %v2731
          %2796 = vst [vmem:[%s346 + $0xf8] sm:$0xff] %v2732
        $region64: #{tpu_custom_call.1} parent=35 // pred_fallthru
          _
        %s2797 = sand.u32 %s151, 1
        %s2798 = scalar_lea.sflag [#allocation5], %s2797
        %s2799 = sand.u32 %s151, 1
        %s2800 = smul.addr %s2799, 256
        %s2801 = scalar_lea.vmem [#allocation11], %s2800
        // Predicated region
        $region65: #{tpu_custom_call.1} parent=35 // pred_check
          %p2802 = pneg %p161
        $region66: #{tpu_custom_call.1} parent=35 // pred_check_branch
          %2804 = sbr.rel (%p2802) target = $region68
        $region67: #{tpu_custom_call.1} parent=35 // pred_region
          %s2805 = smul.u32 32, %s31
          %s2807 = ssub.s32 4096, 4096
          %2808 = vsyncadd %s2798, %s2807
          %s2809 = smul.addr %s2805, 2
          %s2810 = smul.addr %s2809, 64
          %s2811 = scalar_lea.hbm %s4, %s2810
          %s2812 = sshll.u32 %s2801, 4
          %s2813 = int_to_ptr.vmem [resolvable:$true] %s2812
          %2818 = dma.vmem_to_hbm [thread:$0]  %s2813, 4096, %s2811, %s2798, 128, 128, 8
        $region68: #{tpu_custom_call.1} parent=35 // pred_fallthru
          _
      $region36: #{tpu_custom_call.1} parent=5 // pred_fallthru
        _
      %p2819 = scmp.le.s32.totalorder 2, %s22
      // Predicated region
      $region69: #{tpu_custom_call.1} parent=5 // pred_check
        %p2820 = pneg %p2819
      $region70: #{tpu_custom_call.1} parent=5 // pred_check_branch
        %2822 = sbr.rel (%p2820) target = $region72
      $region71: #{tpu_custom_call.1} parent=5 // pred_region
        %s2823 = ssub.s32 %s22, 2
        // Predicated region
        $region73: #{tpu_custom_call.1} parent=71 // pred_check
          %p2824 = pneg %p167
        $region74: #{tpu_custom_call.1} parent=71 // pred_check_branch
          %2826 = sbr.rel (%p2824) target = $region76
        $region75: #{tpu_custom_call.1} parent=71 // pred_region
          %s2827 = sand.u32 %s152, 1
          %s2828 = scalar_lea.sflag [#allocation5], %s2827
          %s2829 = sand.u32 %s152, 1
          %s2830 = smul.addr %s2829, 256
          %s2831 = scalar_lea.vmem [#allocation11], %s2830
          %2832 = dma.done %s2828, 4096
        $region76: #{tpu_custom_call.1} parent=71 // pred_fallthru
          _
      $region72: #{tpu_custom_call.1} parent=5 // pred_fallthru
        _
    $region6: #{tpu_custom_call.1} parent=1 // loop_footer
      %s26 = sadd.s32 1, %s22
    $region7: #{tpu_custom_call.1} parent=1 // loop_footer_branch
      %21 = sbr.rel target = $region3
    $region8: #{tpu_custom_call.1} parent=1 // loop_exit
      _
    %2833 = vsyncpa [#allocation4], 1
    %s2834 = scalar_lea.sflag [#allocation4], 1
    %2835 = vsyncpa %s2834, 1
    %2836 = vsyncpa [#allocation7], 1
    %s2837 = scalar_lea.sflag [#allocation7], 1
    %2838 = vsyncpa %s2837, 1
    %2839 = vsyncpa [#allocation10], 1
    %s2840 = scalar_lea.sflag [#allocation10], 1
    %2841 = vsyncpa %s2840, 1
    %2842 = vsyncpa [#allocation5], 1
    %s2843 = scalar_lea.sflag [#allocation5], 1
    %2844 = vsyncpa %s2843, 1

</llo_original>
